<compile_context>
chip_gen: v6e
topology: v6e:2x2x1
jax: 0.10.0
libtpu: 0.0.40
codegen_flags: <defaults>
</compile_context>

<pallas_src>
import functools
import math

import jax
import jax.numpy as jnp
from jax.experimental import pallas as pl
from jax.experimental.pallas import tpu as pltpu

# ----------------------------- model config (scaled-down ViT-B/16) ---------------------
IMG = 32          # image side            (ViT-B/16 SWAG: 384)
PATCH = 8         # patch size            (ViT-B/16: 16)
CHANNELS = 3
HIDDEN = 64       # embedding dim         (ViT-B/16: 768)
HEADS = 4         # attention heads       (ViT-B/16: 12)
MLP_DIM = 128     # MLP hidden dim        (ViT-B/16: 3072)
LAYERS = 2        # encoder blocks        (ViT-B/16: 12)
NUM_CLASSES = 18  # replaced head: nn.Linear(768, 18)
LN_EPS = 1e-6     # torchvision ViT uses LayerNorm(eps=1e-6)

HEAD_DIM = HIDDEN // HEADS
N_PATCH = (IMG // PATCH) ** 2
SEQ = N_PATCH + 1     # + class token
HEAD_PAD = 128        # pad 18-wide head output to one full lane register (slice in wrapper)

_CPARAMS = pltpu.CompilerParams(
    dimension_semantics=("parallel",),          # batch grid axis -> both TCs on v7x
    vmem_limit_bytes=48 * 1024 * 1024,          # headroom under v7x 64 MiB physical VMEM
)


# ----------------------------- in-kernel helpers (all f32 math) ------------------------
def _ln_f32(x, g, b):
    # PyTorch LayerNorm: biased variance, eps inside rsqrt.
    mean = jnp.mean(x, axis=-1, keepdims=True)
    var = jnp.mean((x - mean) ** 2, axis=-1, keepdims=True)
    return (x - mean) * jax.lax.rsqrt(var + LN_EPS) * g + b


def _erf_f32(x):
    # Abramowitz & Stegun 7.1.26 rational approximation (max abs err ~1.5e-7, i.e.
    # f32-level accuracy).  Used so the exact-erf GELU can be fused into the kernel
    # while relying only on exp / mul / add / where, which always lower on TPU.
    ax = jnp.abs(x)
    t = 1.0 / (1.0 + 0.3275911 * ax)
    poly = ((((1.061405429 * t - 1.453152027) * t + 1.421413741) * t
             - 0.284496736) * t + 0.254829592) * t
    y = 1.0 - poly * jnp.exp(-ax * ax)
    return jnp.where(x < 0, -y, y)


def _gelu_exact_f32(x):
    # nn.GELU() default (exact erf form), evaluated in f32.
    return 0.5 * x * (1.0 + _erf_f32(x * (1.0 / math.sqrt(2.0))))


# ----------------------------- Pallas kernels ------------------------------------------
def _patch_embed_kernel(p_ref, w_ref, b_ref, pos_ref, o_ref):
    # (Np, C*P*P) @ (C*P*P, D) + bias + positional embedding, one batch element per step.
    patches = p_ref[0].astype(jnp.bfloat16)
    acc = jnp.dot(patches, w_ref[...], preferred_element_type=jnp.float32)
    o_ref[0] = (acc + b_ref[...] + pos_ref[0]).astype(o_ref.dtype)


def _ln_qkv_kernel(x_ref, g_ref, b_ref, w_ref, qb_ref, q_ref, k_ref, v_ref, *, d):
    # Fused LN1 + QKV projection; emits q, k, v separately (head-interleaved along lanes).
    y = _ln_f32(x_ref[0].astype(jnp.float32), g_ref[...], b_ref[...])
    acc = jnp.dot(y.astype(jnp.bfloat16), w_ref[...],
                  preferred_element_type=jnp.float32) + qb_ref[...]      # (S, 3D) f32
    q_ref[0] = acc[:, 0 * d:1 * d].astype(q_ref.dtype)
    k_ref[0] = acc[:, 1 * d:2 * d].astype(k_ref.dtype)
    v_ref[0] = acc[:, 2 * d:3 * d].astype(v_ref.dtype)


def _attn_kernel(q_ref, k_ref, v_ref, o_ref, *, heads, head_dim, scale):
    # One batch element per grid step, all heads inside the kernel (static unrolled loop),
    # lane-dense (S, D) output.  Softmax math in f32; MXU operands bf16.
    q = (q_ref[0].astype(jnp.float32) * scale).astype(jnp.bfloat16)  # scale on S*D, not S*S
    k = k_ref[0]
    v = v_ref[0]
    for h in range(heads):
        lo = h * head_dim
        qh = q[:, lo:lo + head_dim]
        kh = k[:, lo:lo + head_dim]
        vh = v[:, lo:lo + head_dim]
        s = jax.lax.dot_general(qh, kh, (((1,), (1,)), ((), ())),
                                preferred_element_type=jnp.float32)      # (S, S)
        s = s - jnp.max(s, axis=-1, keepdims=True)
        p = jnp.exp(s)
        p = p * pl.reciprocal(jnp.sum(p, axis=-1, keepdims=True), approx=True)
        oh = jnp.dot(p.astype(jnp.bfloat16), vh, preferred_element_type=jnp.float32)
        o_ref[0, :, lo:lo + head_dim] = oh.astype(o_ref.dtype)


def _proj_residual_kernel(a_ref, w_ref, b_ref, r_ref, o_ref):
    # Fused projection + bias + residual add (used for attention out-proj and MLP FC2).
    acc = jnp.dot(a_ref[0], w_ref[...], preferred_element_type=jnp.float32)
    o_ref[0] = (acc + b_ref[...] + r_ref[0].astype(jnp.float32)).astype(o_ref.dtype)


def _ln_fc1_gelu_kernel(x_ref, g_ref, b_ref, w_ref, fb_ref, o_ref):
    # Fused LN2 + FC1 + exact GELU.
    y = _ln_f32(x_ref[0].astype(jnp.float32), g_ref[...], b_ref[...])
    acc = jnp.dot(y.astype(jnp.bfloat16), w_ref[...],
                  preferred_element_type=jnp.float32) + fb_ref[...]
    o_ref[0] = _gelu_exact_f32(acc).astype(o_ref.dtype)


def _ln_head_kernel(x_ref, g_ref, b_ref, w_ref, hb_ref, o_ref):
    # Final LN on the cls row only + classification head (output padded to 128 lanes).
    y = _ln_f32(x_ref[0].astype(jnp.float32), g_ref[...], b_ref[...])   # (1, D)
    acc = jnp.dot(y.astype(jnp.bfloat16), w_ref[...],
                  preferred_element_type=jnp.float32) + hb_ref[...]
    o_ref[0] = acc.astype(o_ref.dtype)


# ----------------------------- Pallas wrappers ------------------------------------------
def _row_spec(s, d):
    return pl.BlockSpec((1, s, d), lambda i: (i, 0, 0))


def _const2d_spec(r, c):
    return pl.BlockSpec((r, c), lambda i: (0, 0))


def patch_embed(patches, w, b, pos):
    B, Np, CPP = patches.shape
    D = w.shape[1]
    return pl.pallas_call(
        _patch_embed_kernel,
        out_shape=jax.ShapeDtypeStruct((B, Np, D), jnp.float32),
        grid=(B,),
        in_specs=[
            _row_spec(Np, CPP),
            _const2d_spec(CPP, D),
            _const2d_spec(1, D),
            pl.BlockSpec((1, Np, D), lambda i: (0, 0, 0)),
        ],
        out_specs=_row_spec(Np, D),
        compiler_params=_CPARAMS,
    )(patches, w, b, pos)


def ln_qkv(x, g, b, w, qb):
    B, S, D = x.shape
    kern = functools.partial(_ln_qkv_kernel, d=D)
    out = jax.ShapeDtypeStruct((B, S, D), jnp.bfloat16)
    return pl.pallas_call(
        kern,
        out_shape=(out, out, out),
        grid=(B,),
        in_specs=[
            _row_spec(S, D),
            _const2d_spec(1, D),
            _const2d_spec(1, D),
            _const2d_spec(D, 3 * D),
            _const2d_spec(1, 3 * D),
        ],
        out_specs=(_row_spec(S, D), _row_spec(S, D), _row_spec(S, D)),
        compiler_params=_CPARAMS,
    )(x, g, b, w, qb)


def attention(q, k, v):
    B, S, D = q.shape
    scale = 1.0 / math.sqrt(HEAD_DIM)
    kern = functools.partial(_attn_kernel, heads=HEADS, head_dim=HEAD_DIM, scale=scale)
    return pl.pallas_call(
        kern,
        out_shape=jax.ShapeDtypeStruct((B, S, D), jnp.bfloat16),
        grid=(B,),
        in_specs=[_row_spec(S, D), _row_spec(S, D), _row_spec(S, D)],
        out_specs=_row_spec(S, D),
        compiler_params=_CPARAMS,
    )(q, k, v)


def proj_residual(a, w, b, res):
    # a: (B, S, K) bf16, w: (K, N) bf16, b: (1, N) f32, res: (B, S, N) f32 -> (B, S, N) f32
    B, S, K = a.shape
    N = w.shape[1]
    return pl.pallas_call(
        _proj_residual_kernel,
        out_shape=jax.ShapeDtypeStruct((B, S, N), jnp.float32),
        grid=(B,),
        in_specs=[
            _row_spec(S, K),
            _const2d_spec(K, N),
            _const2d_spec(1, N),
            _row_spec(S, N),
        ],
        out_specs=_row_spec(S, N),
        compiler_params=_CPARAMS,
    )(a, w, b, res)


def ln_fc1_gelu(x, g, b, w, fb):
    B, S, D = x.shape
    N = w.shape[1]
    return pl.pallas_call(
        _ln_fc1_gelu_kernel,
        out_shape=jax.ShapeDtypeStruct((B, S, N), jnp.bfloat16),
        grid=(B,),
        in_specs=[
            _row_spec(S, D),
            _const2d_spec(1, D),
            _const2d_spec(1, D),
            _const2d_spec(D, N),
            _const2d_spec(1, N),
        ],
        out_specs=_row_spec(S, N),
        compiler_params=_CPARAMS,
    )(x, g, b, w, fb)


def ln_head(cls_rows, g, b, w_pad, b_pad):
    # cls_rows: (B, 1, D) f32 -> (B, 1, HEAD_PAD) f32 padded logits.
    B, _, D = cls_rows.shape
    return pl.pallas_call(
        _ln_head_kernel,
        out_shape=jax.ShapeDtypeStruct((B, 1, HEAD_PAD), jnp.float32),
        grid=(B,),
        in_specs=[
            _row_spec(1, D),
            _const2d_spec(1, D),
            _const2d_spec(1, D),
            _const2d_spec(D, HEAD_PAD),
            _const2d_spec(1, HEAD_PAD),
        ],
        out_specs=_row_spec(1, HEAD_PAD),
        compiler_params=_CPARAMS,
    )(cls_rows, g, b, w_pad, b_pad)


# ----------------------------- ViT forward (thin JAX glue + Pallas hot path) ------------
def patchify(x):
    """NCHW image -> (B, n_patches, C*P*P), same patch ordering as the stride-P conv."""
    B, C, H, W = x.shape
    Hg, Wg = H // PATCH, W // PATCH
    x = x.reshape(B, C, Hg, PATCH, Wg, PATCH)
    x = x.transpose(0, 2, 4, 1, 3, 5)                 # (B, Hg, Wg, C, P, P)
    return x.reshape(B, Hg * Wg, C * PATCH * PATCH)


def _prep_params(params):
    """Cast matmul weights to bf16 (MXU inputs), reshape biases/LN params to (1, N),
    pre-fold positional embedding / cls token, and lane-pad the 18-class head."""
    def w16(w):
        return w.astype(jnp.bfloat16)

    def row(v):
        return v.reshape(1, -1).astype(jnp.float32)

    head_w = jnp.zeros((HIDDEN, HEAD_PAD), jnp.float32)
    head_w = head_w.at[:, :NUM_CLASSES].set(params["head_w"])
    head_b = jnp.zeros((1, HEAD_PAD), jnp.float32)
    head_b = head_b.at[:, :NUM_CLASSES].set(params["head_b"].reshape(1, -1))

    prepped = {
        "patch_w": w16(params["patch_w"]),
        "patch_b": row(params["patch_b"]),
        "pos_patch": params["pos_emb"][:, 1:, :],                      # (1, Np, D)
        "cls_row": params["cls_token"] + params["pos_emb"][:, :1, :],  # (1, 1, D)
        "ln_g": row(params["ln_g"]),
        "ln_b": row(params["ln_b"]),
        "head_w": w16(head_w),
        "head_b": head_b,
        "layers": [],
    }
    for lp in params["layers"]:
        prepped["layers"].append({
            "ln1_g": row(lp["ln1_g"]), "ln1_b": row(lp["ln1_b"]),
            "qkv_w": w16(lp["qkv_w"]), "qkv_b": row(lp["qkv_b"]),
            "out_w": w16(lp["out_w"]), "out_b": row(lp["out_b"]),
            "ln2_g": row(lp["ln2_g"]), "ln2_b": row(lp["ln2_b"]),
            "fc1_w": w16(lp["fc1_w"]), "fc1_b": row(lp["fc1_b"]),
            "fc2_w": w16(lp["fc2_w"]), "fc2_b": row(lp["fc2_b"]),
        })
    return prepped


def encoder_block(x, p):
    # x: (B, S, D) f32 residual stream.
    q, k, v = ln_qkv(x, p["ln1_g"], p["ln1_b"], p["qkv_w"], p["qkv_b"])   # bf16, head-interleaved
    o = attention(q, k, v)                                                # (B, S, D) bf16
    x = proj_residual(o, p["out_w"], p["out_b"], x)                       # f32
    h = ln_fc1_gelu(x, p["ln2_g"], p["ln2_b"], p["fc1_w"], p["fc1_b"])    # (B, S, MLP) bf16
    x = proj_residual(h, p["fc2_w"], p["fc2_b"], x)                       # f32
    return x


def vit_forward(x, params):
    B = x.shape[0]
    p = _prep_params(params)
    # Conv2d(C, D, P, stride=P) patch embedding == patchify + matmul (+ pos emb fused).
    patches = patchify(x)                                                  # (B, Np, C*P*P)
    tok = patch_embed(patches, p["patch_w"], p["patch_b"], p["pos_patch"])  # (B, Np, D) f32
    cls = jnp.broadcast_to(p["cls_row"], (B, 1, HIDDEN))                   # cls token + pos[0]
    h = jnp.concatenate([cls, tok], axis=1)                                # (B, S, D) f32
    for lp in p["layers"]:
        h = encoder_block(h, lp)
    cls_rows = h[:, :1, :]                                                 # (B, 1, D)
    logits = ln_head(cls_rows, p["ln_g"], p["ln_b"], p["head_w"], p["head_b"])
    return logits[:, 0, :NUM_CLASSES]                                      # (B, 18) f32


# ----------------------------- deterministic synthetic parameters -----------------------
def init_params(key):
    # TODO(synk): real module loads IMAGENET1K_SWAG_E2E_V1 pretrained weights; here we
    # initialize deterministically (no checkpoint I/O).
    def nrm(k, shape, scale=0.02):
        return (scale * jax.random.normal(k, shape)).astype(jnp.float32)

    keys = jax.random.split(key, 8 + 8 * LAYERS)
    it = iter(keys)
    params = {
        "patch_w": nrm(next(it), (CHANNELS * PATCH * PATCH, HIDDEN)),
        "patch_b": jnp.zeros((HIDDEN,), jnp.float32),
        "cls_token": nrm(next(it), (1, 1, HIDDEN)),
        "pos_emb": nrm(next(it), (1, SEQ, HIDDEN)),
        "ln_g": jnp.ones((HIDDEN,), jnp.float32),
        "ln_b": jnp.zeros((HIDDEN,), jnp.float32),
        "head_w": nrm(next(it), (HIDDEN, NUM_CLASSES)),
        "head_b": jnp.zeros((NUM_CLASSES,), jnp.float32),
        "layers": [],
    }
    for _ in range(LAYERS):
        params["layers"].append({
            "ln1_g": jnp.ones((HIDDEN,), jnp.float32),
            "ln1_b": jnp.zeros((HIDDEN,), jnp.float32),
            "qkv_w": nrm(next(it), (HIDDEN, 3 * HIDDEN)),
            "qkv_b": jnp.zeros((3 * HIDDEN,), jnp.float32),
            "out_w": nrm(next(it), (HIDDEN, HIDDEN)),
            "out_b": jnp.zeros((HIDDEN,), jnp.float32),
            "ln2_g": jnp.ones((HIDDEN,), jnp.float32),
            "ln2_b": jnp.zeros((HIDDEN,), jnp.float32),
            "fc1_w": nrm(next(it), (HIDDEN, MLP_DIM)),
            "fc1_b": jnp.zeros((MLP_DIM,), jnp.float32),
            "fc2_w": nrm(next(it), (MLP_DIM, HIDDEN)),
            "fc2_b": jnp.zeros((HIDDEN,), jnp.float32),
        })
    return params


if __name__ == "__main__":
    key = jax.random.PRNGKey(0)
    k_x, k_p = jax.random.split(key)
    x = jax.random.normal(k_x, (2, CHANNELS, IMG, IMG), dtype=jnp.float32)  # NCHW like PyTorch
    params = init_params(k_p)

    fwd = jax.jit(vit_forward)
    out = fwd(x, params)
    out = jax.block_until_ready(out)
    assert out.shape == (2, NUM_CLASSES) and out.dtype == jnp.float32
    print("KERNEL_OK")
</pallas_src>

<mosaic_0001>
module attributes {stable_mosaic.version = 11 : i64} {
  func.func @_patch_embed_kernel(%arg0: i32, %arg1: memref<1x16x192xf32, #tpu.memory_space<vmem>>, %arg2: memref<192x64xbf16, #tpu.memory_space<vmem>>, %arg3: memref<1x64xf32, #tpu.memory_space<vmem>>, %arg4: memref<1x16x64xf32, #tpu.memory_space<vmem>>, %arg5: memref<1x16x64xf32, #tpu.memory_space<vmem>>) attributes {dimension_semantics = [#tpu.dimension_semantics<parallel>], iteration_bounds = array<i64: 2>, scalar_prefetch = 0 : i64, scratch_operands = 0 : i64, tpu.core_type = #tpu.core_type<tc>, window_params = [{transform_indices = @transform_0, window_bounds = array<i64: 1, 16, 192>}, {pipeline_mode = #tpu.pipeline_mode<synchronous>, transform_indices = @transform_1, window_bounds = array<i64: 192, 64>}, {pipeline_mode = #tpu.pipeline_mode<synchronous>, transform_indices = @transform_2, window_bounds = array<i64: 1, 64>}, {pipeline_mode = #tpu.pipeline_mode<synchronous>, transform_indices = @transform_3, window_bounds = array<i64: 1, 16, 64>}, {transform_indices = @transform_4, window_bounds = array<i64: 1, 16, 64>}]} {
    %c0 = arith.constant 0 : index
    %c0_0 = arith.constant 0 : index
    %c0_1 = arith.constant 0 : index
    %0 = vector.load %arg1[%c0, %c0_0, %c0_1] : memref<1x16x192xf32, #tpu.memory_space<vmem>>, vector<1x16x192xf32>
    %1 = vector.shape_cast %0 : vector<1x16x192xf32> to vector<16x192xf32>
    %2 = arith.truncf %1 : vector<16x192xf32> to vector<16x192xbf16>
    %c0_2 = arith.constant 0 : index
    %c0_3 = arith.constant 0 : index
    %3 = vector.load %arg2[%c0_2, %c0_3] : memref<192x64xbf16, #tpu.memory_space<vmem>>, vector<192x64xbf16>
    %cst = arith.constant dense<0.000000e+00> : vector<16x64xf32>
    %4 = tpu.matmul %2, %3, %cst {dimension_numbers = #tpu.dot_dimension_numbers<[1], [0], [0], [1], [0, 0, 1, 1], [], []>} : vector<16x192xbf16>, vector<192x64xbf16>, vector<16x64xf32> -> vector<16x64xf32>
    %c0_4 = arith.constant 0 : index
    %c0_5 = arith.constant 0 : index
    %5 = vector.load %arg3[%c0_4, %c0_5] : memref<1x64xf32, #tpu.memory_space<vmem>>, vector<1x64xf32>
    %6 = vector.broadcast %5 : vector<1x64xf32> to vector<16x64xf32>
    %7 = arith.addf %4, %6 : vector<16x64xf32>
    %c0_6 = arith.constant 0 : index
    %c0_7 = arith.constant 0 : index
    %c0_8 = arith.constant 0 : index
    %8 = vector.load %arg4[%c0_6, %c0_7, %c0_8] : memref<1x16x64xf32, #tpu.memory_space<vmem>>, vector<1x16x64xf32>
    %9 = vector.shape_cast %8 : vector<1x16x64xf32> to vector<16x64xf32>
    %10 = arith.addf %7, %9 : vector<16x64xf32>
    %c0_9 = arith.constant 0 : index
    %c0_10 = arith.constant 0 : index
    %c0_11 = arith.constant 0 : index
    %11 = vector.load %arg5[%c0_9, %c0_10, %c0_11] : memref<1x16x64xf32, #tpu.memory_space<vmem>>, vector<1x16x64xf32>
    %12 = vector.shape_cast %11 : vector<1x16x64xf32> to vector<16x64xf32>
    %13 = vector.shape_cast %10 : vector<16x64xf32> to vector<1x16x64xf32>
    tpu.vector_store %arg5[%c0_9, %c0_10, %c0_11], %13 {strides = array<i32>} : memref<1x16x64xf32, #tpu.memory_space<vmem>>, vector<1x16x64xf32>,
    return
  }
  func.func @transform_0(%arg0: i32) -> (i32, i32, i32) {
    %c0_i32 = arith.constant 0 : i32
    %c0_i32_0 = arith.constant 0 : i32
    %c0_i32_1 = arith.constant 0 : i32
    return %arg0, %c0_i32, %c0_i32_0 : i32, i32, i32
  }
  func.func @transform_1(%arg0: i32) -> (i32, i32) {
    %c0_i32 = arith.constant 0 : i32
    %c0_i32_0 = arith.constant 0 : i32
    %c0_i32_1 = arith.constant 0 : i32
    return %c0_i32, %c0_i32_0 : i32, i32
  }
  func.func @transform_2(%arg0: i32) -> (i32, i32) {
    %c0_i32 = arith.constant 0 : i32
    %c0_i32_0 = arith.constant 0 : i32
    %c0_i32_1 = arith.constant 0 : i32
    return %c0_i32, %c0_i32_0 : i32, i32
  }
  func.func @transform_3(%arg0: i32) -> (i32, i32, i32) {
    %c0_i32 = arith.constant 0 : i32
    %c0_i32_0 = arith.constant 0 : i32
    %c0_i32_1 = arith.constant 0 : i32
    %c0_i32_2 = arith.constant 0 : i32
    return %c0_i32, %c0_i32_0, %c0_i32_1 : i32, i32, i32
  }
  func.func @transform_4(%arg0: i32) -> (i32, i32, i32) {
    %c0_i32 = arith.constant 0 : i32
    %c0_i32_0 = arith.constant 0 : i32
    %c0_i32_1 = arith.constant 0 : i32
    return %arg0, %c0_i32, %c0_i32_0 : i32, i32, i32
  }
}

module attributes {stable_mosaic.version = 11 : i64} {
  func.func @_ln_qkv_kernel(%arg0: i32, %arg1: memref<1x17x64xf32, #tpu.memory_space<vmem>>, %arg2: memref<1x64xf32, #tpu.memory_space<vmem>>, %arg3: memref<1x64xf32, #tpu.memory_space<vmem>>, %arg4: memref<64x192xbf16, #tpu.memory_space<vmem>>, %arg5: memref<1x192xf32, #tpu.memory_space<vmem>>, %arg6: memref<1x17x64xbf16, #tpu.memory_space<vmem>>, %arg7: memref<1x17x64xbf16, #tpu.memory_space<vmem>>, %arg8: memref<1x17x64xbf16, #tpu.memory_space<vmem>>) attributes {dimension_semantics = [#tpu.dimension_semantics<parallel>], iteration_bounds = array<i64: 2>, scalar_prefetch = 0 : i64, scratch_operands = 0 : i64, tpu.core_type = #tpu.core_type<tc>, window_params = [{transform_indices = @transform_0, window_bounds = array<i64: 1, 17, 64>}, {pipeline_mode = #tpu.pipeline_mode<synchronous>, transform_indices = @transform_1, window_bounds = array<i64: 1, 64>}, {pipeline_mode = #tpu.pipeline_mode<synchronous>, transform_indices = @transform_2, window_bounds = array<i64: 1, 64>}, {pipeline_mode = #tpu.pipeline_mode<synchronous>, transform_indices = @transform_3, window_bounds = array<i64: 64, 192>}, {pipeline_mode = #tpu.pipeline_mode<synchronous>, transform_indices = @transform_4, window_bounds = array<i64: 1, 192>}, {transform_indices = @transform_5, window_bounds = array<i64: 1, 17, 64>}, {transform_indices = @transform_6, window_bounds = array<i64: 1, 17, 64>}, {transform_indices = @transform_7, window_bounds = array<i64: 1, 17, 64>}]} {
    %c0 = arith.constant 0 : index
    %c0_0 = arith.constant 0 : index
    %c0_1 = arith.constant 0 : index
    %0 = vector.load %arg1[%c0, %c0_0, %c0_1] : memref<1x17x64xf32, #tpu.memory_space<vmem>>, vector<1x17x64xf32>
    %1 = vector.shape_cast %0 : vector<1x17x64xf32> to vector<17x64xf32>
    %c0_2 = arith.constant 0 : index
    %c0_3 = arith.constant 0 : index
    %2 = vector.load %arg2[%c0_2, %c0_3] : memref<1x64xf32, #tpu.memory_space<vmem>>, vector<1x64xf32>
    %c0_4 = arith.constant 0 : index
    %c0_5 = arith.constant 0 : index
    %3 = vector.load %arg3[%c0_4, %c0_5] : memref<1x64xf32, #tpu.memory_space<vmem>>, vector<1x64xf32>
    %cst = arith.constant dense<0.000000e+00> : vector<17xf32>
    %4 = vector.multi_reduction <add>, %1, %cst [1] : vector<17x64xf32> to vector<17xf32>
    %5 = vector.shape_cast %4 : vector<17xf32> to vector<17x1xf32>
    %cst_6 = arith.constant 6.400000e+01 : f32
    %6 = vector.broadcast %cst_6 : f32 to vector<17x1xf32>
    %7 = arith.divf %5, %6 : vector<17x1xf32>
    %8 = vector.broadcast %7 : vector<17x1xf32> to vector<17x64xf32>
    %9 = arith.subf %1, %8 : vector<17x64xf32>
    %10 = arith.mulf %9, %9 : vector<17x64xf32>
    %cst_7 = arith.constant dense<0.000000e+00> : vector<17xf32>
    %11 = vector.multi_reduction <add>, %10, %cst_7 [1] : vector<17x64xf32> to vector<17xf32>
    %12 = vector.shape_cast %11 : vector<17xf32> to vector<17x1xf32>
    %cst_8 = arith.constant 6.400000e+01 : f32
    %13 = vector.broadcast %cst_8 : f32 to vector<17x1xf32>
    %14 = arith.divf %12, %13 : vector<17x1xf32>
    %15 = vector.broadcast %7 : vector<17x1xf32> to vector<17x64xf32>
    %16 = arith.subf %1, %15 : vector<17x64xf32>
    %cst_9 = arith.constant 9.99999997E-7 : f32
    %17 = vector.broadcast %cst_9 : f32 to vector<17x1xf32>
    %18 = arith.addf %14, %17 : vector<17x1xf32>
    %19 = math.rsqrt %18 : vector<17x1xf32>
    %20 = vector.broadcast %19 : vector<17x1xf32> to vector<17x64xf32>
    %21 = arith.mulf %16, %20 : vector<17x64xf32>
    %22 = vector.broadcast %2 : vector<1x64xf32> to vector<17x64xf32>
    %23 = arith.mulf %21, %22 : vector<17x64xf32>
    %24 = vector.broadcast %3 : vector<1x64xf32> to vector<17x64xf32>
    %25 = arith.addf %23, %24 : vector<17x64xf32>
    %26 = arith.truncf %25 : vector<17x64xf32> to vector<17x64xbf16>
    %c0_10 = arith.constant 0 : index
    %c0_11 = arith.constant 0 : index
    %27 = vector.load %arg4[%c0_10, %c0_11] : memref<64x192xbf16, #tpu.memory_space<vmem>>, vector<64x192xbf16>
    %cst_12 = arith.constant dense<0.000000e+00> : vector<17x192xf32>
    %28 = tpu.matmul %26, %27, %cst_12 {dimension_numbers = #tpu.dot_dimension_numbers<[1], [0], [0], [1], [0, 0, 1, 1], [], []>} : vector<17x64xbf16>, vector<64x192xbf16>, vector<17x192xf32> -> vector<17x192xf32>
    %c0_13 = arith.constant 0 : index
    %c0_14 = arith.constant 0 : index
    %29 = vector.load %arg5[%c0_13, %c0_14] : memref<1x192xf32, #tpu.memory_space<vmem>>, vector<1x192xf32>
    %30 = vector.broadcast %29 : vector<1x192xf32> to vector<17x192xf32>
    %31 = arith.addf %28, %30 : vector<17x192xf32>
    %32 = vector.extract_strided_slice %31 {offsets = [0, 0], sizes = [17, 64], strides = [1, 1]} : vector<17x192xf32> to vector<17x64xf32>
    %33 = arith.truncf %32 : vector<17x64xf32> to vector<17x64xbf16>
    %c0_15 = arith.constant 0 : index
    %c0_16 = arith.constant 0 : index
    %c0_17 = arith.constant 0 : index
    %34 = vector.load %arg6[%c0_15, %c0_16, %c0_17] : memref<1x17x64xbf16, #tpu.memory_space<vmem>>, vector<1x17x64xbf16>
    %35 = vector.shape_cast %34 : vector<1x17x64xbf16> to vector<17x64xbf16>
    %36 = vector.shape_cast %33 : vector<17x64xbf16> to vector<1x17x64xbf16>
    tpu.vector_store %arg6[%c0_15, %c0_16, %c0_17], %36 {strides = array<i32>} : memref<1x17x64xbf16, #tpu.memory_space<vmem>>, vector<1x17x64xbf16>,
    %37 = vector.extract_strided_slice %31 {offsets = [0, 64], sizes = [17, 64], strides = [1, 1]} : vector<17x192xf32> to vector<17x64xf32>
    %38 = arith.truncf %37 : vector<17x64xf32> to vector<17x64xbf16>
    %c0_18 = arith.constant 0 : index
    %c0_19 = arith.constant 0 : index
    %c0_20 = arith.constant 0 : index
    %39 = vector.load %arg7[%c0_18, %c0_19, %c0_20] : memref<1x17x64xbf16, #tpu.memory_space<vmem>>, vector<1x17x64xbf16>
    %40 = vector.shape_cast %39 : vector<1x17x64xbf16> to vector<17x64xbf16>
    %41 = vector.shape_cast %38 : vector<17x64xbf16> to vector<1x17x64xbf16>
    tpu.vector_store %arg7[%c0_18, %c0_19, %c0_20], %41 {strides = array<i32>} : memref<1x17x64xbf16, #tpu.memory_space<vmem>>, vector<1x17x64xbf16>,
    %42 = vector.extract_strided_slice %31 {offsets = [0, 128], sizes = [17, 64], strides = [1, 1]} : vector<17x192xf32> to vector<17x64xf32>
    %43 = arith.truncf %42 : vector<17x64xf32> to vector<17x64xbf16>
    %c0_21 = arith.constant 0 : index
    %c0_22 = arith.constant 0 : index
    %c0_23 = arith.constant 0 : index
    %44 = vector.load %arg8[%c0_21, %c0_22, %c0_23] : memref<1x17x64xbf16, #tpu.memory_space<vmem>>, vector<1x17x64xbf16>
    %45 = vector.shape_cast %44 : vector<1x17x64xbf16> to vector<17x64xbf16>
    %46 = vector.shape_cast %43 : vector<17x64xbf16> to vector<1x17x64xbf16>
    tpu.vector_store %arg8[%c0_21, %c0_22, %c0_23], %46 {strides = array<i32>} : memref<1x17x64xbf16, #tpu.memory_space<vmem>>, vector<1x17x64xbf16>,
    return
  }
  func.func @transform_0(%arg0: i32) -> (i32, i32, i32) {
    %c0_i32 = arith.constant 0 : i32
    %c0_i32_0 = arith.constant 0 : i32
    %c0_i32_1 = arith.constant 0 : i32
    return %arg0, %c0_i32, %c0_i32_0 : i32, i32, i32
  }
  func.func @transform_1(%arg0: i32) -> (i32, i32) {
    %c0_i32 = arith.constant 0 : i32
    %c0_i32_0 = arith.constant 0 : i32
    %c0_i32_1 = arith.constant 0 : i32
    return %c0_i32, %c0_i32_0 : i32, i32
  }
  func.func @transform_2(%arg0: i32) -> (i32, i32) {
    %c0_i32 = arith.constant 0 : i32
    %c0_i32_0 = arith.constant 0 : i32
    %c0_i32_1 = arith.constant 0 : i32
    return %c0_i32, %c0_i32_0 : i32, i32
  }
  func.func @transform_3(%arg0: i32) -> (i32, i32) {
    %c0_i32 = arith.constant 0 : i32
    %c0_i32_0 = arith.constant 0 : i32
    %c0_i32_1 = arith.constant 0 : i32
    return %c0_i32, %c0_i32_0 : i32, i32
  }
  func.func @transform_4(%arg0: i32) -> (i32, i32) {
    %c0_i32 = arith.constant 0 : i32
    %c0_i32_0 = arith.constant 0 : i32
    %c0_i32_1 = arith.constant 0 : i32
    return %c0_i32, %c0_i32_0 : i32, i32
  }
  func.func @transform_5(%arg0: i32) -> (i32, i32, i32) {
    %c0_i32 = arith.constant 0 : i32
    %c0_i32_0 = arith.constant 0 : i32
    %c0_i32_1 = arith.constant 0 : i32
    return %arg0, %c0_i32, %c0_i32_0 : i32, i32, i32
  }
  func.func @transform_6(%arg0: i32) -> (i32, i32, i32) {
    %c0_i32 = arith.constant 0 : i32
    %c0_i32_0 = arith.constant 0 : i32
    %c0_i32_1 = arith.constant 0 : i32
    return %arg0, %c0_i32, %c0_i32_0 : i32, i32, i32
  }
  func.func @transform_7(%arg0: i32) -> (i32, i32, i32) {
    %c0_i32 = arith.constant 0 : i32
    %c0_i32_0 = arith.constant 0 : i32
    %c0_i32_1 = arith.constant 0 : i32
    return %arg0, %c0_i32, %c0_i32_0 : i32, i32, i32
  }
}

module attributes {stable_mosaic.version = 11 : i64} {
  func.func @_attn_kernel(%arg0: i32, %arg1: memref<1x17x64xbf16, #tpu.memory_space<vmem>>, %arg2: memref<1x17x64xbf16, #tpu.memory_space<vmem>>, %arg3: memref<1x17x64xbf16, #tpu.memory_space<vmem>>, %arg4: memref<1x17x64xbf16, #tpu.memory_space<vmem>>) attributes {dimension_semantics = [#tpu.dimension_semantics<parallel>], iteration_bounds = array<i64: 2>, scalar_prefetch = 0 : i64, scratch_operands = 0 : i64, tpu.core_type = #tpu.core_type<tc>, window_params = [{transform_indices = @transform_0, window_bounds = array<i64: 1, 17, 64>}, {transform_indices = @transform_1, window_bounds = array<i64: 1, 17, 64>}, {transform_indices = @transform_2, window_bounds = array<i64: 1, 17, 64>}, {transform_indices = @transform_3, window_bounds = array<i64: 1, 17, 64>}]} {
    %c0 = arith.constant 0 : index
    %c0_0 = arith.constant 0 : index
    %c0_1 = arith.constant 0 : index
    %0 = vector.load %arg1[%c0, %c0_0, %c0_1] : memref<1x17x64xbf16, #tpu.memory_space<vmem>>, vector<1x17x64xbf16>
    %1 = vector.shape_cast %0 : vector<1x17x64xbf16> to vector<17x64xbf16>
    %2 = arith.extf %1 : vector<17x64xbf16> to vector<17x64xf32>
    %cst = arith.constant 2.500000e-01 : f32
    %3 = vector.broadcast %cst : f32 to vector<17x64xf32>
    %4 = arith.mulf %2, %3 : vector<17x64xf32>
    %5 = arith.truncf %4 : vector<17x64xf32> to vector<17x64xbf16>
    %c0_2 = arith.constant 0 : index
    %c0_3 = arith.constant 0 : index
    %c0_4 = arith.constant 0 : index
    %6 = vector.load %arg2[%c0_2, %c0_3, %c0_4] : memref<1x17x64xbf16, #tpu.memory_space<vmem>>, vector<1x17x64xbf16>
    %7 = vector.shape_cast %6 : vector<1x17x64xbf16> to vector<17x64xbf16>
    %c0_5 = arith.constant 0 : index
    %c0_6 = arith.constant 0 : index
    %c0_7 = arith.constant 0 : index
    %8 = vector.load %arg3[%c0_5, %c0_6, %c0_7] : memref<1x17x64xbf16, #tpu.memory_space<vmem>>, vector<1x17x64xbf16>
    %9 = vector.shape_cast %8 : vector<1x17x64xbf16> to vector<17x64xbf16>
    %10 = vector.extract_strided_slice %5 {offsets = [0, 0], sizes = [17, 16], strides = [1, 1]} : vector<17x64xbf16> to vector<17x16xbf16>
    %11 = vector.extract_strided_slice %7 {offsets = [0, 0], sizes = [17, 16], strides = [1, 1]} : vector<17x64xbf16> to vector<17x16xbf16>
    %12 = vector.extract_strided_slice %9 {offsets = [0, 0], sizes = [17, 16], strides = [1, 1]} : vector<17x64xbf16> to vector<17x16xbf16>
    %cst_8 = arith.constant dense<0.000000e+00> : vector<17x17xf32>
    %13 = tpu.matmul %10, %11, %cst_8 {dimension_numbers = #tpu.dot_dimension_numbers<[1], [1], [0], [0], [0, 0, 1, 0], [], []>} : vector<17x16xbf16>, vector<17x16xbf16>, vector<17x17xf32> -> vector<17x17xf32>
    %cst_9 = arith.constant dense<0xFF800000> : vector<17xf32>
    %14 = vector.multi_reduction <maximumf>, %13, %cst_9 [1] : vector<17x17xf32> to vector<17xf32>
    %15 = vector.shape_cast %14 : vector<17xf32> to vector<17x1xf32>
    %16 = vector.broadcast %15 : vector<17x1xf32> to vector<17x17xf32>
    %17 = arith.subf %13, %16 : vector<17x17xf32>
    %18 = math.exp %17 : vector<17x17xf32>
    %cst_10 = arith.constant dense<0.000000e+00> : vector<17xf32>
    %19 = vector.multi_reduction <add>, %18, %cst_10 [1] : vector<17x17xf32> to vector<17xf32>
    %20 = vector.shape_cast %19 : vector<17xf32> to vector<17x1xf32>
    %21 = tpu.reciprocal %20 {approx = true} : vector<17x1xf32> -> vector<17x1xf32>
    %22 = vector.broadcast %21 : vector<17x1xf32> to vector<17x17xf32>
    %23 = arith.mulf %18, %22 : vector<17x17xf32>
    %24 = arith.truncf %23 : vector<17x17xf32> to vector<17x17xbf16>
    %cst_11 = arith.constant dense<0.000000e+00> : vector<17x16xf32>
    %25 = tpu.matmul %24, %12, %cst_11 {dimension_numbers = #tpu.dot_dimension_numbers<[1], [0], [0], [1], [0, 0, 1, 1], [], []>} : vector<17x17xbf16>, vector<17x16xbf16>, vector<17x16xf32> -> vector<17x16xf32>
    %26 = arith.truncf %25 : vector<17x16xf32> to vector<17x16xbf16>
    %c0_12 = arith.constant 0 : index
    %c0_13 = arith.constant 0 : index
    %c0_14 = arith.constant 0 : index
    %27 = vector.load %arg4[%c0_12, %c0_13, %c0_14] : memref<1x17x64xbf16, #tpu.memory_space<vmem>>, vector<1x17x16xbf16>
    %28 = vector.shape_cast %27 : vector<1x17x16xbf16> to vector<17x16xbf16>
    %29 = vector.shape_cast %26 : vector<17x16xbf16> to vector<1x17x16xbf16>
    tpu.vector_store %arg4[%c0_12, %c0_13, %c0_14], %29 {strides = array<i32>} : memref<1x17x64xbf16, #tpu.memory_space<vmem>>, vector<1x17x16xbf16>,
    %30 = vector.extract_strided_slice %5 {offsets = [0, 16], sizes = [17, 16], strides = [1, 1]} : vector<17x64xbf16> to vector<17x16xbf16>
    %31 = vector.extract_strided_slice %7 {offsets = [0, 16], sizes = [17, 16], strides = [1, 1]} : vector<17x64xbf16> to vector<17x16xbf16>
    %32 = vector.extract_strided_slice %9 {offsets = [0, 16], sizes = [17, 16], strides = [1, 1]} : vector<17x64xbf16> to vector<17x16xbf16>
    %cst_15 = arith.constant dense<0.000000e+00> : vector<17x17xf32>
    %33 = tpu.matmul %30, %31, %cst_15 {dimension_numbers = #tpu.dot_dimension_numbers<[1], [1], [0], [0], [0, 0, 1, 0], [], []>} : vector<17x16xbf16>, vector<17x16xbf16>, vector<17x17xf32> -> vector<17x17xf32>
    %cst_16 = arith.constant dense<0xFF800000> : vector<17xf32>
    %34 = vector.multi_reduction <maximumf>, %33, %cst_16 [1] : vector<17x17xf32> to vector<17xf32>
    %35 = vector.shape_cast %34 : vector<17xf32> to vector<17x1xf32>
    %36 = vector.broadcast %35 : vector<17x1xf32> to vector<17x17xf32>
    %37 = arith.subf %33, %36 : vector<17x17xf32>
    %38 = math.exp %37 : vector<17x17xf32>
    %cst_17 = arith.constant dense<0.000000e+00> : vector<17xf32>
    %39 = vector.multi_reduction <add>, %38, %cst_17 [1] : vector<17x17xf32> to vector<17xf32>
    %40 = vector.shape_cast %39 : vector<17xf32> to vector<17x1xf32>
    %41 = tpu.reciprocal %40 {approx = true} : vector<17x1xf32> -> vector<17x1xf32>
    %42 = vector.broadcast %41 : vector<17x1xf32> to vector<17x17xf32>
    %43 = arith.mulf %38, %42 : vector<17x17xf32>
    %44 = arith.truncf %43 : vector<17x17xf32> to vector<17x17xbf16>
    %cst_18 = arith.constant dense<0.000000e+00> : vector<17x16xf32>
    %45 = tpu.matmul %44, %32, %cst_18 {dimension_numbers = #tpu.dot_dimension_numbers<[1], [0], [0], [1], [0, 0, 1, 1], [], []>} : vector<17x17xbf16>, vector<17x16xbf16>, vector<17x16xf32> -> vector<17x16xf32>
    %46 = arith.truncf %45 : vector<17x16xf32> to vector<17x16xbf16>
    %c0_19 = arith.constant 0 : index
    %c0_20 = arith.constant 0 : index
    %c16 = arith.constant 16 : index
    %47 = vector.load %arg4[%c0_19, %c0_20, %c16] : memref<1x17x64xbf16, #tpu.memory_space<vmem>>, vector<1x17x16xbf16>
    %48 = vector.shape_cast %47 : vector<1x17x16xbf16> to vector<17x16xbf16>
    %49 = vector.shape_cast %46 : vector<17x16xbf16> to vector<1x17x16xbf16>
    tpu.vector_store %arg4[%c0_19, %c0_20, %c16], %49 {strides = array<i32>} : memref<1x17x64xbf16, #tpu.memory_space<vmem>>, vector<1x17x16xbf16>,
    %50 = vector.extract_strided_slice %5 {offsets = [0, 32], sizes = [17, 16], strides = [1, 1]} : vector<17x64xbf16> to vector<17x16xbf16>
    %51 = vector.extract_strided_slice %7 {offsets = [0, 32], sizes = [17, 16], strides = [1, 1]} : vector<17x64xbf16> to vector<17x16xbf16>
    %52 = vector.extract_strided_slice %9 {offsets = [0, 32], sizes = [17, 16], strides = [1, 1]} : vector<17x64xbf16> to vector<17x16xbf16>
    %cst_21 = arith.constant dense<0.000000e+00> : vector<17x17xf32>
    %53 = tpu.matmul %50, %51, %cst_21 {dimension_numbers = #tpu.dot_dimension_numbers<[1], [1], [0], [0], [0, 0, 1, 0], [], []>} : vector<17x16xbf16>, vector<17x16xbf16>, vector<17x17xf32> -> vector<17x17xf32>
    %cst_22 = arith.constant dense<0xFF800000> : vector<17xf32>
    %54 = vector.multi_reduction <maximumf>, %53, %cst_22 [1] : vector<17x17xf32> to vector<17xf32>
    %55 = vector.shape_cast %54 : vector<17xf32> to vector<17x1xf32>
    %56 = vector.broadcast %55 : vector<17x1xf32> to vector<17x17xf32>
    %57 = arith.subf %53, %56 : vector<17x17xf32>
    %58 = math.exp %57 : vector<17x17xf32>
    %cst_23 = arith.constant dense<0.000000e+00> : vector<17xf32>
    %59 = vector.multi_reduction <add>, %58, %cst_23 [1] : vector<17x17xf32> to vector<17xf32>
    %60 = vector.shape_cast %59 : vector<17xf32> to vector<17x1xf32>
    %61 = tpu.reciprocal %60 {approx = true} : vector<17x1xf32> -> vector<17x1xf32>
    %62 = vector.broadcast %61 : vector<17x1xf32> to vector<17x17xf32>
    %63 = arith.mulf %58, %62 : vector<17x17xf32>
    %64 = arith.truncf %63 : vector<17x17xf32> to vector<17x17xbf16>
    %cst_24 = arith.constant dense<0.000000e+00> : vector<17x16xf32>
    %65 = tpu.matmul %64, %52, %cst_24 {dimension_numbers = #tpu.dot_dimension_numbers<[1], [0], [0], [1], [0, 0, 1, 1], [], []>} : vector<17x17xbf16>, vector<17x16xbf16>, vector<17x16xf32> -> vector<17x16xf32>
    %66 = arith.truncf %65 : vector<17x16xf32> to vector<17x16xbf16>
    %c0_25 = arith.constant 0 : index
    %c0_26 = arith.constant 0 : index
    %c32 = arith.constant 32 : index
    %67 = vector.load %arg4[%c0_25, %c0_26, %c32] : memref<1x17x64xbf16, #tpu.memory_space<vmem>>, vector<1x17x16xbf16>
    %68 = vector.shape_cast %67 : vector<1x17x16xbf16> to vector<17x16xbf16>
    %69 = vector.shape_cast %66 : vector<17x16xbf16> to vector<1x17x16xbf16>
    tpu.vector_store %arg4[%c0_25, %c0_26, %c32], %69 {strides = array<i32>} : memref<1x17x64xbf16, #tpu.memory_space<vmem>>, vector<1x17x16xbf16>,
    %70 = vector.extract_strided_slice %5 {offsets = [0, 48], sizes = [17, 16], strides = [1, 1]} : vector<17x64xbf16> to vector<17x16xbf16>
    %71 = vector.extract_strided_slice %7 {offsets = [0, 48], sizes = [17, 16], strides = [1, 1]} : vector<17x64xbf16> to vector<17x16xbf16>
    %72 = vector.extract_strided_slice %9 {offsets = [0, 48], sizes = [17, 16], strides = [1, 1]} : vector<17x64xbf16> to vector<17x16xbf16>
    %cst_27 = arith.constant dense<0.000000e+00> : vector<17x17xf32>
    %73 = tpu.matmul %70, %71, %cst_27 {dimension_numbers = #tpu.dot_dimension_numbers<[1], [1], [0], [0], [0, 0, 1, 0], [], []>} : vector<17x16xbf16>, vector<17x16xbf16>, vector<17x17xf32> -> vector<17x17xf32>
    %cst_28 = arith.constant dense<0xFF800000> : vector<17xf32>
    %74 = vector.multi_reduction <maximumf>, %73, %cst_28 [1] : vector<17x17xf32> to vector<17xf32>
    %75 = vector.shape_cast %74 : vector<17xf32> to vector<17x1xf32>
    %76 = vector.broadcast %75 : vector<17x1xf32> to vector<17x17xf32>
    %77 = arith.subf %73, %76 : vector<17x17xf32>
    %78 = math.exp %77 : vector<17x17xf32>
    %cst_29 = arith.constant dense<0.000000e+00> : vector<17xf32>
    %79 = vector.multi_reduction <add>, %78, %cst_29 [1] : vector<17x17xf32> to vector<17xf32>
    %80 = vector.shape_cast %79 : vector<17xf32> to vector<17x1xf32>
    %81 = tpu.reciprocal %80 {approx = true} : vector<17x1xf32> -> vector<17x1xf32>
    %82 = vector.broadcast %81 : vector<17x1xf32> to vector<17x17xf32>
    %83 = arith.mulf %78, %82 : vector<17x17xf32>
    %84 = arith.truncf %83 : vector<17x17xf32> to vector<17x17xbf16>
    %cst_30 = arith.constant dense<0.000000e+00> : vector<17x16xf32>
    %85 = tpu.matmul %84, %72, %cst_30 {dimension_numbers = #tpu.dot_dimension_numbers<[1], [0], [0], [1], [0, 0, 1, 1], [], []>} : vector<17x17xbf16>, vector<17x16xbf16>, vector<17x16xf32> -> vector<17x16xf32>
    %86 = arith.truncf %85 : vector<17x16xf32> to vector<17x16xbf16>
    %c0_31 = arith.constant 0 : index
    %c0_32 = arith.constant 0 : index
    %c48 = arith.constant 48 : index
    %87 = vector.load %arg4[%c0_31, %c0_32, %c48] : memref<1x17x64xbf16, #tpu.memory_space<vmem>>, vector<1x17x16xbf16>
    %88 = vector.shape_cast %87 : vector<1x17x16xbf16> to vector<17x16xbf16>
    %89 = vector.shape_cast %86 : vector<17x16xbf16> to vector<1x17x16xbf16>
    tpu.vector_store %arg4[%c0_31, %c0_32, %c48], %89 {strides = array<i32>} : memref<1x17x64xbf16, #tpu.memory_space<vmem>>, vector<1x17x16xbf16>,
    return
  }
  func.func @transform_0(%arg0: i32) -> (i32, i32, i32) {
    %c0_i32 = arith.constant 0 : i32
    %c0_i32_0 = arith.constant 0 : i32
    %c0_i32_1 = arith.constant 0 : i32
    return %arg0, %c0_i32, %c0_i32_0 : i32, i32, i32
  }
  func.func @transform_1(%arg0: i32) -> (i32, i32, i32) {
    %c0_i32 = arith.constant 0 : i32
    %c0_i32_0 = arith.constant 0 : i32
    %c0_i32_1 = arith.constant 0 : i32
    return %arg0, %c0_i32, %c0_i32_0 : i32, i32, i32
  }
  func.func @transform_2(%arg0: i32) -> (i32, i32, i32) {
    %c0_i32 = arith.constant 0 : i32
    %c0_i32_0 = arith.constant 0 : i32
    %c0_i32_1 = arith.constant 0 : i32
    return %arg0, %c0_i32, %c0_i32_0 : i32, i32, i32
  }
  func.func @transform_3(%arg0: i32) -> (i32, i32, i32) {
    %c0_i32 = arith.constant 0 : i32
    %c0_i32_0 = arith.constant 0 : i32
    %c0_i32_1 = arith.constant 0 : i32
    return %arg0, %c0_i32, %c0_i32_0 : i32, i32, i32
  }
}

module attributes {stable_mosaic.version = 11 : i64} {
  func.func @_proj_residual_kernel(%arg0: i32, %arg1: memref<1x17x64xbf16, #tpu.memory_space<vmem>>, %arg2: memref<64x64xbf16, #tpu.memory_space<vmem>>, %arg3: memref<1x64xf32, #tpu.memory_space<vmem>>, %arg4: memref<1x17x64xf32, #tpu.memory_space<vmem>>, %arg5: memref<1x17x64xf32, #tpu.memory_space<vmem>>) attributes {dimension_semantics = [#tpu.dimension_semantics<parallel>], iteration_bounds = array<i64: 2>, scalar_prefetch = 0 : i64, scratch_operands = 0 : i64, tpu.core_type = #tpu.core_type<tc>, window_params = [{transform_indices = @transform_0, window_bounds = array<i64: 1, 17, 64>}, {pipeline_mode = #tpu.pipeline_mode<synchronous>, transform_indices = @transform_1, window_bounds = array<i64: 64, 64>}, {pipeline_mode = #tpu.pipeline_mode<synchronous>, transform_indices = @transform_2, window_bounds = array<i64: 1, 64>}, {transform_indices = @transform_3, window_bounds = array<i64: 1, 17, 64>}, {transform_indices = @transform_4, window_bounds = array<i64: 1, 17, 64>}]} {
    %c0 = arith.constant 0 : index
    %c0_0 = arith.constant 0 : index
    %c0_1 = arith.constant 0 : index
    %0 = vector.load %arg1[%c0, %c0_0, %c0_1] : memref<1x17x64xbf16, #tpu.memory_space<vmem>>, vector<1x17x64xbf16>
    %1 = vector.shape_cast %0 : vector<1x17x64xbf16> to vector<17x64xbf16>
    %c0_2 = arith.constant 0 : index
    %c0_3 = arith.constant 0 : index
    %2 = vector.load %arg2[%c0_2, %c0_3] : memref<64x64xbf16, #tpu.memory_space<vmem>>, vector<64x64xbf16>
    %cst = arith.constant dense<0.000000e+00> : vector<17x64xf32>
    %3 = tpu.matmul %1, %2, %cst {dimension_numbers = #tpu.dot_dimension_numbers<[1], [0], [0], [1], [0, 0, 1, 1], [], []>} : vector<17x64xbf16>, vector<64x64xbf16>, vector<17x64xf32> -> vector<17x64xf32>
    %c0_4 = arith.constant 0 : index
    %c0_5 = arith.constant 0 : index
    %4 = vector.load %arg3[%c0_4, %c0_5] : memref<1x64xf32, #tpu.memory_space<vmem>>, vector<1x64xf32>
    %5 = vector.broadcast %4 : vector<1x64xf32> to vector<17x64xf32>
    %6 = arith.addf %3, %5 : vector<17x64xf32>
    %c0_6 = arith.constant 0 : index
    %c0_7 = arith.constant 0 : index
    %c0_8 = arith.constant 0 : index
    %7 = vector.load %arg4[%c0_6, %c0_7, %c0_8] : memref<1x17x64xf32, #tpu.memory_space<vmem>>, vector<1x17x64xf32>
    %8 = vector.shape_cast %7 : vector<1x17x64xf32> to vector<17x64xf32>
    %9 = arith.addf %6, %8 : vector<17x64xf32>
    %c0_9 = arith.constant 0 : index
    %c0_10 = arith.constant 0 : index
    %c0_11 = arith.constant 0 : index
    %10 = vector.load %arg5[%c0_9, %c0_10, %c0_11] : memref<1x17x64xf32, #tpu.memory_space<vmem>>, vector<1x17x64xf32>
    %11 = vector.shape_cast %10 : vector<1x17x64xf32> to vector<17x64xf32>
    %12 = vector.shape_cast %9 : vector<17x64xf32> to vector<1x17x64xf32>
    tpu.vector_store %arg5[%c0_9, %c0_10, %c0_11], %12 {strides = array<i32>} : memref<1x17x64xf32, #tpu.memory_space<vmem>>, vector<1x17x64xf32>,
    return
  }
  func.func @transform_0(%arg0: i32) -> (i32, i32, i32) {
    %c0_i32 = arith.constant 0 : i32
    %c0_i32_0 = arith.constant 0 : i32
    %c0_i32_1 = arith.constant 0 : i32
    return %arg0, %c0_i32, %c0_i32_0 : i32, i32, i32
  }
  func.func @transform_1(%arg0: i32) -> (i32, i32) {
    %c0_i32 = arith.constant 0 : i32
    %c0_i32_0 = arith.constant 0 : i32
    %c0_i32_1 = arith.constant 0 : i32
    return %c0_i32, %c0_i32_0 : i32, i32
  }
  func.func @transform_2(%arg0: i32) -> (i32, i32) {
    %c0_i32 = arith.constant 0 : i32
    %c0_i32_0 = arith.constant 0 : i32
    %c0_i32_1 = arith.constant 0 : i32
    return %c0_i32, %c0_i32_0 : i32, i32
  }
  func.func @transform_3(%arg0: i32) -> (i32, i32, i32) {
    %c0_i32 = arith.constant 0 : i32
    %c0_i32_0 = arith.constant 0 : i32
    %c0_i32_1 = arith.constant 0 : i32
    return %arg0, %c0_i32, %c0_i32_0 : i32, i32, i32
  }
  func.func @transform_4(%arg0: i32) -> (i32, i32, i32) {
    %c0_i32 = arith.constant 0 : i32
    %c0_i32_0 = arith.constant 0 : i32
    %c0_i32_1 = arith.constant 0 : i32
    return %arg0, %c0_i32, %c0_i32_0 : i32, i32, i32
  }
}

module attributes {stable_mosaic.version = 11 : i64} {
  func.func @_ln_fc1_gelu_kernel(%arg0: i32, %arg1: memref<1x17x64xf32, #tpu.memory_space<vmem>>, %arg2: memref<1x64xf32, #tpu.memory_space<vmem>>, %arg3: memref<1x64xf32, #tpu.memory_space<vmem>>, %arg4: memref<64x128xbf16, #tpu.memory_space<vmem>>, %arg5: memref<1x128xf32, #tpu.memory_space<vmem>>, %arg6: memref<1x17x128xbf16, #tpu.memory_space<vmem>>) attributes {dimension_semantics = [#tpu.dimension_semantics<parallel>], iteration_bounds = array<i64: 2>, scalar_prefetch = 0 : i64, scratch_operands = 0 : i64, tpu.core_type = #tpu.core_type<tc>, window_params = [{transform_indices = @transform_0, window_bounds = array<i64: 1, 17, 64>}, {pipeline_mode = #tpu.pipeline_mode<synchronous>, transform_indices = @transform_1, window_bounds = array<i64: 1, 64>}, {pipeline_mode = #tpu.pipeline_mode<synchronous>, transform_indices = @transform_2, window_bounds = array<i64: 1, 64>}, {pipeline_mode = #tpu.pipeline_mode<synchronous>, transform_indices = @transform_3, window_bounds = array<i64: 64, 128>}, {pipeline_mode = #tpu.pipeline_mode<synchronous>, transform_indices = @transform_4, window_bounds = array<i64: 1, 128>}, {transform_indices = @transform_5, window_bounds = array<i64: 1, 17, 128>}]} {
    %c0 = arith.constant 0 : index
    %c0_0 = arith.constant 0 : index
    %c0_1 = arith.constant 0 : index
    %0 = vector.load %arg1[%c0, %c0_0, %c0_1] : memref<1x17x64xf32, #tpu.memory_space<vmem>>, vector<1x17x64xf32>
    %1 = vector.shape_cast %0 : vector<1x17x64xf32> to vector<17x64xf32>
    %c0_2 = arith.constant 0 : index
    %c0_3 = arith.constant 0 : index
    %2 = vector.load %arg2[%c0_2, %c0_3] : memref<1x64xf32, #tpu.memory_space<vmem>>, vector<1x64xf32>
    %c0_4 = arith.constant 0 : index
    %c0_5 = arith.constant 0 : index
    %3 = vector.load %arg3[%c0_4, %c0_5] : memref<1x64xf32, #tpu.memory_space<vmem>>, vector<1x64xf32>
    %cst = arith.constant dense<0.000000e+00> : vector<17xf32>
    %4 = vector.multi_reduction <add>, %1, %cst [1] : vector<17x64xf32> to vector<17xf32>
    %5 = vector.shape_cast %4 : vector<17xf32> to vector<17x1xf32>
    %cst_6 = arith.constant 6.400000e+01 : f32
    %6 = vector.broadcast %cst_6 : f32 to vector<17x1xf32>
    %7 = arith.divf %5, %6 : vector<17x1xf32>
    %8 = vector.broadcast %7 : vector<17x1xf32> to vector<17x64xf32>
    %9 = arith.subf %1, %8 : vector<17x64xf32>
    %10 = arith.mulf %9, %9 : vector<17x64xf32>
    %cst_7 = arith.constant dense<0.000000e+00> : vector<17xf32>
    %11 = vector.multi_reduction <add>, %10, %cst_7 [1] : vector<17x64xf32> to vector<17xf32>
    %12 = vector.shape_cast %11 : vector<17xf32> to vector<17x1xf32>
    %cst_8 = arith.constant 6.400000e+01 : f32
    %13 = vector.broadcast %cst_8 : f32 to vector<17x1xf32>
    %14 = arith.divf %12, %13 : vector<17x1xf32>
    %15 = vector.broadcast %7 : vector<17x1xf32> to vector<17x64xf32>
    %16 = arith.subf %1, %15 : vector<17x64xf32>
    %cst_9 = arith.constant 9.99999997E-7 : f32
    %17 = vector.broadcast %cst_9 : f32 to vector<17x1xf32>
    %18 = arith.addf %14, %17 : vector<17x1xf32>
    %19 = math.rsqrt %18 : vector<17x1xf32>
    %20 = vector.broadcast %19 : vector<17x1xf32> to vector<17x64xf32>
    %21 = arith.mulf %16, %20 : vector<17x64xf32>
    %22 = vector.broadcast %2 : vector<1x64xf32> to vector<17x64xf32>
    %23 = arith.mulf %21, %22 : vector<17x64xf32>
    %24 = vector.broadcast %3 : vector<1x64xf32> to vector<17x64xf32>
    %25 = arith.addf %23, %24 : vector<17x64xf32>
    %26 = arith.truncf %25 : vector<17x64xf32> to vector<17x64xbf16>
    %c0_10 = arith.constant 0 : index
    %c0_11 = arith.constant 0 : index
    %27 = vector.load %arg4[%c0_10, %c0_11] : memref<64x128xbf16, #tpu.memory_space<vmem>>, vector<64x128xbf16>
    %cst_12 = arith.constant dense<0.000000e+00> : vector<17x128xf32>
    %28 = tpu.matmul %26, %27, %cst_12 {dimension_numbers = #tpu.dot_dimension_numbers<[1], [0], [0], [1], [0, 0, 1, 1], [], []>} : vector<17x64xbf16>, vector<64x128xbf16>, vector<17x128xf32> -> vector<17x128xf32>
    %c0_13 = arith.constant 0 : index
    %c0_14 = arith.constant 0 : index
    %29 = vector.load %arg5[%c0_13, %c0_14] : memref<1x128xf32, #tpu.memory_space<vmem>>, vector<1x128xf32>
    %30 = vector.broadcast %29 : vector<1x128xf32> to vector<17x128xf32>
    %31 = arith.addf %28, %30 : vector<17x128xf32>
    %cst_15 = arith.constant 5.000000e-01 : f32
    %32 = vector.broadcast %cst_15 : f32 to vector<17x128xf32>
    %33 = arith.mulf %32, %31 : vector<17x128xf32>
    %cst_16 = arith.constant 0.707106769 : f32
    %34 = vector.broadcast %cst_16 : f32 to vector<17x128xf32>
    %35 = arith.mulf %31, %34 : vector<17x128xf32>
    %36 = math.absf %35 : vector<17x128xf32>
    %cst_17 = arith.constant 0.327591091 : f32
    %37 = vector.broadcast %cst_17 : f32 to vector<17x128xf32>
    %38 = arith.mulf %37, %36 : vector<17x128xf32>
    %cst_18 = arith.constant 1.000000e+00 : f32
    %39 = vector.broadcast %cst_18 : f32 to vector<17x128xf32>
    %40 = arith.addf %39, %38 : vector<17x128xf32>
    %cst_19 = arith.constant 1.000000e+00 : f32
    %41 = vector.broadcast %cst_19 : f32 to vector<17x128xf32>
    %42 = arith.divf %41, %40 : vector<17x128xf32>
    %cst_20 = arith.constant 1.06140542 : f32
    %43 = vector.broadcast %cst_20 : f32 to vector<17x128xf32>
    %44 = arith.mulf %43, %42 : vector<17x128xf32>
    %cst_21 = arith.constant 1.45315206 : f32
    %45 = vector.broadcast %cst_21 : f32 to vector<17x128xf32>
    %46 = arith.subf %44, %45 : vector<17x128xf32>
    %47 = arith.mulf %46, %42 : vector<17x128xf32>
    %cst_22 = arith.constant 1.42141378 : f32
    %48 = vector.broadcast %cst_22 : f32 to vector<17x128xf32>
    %49 = arith.addf %47, %48 : vector<17x128xf32>
    %50 = arith.mulf %49, %42 : vector<17x128xf32>
    %cst_23 = arith.constant 0.284496725 : f32
    %51 = vector.broadcast %cst_23 : f32 to vector<17x128xf32>
    %52 = arith.subf %50, %51 : vector<17x128xf32>
    %53 = arith.mulf %52, %42 : vector<17x128xf32>
    %cst_24 = arith.constant 0.254829586 : f32
    %54 = vector.broadcast %cst_24 : f32 to vector<17x128xf32>
    %55 = arith.addf %53, %54 : vector<17x128xf32>
    %56 = arith.mulf %55, %42 : vector<17x128xf32>
    %cst_25 = arith.constant 0.000000e+00 : f32
    %57 = vector.broadcast %cst_25 : f32 to vector<17x128xf32>
    %58 = arith.subf %57, %36 : vector<17x128xf32>
    %59 = arith.mulf %58, %36 : vector<17x128xf32>
    %60 = math.exp %59 : vector<17x128xf32>
    %61 = arith.mulf %56, %60 : vector<17x128xf32>
    %cst_26 = arith.constant 1.000000e+00 : f32
    %62 = vector.broadcast %cst_26 : f32 to vector<17x128xf32>
    %63 = arith.subf %62, %61 : vector<17x128xf32>
    %cst_27 = arith.constant 0.000000e+00 : f32
    %64 = vector.broadcast %cst_27 : f32 to vector<17x128xf32>
    %65 = arith.cmpf olt, %35, %64 : vector<17x128xf32>
    %cst_28 = arith.constant 0.000000e+00 : f32
    %66 = vector.broadcast %cst_28 : f32 to vector<17x128xf32>
    %67 = arith.subf %66, %63 : vector<17x128xf32>
    %68 = arith.select %65, %67, %63 : vector<17x128xi1>, vector<17x128xf32>
    %cst_29 = arith.constant 1.000000e+00 : f32
    %69 = vector.broadcast %cst_29 : f32 to vector<17x128xf32>
    %70 = arith.addf %69, %68 : vector<17x128xf32>
    %71 = arith.mulf %33, %70 : vector<17x128xf32>
    %72 = arith.truncf %71 : vector<17x128xf32> to vector<17x128xbf16>
    %c0_30 = arith.constant 0 : index
    %c0_31 = arith.constant 0 : index
    %c0_32 = arith.constant 0 : index
    %73 = vector.load %arg6[%c0_30, %c0_31, %c0_32] : memref<1x17x128xbf16, #tpu.memory_space<vmem>>, vector<1x17x128xbf16>
    %74 = vector.shape_cast %73 : vector<1x17x128xbf16> to vector<17x128xbf16>
    %75 = vector.shape_cast %72 : vector<17x128xbf16> to vector<1x17x128xbf16>
    tpu.vector_store %arg6[%c0_30, %c0_31, %c0_32], %75 {strides = array<i32>} : memref<1x17x128xbf16, #tpu.memory_space<vmem>>, vector<1x17x128xbf16>,
    return
  }
  func.func @transform_0(%arg0: i32) -> (i32, i32, i32) {
    %c0_i32 = arith.constant 0 : i32
    %c0_i32_0 = arith.constant 0 : i32
    %c0_i32_1 = arith.constant 0 : i32
    return %arg0, %c0_i32, %c0_i32_0 : i32, i32, i32
  }
  func.func @transform_1(%arg0: i32) -> (i32, i32) {
    %c0_i32 = arith.constant 0 : i32
    %c0_i32_0 = arith.constant 0 : i32
    %c0_i32_1 = arith.constant 0 : i32
    return %c0_i32, %c0_i32_0 : i32, i32
  }
  func.func @transform_2(%arg0: i32) -> (i32, i32) {
    %c0_i32 = arith.constant 0 : i32
    %c0_i32_0 = arith.constant 0 : i32
    %c0_i32_1 = arith.constant 0 : i32
    return %c0_i32, %c0_i32_0 : i32, i32
  }
  func.func @transform_3(%arg0: i32) -> (i32, i32) {
    %c0_i32 = arith.constant 0 : i32
    %c0_i32_0 = arith.constant 0 : i32
    %c0_i32_1 = arith.constant 0 : i32
    return %c0_i32, %c0_i32_0 : i32, i32
  }
  func.func @transform_4(%arg0: i32) -> (i32, i32) {
    %c0_i32 = arith.constant 0 : i32
    %c0_i32_0 = arith.constant 0 : i32
    %c0_i32_1 = arith.constant 0 : i32
    return %c0_i32, %c0_i32_0 : i32, i32
  }
  func.func @transform_5(%arg0: i32) -> (i32, i32, i32) {
    %c0_i32 = arith.constant 0 : i32
    %c0_i32_0 = arith.constant 0 : i32
    %c0_i32_1 = arith.constant 0 : i32
    return %arg0, %c0_i32, %c0_i32_0 : i32, i32, i32
  }
}

module attributes {stable_mosaic.version = 11 : i64} {
  func.func @_proj_residual_kernel(%arg0: i32, %arg1: memref<1x17x128xbf16, #tpu.memory_space<vmem>>, %arg2: memref<128x64xbf16, #tpu.memory_space<vmem>>, %arg3: memref<1x64xf32, #tpu.memory_space<vmem>>, %arg4: memref<1x17x64xf32, #tpu.memory_space<vmem>>, %arg5: memref<1x17x64xf32, #tpu.memory_space<vmem>>) attributes {dimension_semantics = [#tpu.dimension_semantics<parallel>], iteration_bounds = array<i64: 2>, scalar_prefetch = 0 : i64, scratch_operands = 0 : i64, tpu.core_type = #tpu.core_type<tc>, window_params = [{transform_indices = @transform_0, window_bounds = array<i64: 1, 17, 128>}, {pipeline_mode = #tpu.pipeline_mode<synchronous>, transform_indices = @transform_1, window_bounds = array<i64: 128, 64>}, {pipeline_mode = #tpu.pipeline_mode<synchronous>, transform_indices = @transform_2, window_bounds = array<i64: 1, 64>}, {transform_indices = @transform_3, window_bounds = array<i64: 1, 17, 64>}, {transform_indices = @transform_4, window_bounds = array<i64: 1, 17, 64>}]} {
    %c0 = arith.constant 0 : index
    %c0_0 = arith.constant 0 : index
    %c0_1 = arith.constant 0 : index
    %0 = vector.load %arg1[%c0, %c0_0, %c0_1] : memref<1x17x128xbf16, #tpu.memory_space<vmem>>, vector<1x17x128xbf16>
    %1 = vector.shape_cast %0 : vector<1x17x128xbf16> to vector<17x128xbf16>
    %c0_2 = arith.constant 0 : index
    %c0_3 = arith.constant 0 : index
    %2 = vector.load %arg2[%c0_2, %c0_3] : memref<128x64xbf16, #tpu.memory_space<vmem>>, vector<128x64xbf16>
    %cst = arith.constant dense<0.000000e+00> : vector<17x64xf32>
    %3 = tpu.matmul %1, %2, %cst {dimension_numbers = #tpu.dot_dimension_numbers<[1], [0], [0], [1], [0, 0, 1, 1], [], []>} : vector<17x128xbf16>, vector<128x64xbf16>, vector<17x64xf32> -> vector<17x64xf32>
    %c0_4 = arith.constant 0 : index
    %c0_5 = arith.constant 0 : index
    %4 = vector.load %arg3[%c0_4, %c0_5] : memref<1x64xf32, #tpu.memory_space<vmem>>, vector<1x64xf32>
    %5 = vector.broadcast %4 : vector<1x64xf32> to vector<17x64xf32>
    %6 = arith.addf %3, %5 : vector<17x64xf32>
    %c0_6 = arith.constant 0 : index
    %c0_7 = arith.constant 0 : index
    %c0_8 = arith.constant 0 : index
    %7 = vector.load %arg4[%c0_6, %c0_7, %c0_8] : memref<1x17x64xf32, #tpu.memory_space<vmem>>, vector<1x17x64xf32>
    %8 = vector.shape_cast %7 : vector<1x17x64xf32> to vector<17x64xf32>
    %9 = arith.addf %6, %8 : vector<17x64xf32>
    %c0_9 = arith.constant 0 : index
    %c0_10 = arith.constant 0 : index
    %c0_11 = arith.constant 0 : index
    %10 = vector.load %arg5[%c0_9, %c0_10, %c0_11] : memref<1x17x64xf32, #tpu.memory_space<vmem>>, vector<1x17x64xf32>
    %11 = vector.shape_cast %10 : vector<1x17x64xf32> to vector<17x64xf32>
    %12 = vector.shape_cast %9 : vector<17x64xf32> to vector<1x17x64xf32>
    tpu.vector_store %arg5[%c0_9, %c0_10, %c0_11], %12 {strides = array<i32>} : memref<1x17x64xf32, #tpu.memory_space<vmem>>, vector<1x17x64xf32>,
    return
  }
  func.func @transform_0(%arg0: i32) -> (i32, i32, i32) {
    %c0_i32 = arith.constant 0 : i32
    %c0_i32_0 = arith.constant 0 : i32
    %c0_i32_1 = arith.constant 0 : i32
    return %arg0, %c0_i32, %c0_i32_0 : i32, i32, i32
  }
  func.func @transform_1(%arg0: i32) -> (i32, i32) {
    %c0_i32 = arith.constant 0 : i32
    %c0_i32_0 = arith.constant 0 : i32
    %c0_i32_1 = arith.constant 0 : i32
    return %c0_i32, %c0_i32_0 : i32, i32
  }
  func.func @transform_2(%arg0: i32) -> (i32, i32) {
    %c0_i32 = arith.constant 0 : i32
    %c0_i32_0 = arith.constant 0 : i32
    %c0_i32_1 = arith.constant 0 : i32
    return %c0_i32, %c0_i32_0 : i32, i32
  }
  func.func @transform_3(%arg0: i32) -> (i32, i32, i32) {
    %c0_i32 = arith.constant 0 : i32
    %c0_i32_0 = arith.constant 0 : i32
    %c0_i32_1 = arith.constant 0 : i32
    return %arg0, %c0_i32, %c0_i32_0 : i32, i32, i32
  }
  func.func @transform_4(%arg0: i32) -> (i32, i32, i32) {
    %c0_i32 = arith.constant 0 : i32
    %c0_i32_0 = arith.constant 0 : i32
    %c0_i32_1 = arith.constant 0 : i32
    return %arg0, %c0_i32, %c0_i32_0 : i32, i32, i32
  }
}

module attributes {stable_mosaic.version = 11 : i64} {
  func.func @_ln_head_kernel(%arg0: i32, %arg1: memref<1x1x64xf32, #tpu.memory_space<vmem>>, %arg2: memref<1x64xf32, #tpu.memory_space<vmem>>, %arg3: memref<1x64xf32, #tpu.memory_space<vmem>>, %arg4: memref<64x128xbf16, #tpu.memory_space<vmem>>, %arg5: memref<1x128xf32, #tpu.memory_space<vmem>>, %arg6: memref<1x1x128xf32, #tpu.memory_space<vmem>>) attributes {dimension_semantics = [#tpu.dimension_semantics<parallel>], iteration_bounds = array<i64: 2>, scalar_prefetch = 0 : i64, scratch_operands = 0 : i64, tpu.core_type = #tpu.core_type<tc>, window_params = [{transform_indices = @transform_0, window_bounds = array<i64: 1, 1, 64>}, {pipeline_mode = #tpu.pipeline_mode<synchronous>, transform_indices = @transform_1, window_bounds = array<i64: 1, 64>}, {pipeline_mode = #tpu.pipeline_mode<synchronous>, transform_indices = @transform_2, window_bounds = array<i64: 1, 64>}, {pipeline_mode = #tpu.pipeline_mode<synchronous>, transform_indices = @transform_3, window_bounds = array<i64: 64, 128>}, {pipeline_mode = #tpu.pipeline_mode<synchronous>, transform_indices = @transform_4, window_bounds = array<i64: 1, 128>}, {transform_indices = @transform_5, window_bounds = array<i64: 1, 1, 128>}]} {
    %c0 = arith.constant 0 : index
    %c0_0 = arith.constant 0 : index
    %c0_1 = arith.constant 0 : index
    %0 = vector.load %arg1[%c0, %c0_0, %c0_1] : memref<1x1x64xf32, #tpu.memory_space<vmem>>, vector<1x1x64xf32>
    %1 = vector.shape_cast %0 : vector<1x1x64xf32> to vector<1x64xf32>
    %c0_2 = arith.constant 0 : index
    %c0_3 = arith.constant 0 : index
    %2 = vector.load %arg2[%c0_2, %c0_3] : memref<1x64xf32, #tpu.memory_space<vmem>>, vector<1x64xf32>
    %c0_4 = arith.constant 0 : index
    %c0_5 = arith.constant 0 : index
    %3 = vector.load %arg3[%c0_4, %c0_5] : memref<1x64xf32, #tpu.memory_space<vmem>>, vector<1x64xf32>
    %cst = arith.constant dense<0.000000e+00> : vector<1xf32>
    %4 = vector.multi_reduction <add>, %1, %cst [1] : vector<1x64xf32> to vector<1xf32>
    %5 = vector.shape_cast %4 : vector<1xf32> to vector<1x1xf32>
    %cst_6 = arith.constant 6.400000e+01 : f32
    %6 = vector.broadcast %cst_6 : f32 to vector<1x1xf32>
    %7 = arith.divf %5, %6 : vector<1x1xf32>
    %8 = vector.broadcast %7 : vector<1x1xf32> to vector<1x64xf32>
    %9 = arith.subf %1, %8 : vector<1x64xf32>
    %10 = arith.mulf %9, %9 : vector<1x64xf32>
    %cst_7 = arith.constant dense<0.000000e+00> : vector<1xf32>
    %11 = vector.multi_reduction <add>, %10, %cst_7 [1] : vector<1x64xf32> to vector<1xf32>
    %12 = vector.shape_cast %11 : vector<1xf32> to vector<1x1xf32>
    %cst_8 = arith.constant 6.400000e+01 : f32
    %13 = vector.broadcast %cst_8 : f32 to vector<1x1xf32>
    %14 = arith.divf %12, %13 : vector<1x1xf32>
    %15 = vector.broadcast %7 : vector<1x1xf32> to vector<1x64xf32>
    %16 = arith.subf %1, %15 : vector<1x64xf32>
    %cst_9 = arith.constant 9.99999997E-7 : f32
    %17 = vector.broadcast %cst_9 : f32 to vector<1x1xf32>
    %18 = arith.addf %14, %17 : vector<1x1xf32>
    %19 = math.rsqrt %18 : vector<1x1xf32>
    %20 = vector.broadcast %19 : vector<1x1xf32> to vector<1x64xf32>
    %21 = arith.mulf %16, %20 : vector<1x64xf32>
    %22 = arith.mulf %21, %2 : vector<1x64xf32>
    %23 = arith.addf %22, %3 : vector<1x64xf32>
    %24 = arith.truncf %23 : vector<1x64xf32> to vector<1x64xbf16>
    %c0_10 = arith.constant 0 : index
    %c0_11 = arith.constant 0 : index
    %25 = vector.load %arg4[%c0_10, %c0_11] : memref<64x128xbf16, #tpu.memory_space<vmem>>, vector<64x128xbf16>
    %cst_12 = arith.constant dense<0.000000e+00> : vector<1x128xf32>
    %26 = tpu.matmul %24, %25, %cst_12 {dimension_numbers = #tpu.dot_dimension_numbers<[1], [0], [0], [1], [0, 0, 1, 1], [], []>} : vector<1x64xbf16>, vector<64x128xbf16>, vector<1x128xf32> -> vector<1x128xf32>
    %c0_13 = arith.constant 0 : index
    %c0_14 = arith.constant 0 : index
    %27 = vector.load %arg5[%c0_13, %c0_14] : memref<1x128xf32, #tpu.memory_space<vmem>>, vector<1x128xf32>
    %28 = arith.addf %26, %27 : vector<1x128xf32>
    %c0_15 = arith.constant 0 : index
    %c0_16 = arith.constant 0 : index
    %c0_17 = arith.constant 0 : index
    %29 = vector.load %arg6[%c0_15, %c0_16, %c0_17] : memref<1x1x128xf32, #tpu.memory_space<vmem>>, vector<1x1x128xf32>
    %30 = vector.shape_cast %29 : vector<1x1x128xf32> to vector<1x128xf32>
    %31 = vector.shape_cast %28 : vector<1x128xf32> to vector<1x1x128xf32>
    tpu.vector_store %arg6[%c0_15, %c0_16, %c0_17], %31 {strides = array<i32>} : memref<1x1x128xf32, #tpu.memory_space<vmem>>, vector<1x1x128xf32>,
    return
  }
  func.func @transform_0(%arg0: i32) -> (i32, i32, i32) {
    %c0_i32 = arith.constant 0 : i32
    %c0_i32_0 = arith.constant 0 : i32
    %c0_i32_1 = arith.constant 0 : i32
    return %arg0, %c0_i32, %c0_i32_0 : i32, i32, i32
  }
  func.func @transform_1(%arg0: i32) -> (i32, i32) {
    %c0_i32 = arith.constant 0 : i32
    %c0_i32_0 = arith.constant 0 : i32
    %c0_i32_1 = arith.constant 0 : i32
    return %c0_i32, %c0_i32_0 : i32, i32
  }
  func.func @transform_2(%arg0: i32) -> (i32, i32) {
    %c0_i32 = arith.constant 0 : i32
    %c0_i32_0 = arith.constant 0 : i32
    %c0_i32_1 = arith.constant 0 : i32
    return %c0_i32, %c0_i32_0 : i32, i32
  }
  func.func @transform_3(%arg0: i32) -> (i32, i32) {
    %c0_i32 = arith.constant 0 : i32
    %c0_i32_0 = arith.constant 0 : i32
    %c0_i32_1 = arith.constant 0 : i32
    return %c0_i32, %c0_i32_0 : i32, i32
  }
  func.func @transform_4(%arg0: i32) -> (i32, i32) {
    %c0_i32 = arith.constant 0 : i32
    %c0_i32_0 = arith.constant 0 : i32
    %c0_i32_1 = arith.constant 0 : i32
    return %c0_i32, %c0_i32_0 : i32, i32
  }
  func.func @transform_5(%arg0: i32) -> (i32, i32, i32) {
    %c0_i32 = arith.constant 0 : i32
    %c0_i32_0 = arith.constant 0 : i32
    %c0_i32_1 = arith.constant 0 : i32
    return %arg0, %c0_i32, %c0_i32_0 : i32, i32, i32
  }
}

</mosaic_0001>

<llo_original>
// kernel: vit_forward.15
$region0: #{vit_forward.15}
  #allocation0 [shape = 'u32[]', space=smem, size = 0x4, offset = 0x4, fixed_abs, tag = 'smem constant byte address 0x4 - core index']
  #allocation1 [shape = 'u32[144,128]{1,0:T(1,128)}', space=vmem, size = 0x12000, scoped, tag = 'internal scratch']
  %s0 = inlined_call_operand.vmem [shape: bf16[2,17,64], index: 0, kind: input, shape index: {}]
  %s1 = inlined_call_operand.vmem [shape: bf16[64,64], index: 1, kind: input, shape index: {}]
  %s2 = inlined_call_operand.vmem [shape: f32[1,64], index: 2, kind: input, shape index: {}]
  %s3 = inlined_call_operand.vmem [shape: f32[2,17,64], index: 3, kind: input, shape index: {}]
  %s4 = inlined_call_operand.vmem [shape: f32[2,17,64], index: 4, kind: output, shape index: {}]
  %s5 = sld [smem:[#allocation0]]
  $region49: #{vit_forward.15} parent=0
    _
  %s7 = ssub.s32 1, %s5
  %s8 = scalar_select 0, %s7, %s5
  loop: start=0, step=1, limit=4
  $region2: #{vit_forward.15} parent=0 // loop_pre_header
    _
  $region3: #{vit_forward.15} parent=0 // loop_header
    %s10 = sphi 0, %s14
    %p11 = scmp.ge.s32.totalorder %s10, 4
    %s20 = sphi 0, %s22
    %s23 = sphi 0, %s20
    %s24 = sphi 0, %s23
    %s40 = sphi 0, %s24
    %s44 = sphi 0, %s44
    %s46 = sphi 0, %s44
    %s47 = sphi 0, %s46
    %s61 = sphi 0, %s47
    %s65 = sphi 0, %s65
    %s67 = sphi 0, %s65
    %s68 = sphi 0, %s67
    %s82 = sphi 0, %s68
    %s88 = sphi 0, %s90
    %s91 = sphi 0, %s88
    %s92 = sphi 0, %s91
    %s108 = sphi 0, %s92
    %s114 = sphi 0, %s116
    %s117 = sphi 0, %s114
    %s118 = sphi 0, %s117
    %s134 = sphi 0, %s118
  $region4: #{vit_forward.15} parent=0 // loop_header_branch
    %13 = sbr.rel (%p11) target = $region8
  $region5: #{vit_forward.15} parent=0 // loop_body
    %s15 = ssub.s32 %s10, 1
    %s16 = ssub.s32 %s10, 2
    %s17 = sadd.s32 %s10, 1
    %s18 = ssub.s32 %s10, %s17
    %p19 = scmp.eq.s32.totalorder %s18, 0
    %s21 = sadd.s32 %s20, 1
    %s22 = scalar_select %p19, %s20, %s21
    %p25 = pneg %p19
    %p26 = scmp.eq.s32.totalorder %s10, 1
    %p27 = por %p25, %p26
    %p28 = scmp.ne.s32.totalorder %s20, %s23
    %p29 = scmp.eq.s32.totalorder %s10, 0
    %p30 = por %p28, %p29
    %p31 = scmp.ne.s32.totalorder %s20, %s23
    %p32 = scmp.eq.s32.totalorder %s15, 1
    %p33 = por %p31, %p32
    %p34 = scmp.ne.s32.totalorder %s23, %s24
    %p35 = scmp.eq.s32.totalorder %s15, 0
    %p36 = por %p34, %p35
    %p37 = scmp.ne.s32.totalorder %s23, %s24
    %p38 = scmp.eq.s32.totalorder %s16, 1
    %p39 = por %p37, %p38
    %p41 = scmp.ne.s32.totalorder %s24, %s40
    %p42 = scmp.eq.s32.totalorder %s16, 0
    %p43 = por %p41, %p42
    %s45 = sadd.s32 %s44, 1
    %p48 = scmp.eq.s32.totalorder %s10, 1
    %p49 = scmp.ne.s32.totalorder %s44, %s46
    %p50 = scmp.eq.s32.totalorder %s10, 0
    %p51 = por %p49, %p50
    %p52 = scmp.ne.s32.totalorder %s44, %s46
    %p53 = scmp.eq.s32.totalorder %s15, 1
    %p54 = por %p52, %p53
    %p55 = scmp.ne.s32.totalorder %s46, %s47
    %p56 = scmp.eq.s32.totalorder %s15, 0
    %p57 = por %p55, %p56
    %p58 = scmp.ne.s32.totalorder %s46, %s47
    %p59 = scmp.eq.s32.totalorder %s16, 1
    %p60 = por %p58, %p59
    %p62 = scmp.ne.s32.totalorder %s47, %s61
    %p63 = scmp.eq.s32.totalorder %s16, 0
    %p64 = por %p62, %p63
    %s66 = sadd.s32 %s65, 1
    %p69 = scmp.eq.s32.totalorder %s10, 1
    %p70 = scmp.ne.s32.totalorder %s65, %s67
    %p71 = scmp.eq.s32.totalorder %s10, 0
    %p72 = por %p70, %p71
    %p73 = scmp.ne.s32.totalorder %s65, %s67
    %p74 = scmp.eq.s32.totalorder %s15, 1
    %p75 = por %p73, %p74
    %p76 = scmp.ne.s32.totalorder %s67, %s68
    %p77 = scmp.eq.s32.totalorder %s15, 0
    %p78 = por %p76, %p77
    %p79 = scmp.ne.s32.totalorder %s67, %s68
    %p80 = scmp.eq.s32.totalorder %s16, 1
    %p81 = por %p79, %p80
    %p83 = scmp.ne.s32.totalorder %s68, %s82
    %p84 = scmp.eq.s32.totalorder %s16, 0
    %p85 = por %p83, %p84
    %s86 = ssub.s32 %s10, %s17
    %p87 = scmp.eq.s32.totalorder %s86, 0
    %s89 = sadd.s32 %s88, 1
    %s90 = scalar_select %p87, %s88, %s89
    %p93 = pneg %p87
    %p94 = scmp.eq.s32.totalorder %s10, 1
    %p95 = por %p93, %p94
    %p96 = scmp.ne.s32.totalorder %s88, %s91
    %p97 = scmp.eq.s32.totalorder %s10, 0
    %p98 = por %p96, %p97
    %p99 = scmp.ne.s32.totalorder %s88, %s91
    %p100 = scmp.eq.s32.totalorder %s15, 1
    %p101 = por %p99, %p100
    %p102 = scmp.ne.s32.totalorder %s91, %s92
    %p103 = scmp.eq.s32.totalorder %s15, 0
    %p104 = por %p102, %p103
    %p105 = scmp.ne.s32.totalorder %s91, %s92
    %p106 = scmp.eq.s32.totalorder %s16, 1
    %p107 = por %p105, %p106
    %p109 = scmp.ne.s32.totalorder %s92, %s108
    %p110 = scmp.eq.s32.totalorder %s16, 0
    %p111 = por %p109, %p110
    %s112 = ssub.s32 %s10, %s17
    %p113 = scmp.eq.s32.totalorder %s112, 0
    %s115 = sadd.s32 %s114, 1
    %s116 = scalar_select %p113, %s114, %s115
    %p119 = pneg %p113
    %p120 = scmp.eq.s32.totalorder %s10, 1
    %p121 = por %p119, %p120
    %p122 = scmp.ne.s32.totalorder %s114, %s117
    %p123 = scmp.eq.s32.totalorder %s10, 0
    %p124 = por %p122, %p123
    %p125 = scmp.ne.s32.totalorder %s114, %s117
    %p126 = scmp.eq.s32.totalorder %s15, 1
    %p127 = por %p125, %p126
    %p128 = scmp.ne.s32.totalorder %s117, %s118
    %p129 = scmp.eq.s32.totalorder %s15, 0
    %p130 = por %p128, %p129
    %p131 = scmp.ne.s32.totalorder %s117, %s118
    %p132 = scmp.eq.s32.totalorder %s16, 1
    %p133 = por %p131, %p132
    %p135 = scmp.ne.s32.totalorder %s118, %s134
    %p136 = scmp.eq.s32.totalorder %s16, 0
    %p137 = por %p135, %p136
    %p138 = scmp.le.s32.totalorder 1, %s10
    %p139 = scmp.lt.s32.totalorder %s10, 3
    %p140 = pnand %p138, %p139
    %p141 = pneg %p140
    // Predicated region
    $region9: #{vit_forward.15} parent=5 // pred_check
      _
    $region10: #{vit_forward.15} parent=5 // pred_check_branch
      %143 = sbr.rel (%p140) target = $region12
    $region11: #{vit_forward.15} parent=5 // pred_region
      %s144 = ssub.s32 %s10, 1
      // Predicated region
      $region13: #{vit_forward.15} parent=11 // pred_check
        %p145 = pneg %p57
      $region14: #{vit_forward.15} parent=11 // pred_check_branch
        %147 = sbr.rel (%p145) target = $region16
      $region15: #{vit_forward.15} parent=11 // pred_region
        _
      $region16: #{vit_forward.15} parent=11 // pred_fallthru
        _
      // Predicated region
      $region17: #{vit_forward.15} parent=11 // pred_check
        %p148 = pneg %p78
      $region18: #{vit_forward.15} parent=11 // pred_check_branch
        %150 = sbr.rel (%p148) target = $region20
      $region19: #{vit_forward.15} parent=11 // pred_region
        _
      $region20: #{vit_forward.15} parent=11 // pred_fallthru
        _
    $region12: #{vit_forward.15} parent=5 // pred_fallthru
      _
    %p151 = scmp.lt.s32.totalorder %s10, 2
    // Predicated region
    $region21: #{vit_forward.15} parent=5 // pred_check
      %p152 = pneg %p151
    $region22: #{vit_forward.15} parent=5 // pred_check_branch
      %154 = sbr.rel (%p152) target = $region24
    $region23: #{vit_forward.15} parent=5 // pred_region
      // Predicated region
      $region25: #{vit_forward.15} parent=23 // pred_check
        %p155 = pneg %p30
      $region26: #{vit_forward.15} parent=23 // pred_check_branch
        %157 = sbr.rel (%p155) target = $region28
      $region27: #{vit_forward.15} parent=23 // pred_region
        %p158 = scmp.lt.s32.totalorder %s10, 1
        %s159 = scalar_select %p158, %s10, 1
        %s160 = smul.addr %s159, 3
        %s161 = smul.addr %s160, 4
        %s162 = scalar_lea.vmem %s0, %s161
      $region28: #{vit_forward.15} parent=23 // pred_fallthru
        _
      // Predicated region
      $region29: #{vit_forward.15} parent=23 // pred_check
        %p163 = pneg %p98
      $region30: #{vit_forward.15} parent=23 // pred_check_branch
        %165 = sbr.rel (%p163) target = $region32
      $region31: #{vit_forward.15} parent=23 // pred_region
        %p166 = scmp.lt.s32.totalorder %s10, 1
        %s167 = scalar_select %p166, %s10, 1
        %s168 = smul.addr %s167, 3
        %s169 = smul.addr %s168, 8
        %s170 = scalar_lea.vmem %s3, %s169
      $region32: #{vit_forward.15} parent=23 // pred_fallthru
        _
    $region24: #{vit_forward.15} parent=5 // pred_fallthru
      _
    %p171 = scmp.le.s32.totalorder 1, %s10
    %p172 = scmp.lt.s32.totalorder %s10, 3
    %p173 = pnand %p171, %p172
    %p174 = pneg %p173
    // Predicated region
    $region33: #{vit_forward.15} parent=5 // pred_check
      _
    $region34: #{vit_forward.15} parent=5 // pred_check_branch
      %176 = sbr.rel (%p173) target = $region36
    $region35: #{vit_forward.15} parent=5 // pred_region
      %s177 = ssub.s32 %s10, 1
      %p178 = scmp.lt.s32.totalorder %s15, 1
      %s179 = scalar_select %p178, %s15, 1
      %s180 = smul.addr %s179, 3
      %s181 = smul.addr %s180, 4
      %s182 = scalar_lea.vmem %s0, %s181
      %p183 = pneg %p36
      %p184 = pneg %p33
      %p185 = pneg %p57
      %p186 = pneg %p54
      %p187 = pneg %p78
      %p188 = pneg %p75
      %p189 = scmp.lt.s32.totalorder %s15, 1
      %s190 = scalar_select %p189, %s15, 1
      %s191 = smul.addr %s190, 3
      %s192 = smul.addr %s191, 8
      %s193 = scalar_lea.vmem %s3, %s192
      %p194 = pneg %p104
      %p195 = pneg %p101
      %p196 = pneg %p130
      %p197 = pneg %p127
      %p198 = scmp.lt.s32.totalorder %s15, 1
      %s199 = scalar_select %p198, %s15, 1
      %s200 = smul.addr %s199, 3
      %s201 = smul.addr %s200, 8
      %s202 = scalar_lea.vmem %s4, %s201
      %p203 = scmp.lt.s32.totalorder %s15, 1
      %s204 = scalar_select %p203, %s15, 1
      %s205 = smul.addr %s204, 3
      %s206 = smul.addr %s205, 4
      %s207 = scalar_lea.vmem %s0, %s206
      %p208 = scmp.lt.s32.totalorder %s15, 1
      %s209 = scalar_select %p208, %s15, 1
      %s210 = smul.addr %s209, 3
      %s211 = smul.addr %s210, 8
      %s212 = scalar_lea.vmem %s3, %s211
      %p213 = scmp.lt.s32.totalorder %s15, 1
      %s214 = scalar_select %p213, %s15, 1
      %s215 = smul.addr %s214, 3
      %s216 = smul.addr %s215, 8
      %s217 = scalar_lea.vmem %s4, %s216
      %v219 = vld [vmem:[%s207] sm:$0xf]
      %v220 = vld [vmem:[%s207 + $0x4] sm:$0xf]
      %v221 = vld [vmem:[%s207 + $0x8] sm:$0x1]
      %v222 = vld [vmem:[%s1] sm:$0xf]
      %v223 = vld [vmem:[%s1 + $0x4] sm:$0xf]
      %v224 = vld [vmem:[%s1 + $0x8] sm:$0xf]
      %v225 = vld [vmem:[%s1 + $0xc] sm:$0xf]
      %v226 = vld [vmem:[%s1 + $0x10] sm:$0xf]
      %v227 = vld [vmem:[%s1 + $0x14] sm:$0xf]
      %v228 = vld [vmem:[%s1 + $0x18] sm:$0xf]
      %v229 = vld [vmem:[%s1 + $0x1c] sm:$0xf]
      %v230 = vld [vmem:[%s2] sm:$0x1]
      %v232 = vlaneseq
      %v233 = vshrl.u32 %v232, 7
      %v234 = vsub.s32 0, %v233
      %v235 = vrot.slane %v230, %v234
      %v240 = vunpack.c.l.b16 %v219
      %v241 = vunpack.c.l.b16 %v220
      %v242 = vunpack.c.l.b16 %v221
      %v243 = vpack.c.b16 %v241, %v240
      %v244 = vpack.c.b16 %v242, %v242
      %v253 = vunpack.c.l.b16 %v222
      %v254 = vunpack.c.l.b16 %v223
      %v255 = vunpack.c.l.b16 %v224
      %v256 = vunpack.c.l.b16 %v225
      %v257 = vunpack.c.l.b16 %v226
      %v258 = vunpack.c.l.b16 %v227
      %v259 = vunpack.c.l.b16 %v228
      %v260 = vunpack.c.l.b16 %v229
      %v261 = vpack.c.b16 %v254, %v253
      %v262 = vpack.c.b16 %v256, %v255
      %v263 = vpack.c.b16 %v258, %v257
      %v264 = vpack.c.b16 %v260, %v259
      %vm269 = vcmask 523264
      %v271 = vsel %vm269, %v243, 0
      %v274 = vsel %vm269, %v244, 0
      %276 = vmatprep.subr.bf16.mxu0 0
      %277 = vmatpush1.bf16.msra.mxu0 0
      %278 = vmatprep.subr.bf16.mxu0 0
      %279 = vmatpush1.bf16.msra.mxu0 0
      %280 = vmatprep.subr.bf16.mxu0 0
      %281 = vmatpush1.bf16.msra.mxu0 0
      %282 = vmatprep.subr.bf16.mxu0 0
      %283 = vmatpush1.bf16.msra.mxu0 0
      %284 = vmatprep.subr.bf16.mxu0 0
      %285 = vmatpush1.bf16.msra.mxu0 %v264
      %286 = vmatprep.subr.bf16.mxu0 0
      %287 = vmatpush1.bf16.msra.mxu0 %v263
      %288 = vmatprep.subr.bf16.mxu0 0
      %289 = vmatpush1.bf16.msra.mxu0 %v262
      %290 = vmatprep.subr.bf16.mxu0 0
      %291 = vmatpush1.bf16.msra.mxu0 %v261
      %292 = vmatprep.subr.bf16.mxu0 0
      %293 = vmatpush2.bf16.msra.mxu0 0
      %294 = vmatprep.subr.bf16.mxu0 0
      %295 = vmatpush2.bf16.msra.mxu0 0
      %296 = vmatprep.subr.bf16.mxu0 0
      %297 = vmatpush2.bf16.msra.mxu0 0
      %298 = vmatprep.subr.bf16.mxu0 0
      %299 = vmatpush2.bf16.msra.mxu0 0
      %300 = vmatprep.subr.bf16.mxu0 0
      %301 = vmatpush2.bf16.msra.mxu0 0
      %302 = vmatprep.subr.bf16.mxu0 0
      %303 = vmatpush2.bf16.msra.mxu0 0
      %304 = vmatprep.subr.bf16.mxu0 0
      %305 = vmatpush2.bf16.msra.mxu0 0
      %306 = vmatprep.subr.bf16.mxu0 0
      %307 = vmatpush2.bf16.msra.mxu0 0
      %308 = vmatprep.mubr.bf16.mxu0 0
      %309 = vmatmul.mubr.bf16.gmra.mxu0 %v271
      %v310 = vpop.f32.mrf.mxu0
      %v311 = vadd.f32 %v235, %v310
      %v312 = vpop.f32.mrf.mxu0
      %v313 = vpop.f32.mrf.mxu0
      %v314 = vadd.f32 %v235, %v313
      %v315 = vpop.f32.mrf.mxu0
      %316 = vmatprep.mubr.bf16.mxu0 0
      %317 = vmatmul.mubr.bf16.gmra.mxu0 %v274
      %v318 = vpop.f32.mrf.mxu0
      %v319 = vadd.f32 %v235, %v318
      %v320 = vpop.f32.mrf.mxu0
      %v321 = vpop.f32.mrf.mxu0
      %v322 = vpop.f32.mrf.mxu0
      %323 = vdwg.mxu0
      %v324 = vld [vmem:[%s212] sm:$0xff]
      %v325 = vld [vmem:[%s212 + $0x8] sm:$0xff]
      %v326 = vld [vmem:[%s212 + $0x10] sm:$0x1]
      %v327 = vadd.f32 %v311, %v324
      %v328 = vadd.f32 %v314, %v325
      %v329 = vadd.f32 %v319, %v326
      %330 = vst.msk [vmem:[%s217] sm:$0xff] %vm269, %v327
      %331 = vst.msk [vmem:[%s217 + $0x8] sm:$0xff] %vm269, %v328
      %vm332 = vcmask 516096
      %333 = vst.msk [vmem:[%s217 + $0x10] sm:$0x1] %vm332, %v329
      %p334 = scmp.lt.s32.totalorder %s15, 1
      %s335 = scalar_select %p334, %s15, 1
      %s336 = smul.addr %s335, 3
      %s337 = smul.addr %s336, 8
      %s338 = scalar_lea.vmem %s4, %s337
      // Predicated region
      $region37: #{vit_forward.15} parent=35 // pred_check
        %p339 = pneg %p127
      $region38: #{vit_forward.15} parent=35 // pred_check_branch
        %341 = sbr.rel (%p339) target = $region40
      $region39: #{vit_forward.15} parent=35 // pred_region
        _
      $region40: #{vit_forward.15} parent=35 // pred_fallthru
        _
    $region36: #{vit_forward.15} parent=5 // pred_fallthru
      _
    %p342 = scmp.le.s32.totalorder 2, %s10
    // Predicated region
    $region41: #{vit_forward.15} parent=5 // pred_check
      %p343 = pneg %p342
    $region42: #{vit_forward.15} parent=5 // pred_check_branch
      %345 = sbr.rel (%p343) target = $region44
    $region43: #{vit_forward.15} parent=5 // pred_region
      %s346 = ssub.s32 %s10, 2
      // Predicated region
      $region45: #{vit_forward.15} parent=43 // pred_check
        %p347 = pneg %p133
      $region46: #{vit_forward.15} parent=43 // pred_check_branch
        %349 = sbr.rel (%p347) target = $region48
      $region47: #{vit_forward.15} parent=43 // pred_region
        %p350 = scmp.lt.s32.totalorder %s16, 1
        %s351 = scalar_select %p350, %s16, 1
        %s352 = smul.addr %s351, 3
        %s353 = smul.addr %s352, 8
        %s354 = scalar_lea.vmem %s4, %s353
      $region48: #{vit_forward.15} parent=43 // pred_fallthru
        _
    $region44: #{vit_forward.15} parent=5 // pred_fallthru
      _
  $region6: #{vit_forward.15} parent=0 // loop_footer
    %s14 = sadd.s32 1, %s10
  $region7: #{vit_forward.15} parent=0 // loop_footer_branch
    %9 = sbr.rel target = $region3
  $region8: #{vit_forward.15} parent=0 // loop_exit
    _

// kernel: vit_forward.12
$region0: #{vit_forward.12}
  #allocation0 [shape = 'u32[]', space=smem, size = 0x4, offset = 0x4, fixed_abs, tag = 'smem constant byte address 0x4 - core index']
  #allocation1 [shape = 'u32[144,128]{1,0:T(1,128)}', space=vmem, size = 0x12000, scoped, tag = 'internal scratch']
  %s0 = inlined_call_operand.vmem [shape: f32[2,16,192], index: 0, kind: input, shape index: {}]
  %s1 = inlined_call_operand.vmem [shape: bf16[192,64], index: 1, kind: input, shape index: {}]
  %s2 = inlined_call_operand.vmem [shape: f32[1,64], index: 2, kind: input, shape index: {}]
  %s3 = inlined_call_operand.vmem [shape: f32[1,16,64], index: 3, kind: input, shape index: {}]
  %s4 = inlined_call_operand.vmem [shape: f32[2,16,64], index: 4, kind: output, shape index: {}]
  %s5 = sld [smem:[#allocation0]]
  $region49: #{vit_forward.12} parent=0
    _
  %s7 = ssub.s32 1, %s5
  %s8 = scalar_select 0, %s7, %s5
  loop: start=0, step=1, limit=4
  $region2: #{vit_forward.12} parent=0 // loop_pre_header
    _
  $region3: #{vit_forward.12} parent=0 // loop_header
    %s10 = sphi 0, %s14
    %p11 = scmp.ge.s32.totalorder %s10, 4
    %s20 = sphi 0, %s22
    %s23 = sphi 0, %s20
    %s24 = sphi 0, %s23
    %s40 = sphi 0, %s24
    %s44 = sphi 0, %s44
    %s46 = sphi 0, %s44
    %s47 = sphi 0, %s46
    %s61 = sphi 0, %s47
    %s65 = sphi 0, %s65
    %s67 = sphi 0, %s65
    %s68 = sphi 0, %s67
    %s82 = sphi 0, %s68
    %s86 = sphi 0, %s86
    %s88 = sphi 0, %s86
    %s89 = sphi 0, %s88
    %s103 = sphi 0, %s89
    %s109 = sphi 0, %s111
    %s112 = sphi 0, %s109
    %s113 = sphi 0, %s112
    %s129 = sphi 0, %s113
  $region4: #{vit_forward.12} parent=0 // loop_header_branch
    %13 = sbr.rel (%p11) target = $region8
  $region5: #{vit_forward.12} parent=0 // loop_body
    %s15 = ssub.s32 %s10, 1
    %s16 = ssub.s32 %s10, 2
    %s17 = sadd.s32 %s10, 1
    %s18 = ssub.s32 %s10, %s17
    %p19 = scmp.eq.s32.totalorder %s18, 0
    %s21 = sadd.s32 %s20, 1
    %s22 = scalar_select %p19, %s20, %s21
    %p25 = pneg %p19
    %p26 = scmp.eq.s32.totalorder %s10, 1
    %p27 = por %p25, %p26
    %p28 = scmp.ne.s32.totalorder %s20, %s23
    %p29 = scmp.eq.s32.totalorder %s10, 0
    %p30 = por %p28, %p29
    %p31 = scmp.ne.s32.totalorder %s20, %s23
    %p32 = scmp.eq.s32.totalorder %s15, 1
    %p33 = por %p31, %p32
    %p34 = scmp.ne.s32.totalorder %s23, %s24
    %p35 = scmp.eq.s32.totalorder %s15, 0
    %p36 = por %p34, %p35
    %p37 = scmp.ne.s32.totalorder %s23, %s24
    %p38 = scmp.eq.s32.totalorder %s16, 1
    %p39 = por %p37, %p38
    %p41 = scmp.ne.s32.totalorder %s24, %s40
    %p42 = scmp.eq.s32.totalorder %s16, 0
    %p43 = por %p41, %p42
    %s45 = sadd.s32 %s44, 1
    %p48 = scmp.eq.s32.totalorder %s10, 1
    %p49 = scmp.ne.s32.totalorder %s44, %s46
    %p50 = scmp.eq.s32.totalorder %s10, 0
    %p51 = por %p49, %p50
    %p52 = scmp.ne.s32.totalorder %s44, %s46
    %p53 = scmp.eq.s32.totalorder %s15, 1
    %p54 = por %p52, %p53
    %p55 = scmp.ne.s32.totalorder %s46, %s47
    %p56 = scmp.eq.s32.totalorder %s15, 0
    %p57 = por %p55, %p56
    %p58 = scmp.ne.s32.totalorder %s46, %s47
    %p59 = scmp.eq.s32.totalorder %s16, 1
    %p60 = por %p58, %p59
    %p62 = scmp.ne.s32.totalorder %s47, %s61
    %p63 = scmp.eq.s32.totalorder %s16, 0
    %p64 = por %p62, %p63
    %s66 = sadd.s32 %s65, 1
    %p69 = scmp.eq.s32.totalorder %s10, 1
    %p70 = scmp.ne.s32.totalorder %s65, %s67
    %p71 = scmp.eq.s32.totalorder %s10, 0
    %p72 = por %p70, %p71
    %p73 = scmp.ne.s32.totalorder %s65, %s67
    %p74 = scmp.eq.s32.totalorder %s15, 1
    %p75 = por %p73, %p74
    %p76 = scmp.ne.s32.totalorder %s67, %s68
    %p77 = scmp.eq.s32.totalorder %s15, 0
    %p78 = por %p76, %p77
    %p79 = scmp.ne.s32.totalorder %s67, %s68
    %p80 = scmp.eq.s32.totalorder %s16, 1
    %p81 = por %p79, %p80
    %p83 = scmp.ne.s32.totalorder %s68, %s82
    %p84 = scmp.eq.s32.totalorder %s16, 0
    %p85 = por %p83, %p84
    %s87 = sadd.s32 %s86, 1
    %p90 = scmp.eq.s32.totalorder %s10, 1
    %p91 = scmp.ne.s32.totalorder %s86, %s88
    %p92 = scmp.eq.s32.totalorder %s10, 0
    %p93 = por %p91, %p92
    %p94 = scmp.ne.s32.totalorder %s86, %s88
    %p95 = scmp.eq.s32.totalorder %s15, 1
    %p96 = por %p94, %p95
    %p97 = scmp.ne.s32.totalorder %s88, %s89
    %p98 = scmp.eq.s32.totalorder %s15, 0
    %p99 = por %p97, %p98
    %p100 = scmp.ne.s32.totalorder %s88, %s89
    %p101 = scmp.eq.s32.totalorder %s16, 1
    %p102 = por %p100, %p101
    %p104 = scmp.ne.s32.totalorder %s89, %s103
    %p105 = scmp.eq.s32.totalorder %s16, 0
    %p106 = por %p104, %p105
    %s107 = ssub.s32 %s10, %s17
    %p108 = scmp.eq.s32.totalorder %s107, 0
    %s110 = sadd.s32 %s109, 1
    %s111 = scalar_select %p108, %s109, %s110
    %p114 = pneg %p108
    %p115 = scmp.eq.s32.totalorder %s10, 1
    %p116 = por %p114, %p115
    %p117 = scmp.ne.s32.totalorder %s109, %s112
    %p118 = scmp.eq.s32.totalorder %s10, 0
    %p119 = por %p117, %p118
    %p120 = scmp.ne.s32.totalorder %s109, %s112
    %p121 = scmp.eq.s32.totalorder %s15, 1
    %p122 = por %p120, %p121
    %p123 = scmp.ne.s32.totalorder %s112, %s113
    %p124 = scmp.eq.s32.totalorder %s15, 0
    %p125 = por %p123, %p124
    %p126 = scmp.ne.s32.totalorder %s112, %s113
    %p127 = scmp.eq.s32.totalorder %s16, 1
    %p128 = por %p126, %p127
    %p130 = scmp.ne.s32.totalorder %s113, %s129
    %p131 = scmp.eq.s32.totalorder %s16, 0
    %p132 = por %p130, %p131
    %p133 = scmp.le.s32.totalorder 1, %s10
    %p134 = scmp.lt.s32.totalorder %s10, 3
    %p135 = pnand %p133, %p134
    %p136 = pneg %p135
    // Predicated region
    $region9: #{vit_forward.12} parent=5 // pred_check
      _
    $region10: #{vit_forward.12} parent=5 // pred_check_branch
      %138 = sbr.rel (%p135) target = $region12
    $region11: #{vit_forward.12} parent=5 // pred_region
      %s139 = ssub.s32 %s10, 1
      // Predicated region
      $region13: #{vit_forward.12} parent=11 // pred_check
        %p140 = pneg %p57
      $region14: #{vit_forward.12} parent=11 // pred_check_branch
        %142 = sbr.rel (%p140) target = $region16
      $region15: #{vit_forward.12} parent=11 // pred_region
        _
      $region16: #{vit_forward.12} parent=11 // pred_fallthru
        _
      // Predicated region
      $region17: #{vit_forward.12} parent=11 // pred_check
        %p143 = pneg %p78
      $region18: #{vit_forward.12} parent=11 // pred_check_branch
        %145 = sbr.rel (%p143) target = $region20
      $region19: #{vit_forward.12} parent=11 // pred_region
        _
      $region20: #{vit_forward.12} parent=11 // pred_fallthru
        _
      // Predicated region
      $region21: #{vit_forward.12} parent=11 // pred_check
        %p146 = pneg %p99
      $region22: #{vit_forward.12} parent=11 // pred_check_branch
        %148 = sbr.rel (%p146) target = $region24
      $region23: #{vit_forward.12} parent=11 // pred_region
        _
      $region24: #{vit_forward.12} parent=11 // pred_fallthru
        _
    $region12: #{vit_forward.12} parent=5 // pred_fallthru
      _
    %p149 = scmp.lt.s32.totalorder %s10, 2
    // Predicated region
    $region25: #{vit_forward.12} parent=5 // pred_check
      %p150 = pneg %p149
    $region26: #{vit_forward.12} parent=5 // pred_check_branch
      %152 = sbr.rel (%p150) target = $region28
    $region27: #{vit_forward.12} parent=5 // pred_region
      // Predicated region
      $region29: #{vit_forward.12} parent=27 // pred_check
        %p153 = pneg %p30
      $region30: #{vit_forward.12} parent=27 // pred_check_branch
        %155 = sbr.rel (%p153) target = $region32
      $region31: #{vit_forward.12} parent=27 // pred_region
        %p156 = scmp.lt.s32.totalorder %s10, 1
        %s157 = scalar_select %p156, %s10, 1
        %s158 = smul.addr %s157, 4
        %s159 = smul.addr %s158, 8
        %s160 = scalar_lea.vmem %s0, %s159
      $region32: #{vit_forward.12} parent=27 // pred_fallthru
        _
    $region28: #{vit_forward.12} parent=5 // pred_fallthru
      _
    %p161 = scmp.le.s32.totalorder 1, %s10
    %p162 = scmp.lt.s32.totalorder %s10, 3
    %p163 = pnand %p161, %p162
    %p164 = pneg %p163
    // Predicated region
    $region33: #{vit_forward.12} parent=5 // pred_check
      _
    $region34: #{vit_forward.12} parent=5 // pred_check_branch
      %166 = sbr.rel (%p163) target = $region36
    $region35: #{vit_forward.12} parent=5 // pred_region
      %s167 = ssub.s32 %s10, 1
      %p168 = scmp.lt.s32.totalorder %s15, 1
      %s169 = scalar_select %p168, %s15, 1
      %s170 = smul.addr %s169, 4
      %s171 = smul.addr %s170, 8
      %s172 = scalar_lea.vmem %s0, %s171
      %p173 = pneg %p36
      %p174 = pneg %p33
      %p175 = pneg %p57
      %p176 = pneg %p54
      %p177 = pneg %p78
      %p178 = pneg %p75
      %p179 = pneg %p99
      %p180 = pneg %p96
      %p181 = pneg %p125
      %p182 = pneg %p122
      %p183 = scmp.lt.s32.totalorder %s15, 1
      %s184 = scalar_select %p183, %s15, 1
      %s185 = smul.addr %s184, 2
      %s186 = smul.addr %s185, 8
      %s187 = scalar_lea.vmem %s4, %s186
      %p188 = scmp.lt.s32.totalorder %s15, 1
      %s189 = scalar_select %p188, %s15, 1
      %s190 = smul.addr %s189, 4
      %s191 = smul.addr %s190, 8
      %s192 = scalar_lea.vmem %s0, %s191
      %p193 = scmp.lt.s32.totalorder %s15, 1
      %s194 = scalar_select %p193, %s15, 1
      %s195 = smul.addr %s194, 2
      %s196 = smul.addr %s195, 8
      %s197 = scalar_lea.vmem %s4, %s196
      %v199 = vld [vmem:[%s192] sm:$0xff]
      %v200 = vld [vmem:[%s192 + $0x8] sm:$0xff]
      %v201 = vld [vmem:[%s192 + $0x10] sm:$0xff]
      %v202 = vld [vmem:[%s192 + $0x18] sm:$0xff]
      %v203 = vpack.c.bf16 %v201, %v199
      %v204 = vpack.c.bf16 %v202, %v200
      %v205 = vld [vmem:[%s1] sm:$0xf]
      %v206 = vld [vmem:[%s1 + $0x4] sm:$0xf]
      %v207 = vld [vmem:[%s1 + $0x8] sm:$0xf]
      %v208 = vld [vmem:[%s1 + $0xc] sm:$0xf]
      %v209 = vld [vmem:[%s1 + $0x10] sm:$0xf]
      %v210 = vld [vmem:[%s1 + $0x14] sm:$0xf]
      %v211 = vld [vmem:[%s1 + $0x18] sm:$0xf]
      %v212 = vld [vmem:[%s1 + $0x1c] sm:$0xf]
      %v213 = vld [vmem:[%s1 + $0x20] sm:$0xf]
      %v214 = vld [vmem:[%s1 + $0x24] sm:$0xf]
      %v215 = vld [vmem:[%s1 + $0x28] sm:$0xf]
      %v216 = vld [vmem:[%s1 + $0x2c] sm:$0xf]
      %v217 = vld [vmem:[%s1 + $0x30] sm:$0xf]
      %v218 = vld [vmem:[%s1 + $0x34] sm:$0xf]
      %v219 = vld [vmem:[%s1 + $0x38] sm:$0xf]
      %v220 = vld [vmem:[%s1 + $0x3c] sm:$0xf]
      %v221 = vld [vmem:[%s1 + $0x40] sm:$0xf]
      %v222 = vld [vmem:[%s1 + $0x44] sm:$0xf]
      %v223 = vld [vmem:[%s1 + $0x48] sm:$0xf]
      %v224 = vld [vmem:[%s1 + $0x4c] sm:$0xf]
      %v225 = vld [vmem:[%s1 + $0x50] sm:$0xf]
      %v226 = vld [vmem:[%s1 + $0x54] sm:$0xf]
      %v227 = vld [vmem:[%s1 + $0x58] sm:$0xf]
      %v228 = vld [vmem:[%s1 + $0x5c] sm:$0xf]
      %v229 = vld [vmem:[%s2] sm:$0x1]
      %v231 = vlaneseq
      %v232 = vshrl.u32 %v231, 7
      %v233 = vsub.s32 0, %v232
      %v234 = vrot.slane %v229, %v233
      %v260 = vunpack.c.l.b16 %v205
      %v261 = vunpack.c.l.b16 %v206
      %v262 = vunpack.c.l.b16 %v207
      %v263 = vunpack.c.l.b16 %v208
      %v264 = vunpack.c.l.b16 %v209
      %v265 = vunpack.c.l.b16 %v210
      %v266 = vunpack.c.l.b16 %v211
      %v267 = vunpack.c.l.b16 %v212
      %v268 = vunpack.c.l.b16 %v213
      %v269 = vunpack.c.l.b16 %v214
      %v270 = vunpack.c.l.b16 %v215
      %v271 = vunpack.c.l.b16 %v216
      %v272 = vunpack.c.l.b16 %v217
      %v273 = vunpack.c.l.b16 %v218
      %v274 = vunpack.c.l.b16 %v219
      %v275 = vunpack.c.l.b16 %v220
      %v276 = vunpack.c.l.b16 %v221
      %v277 = vunpack.c.l.b16 %v222
      %v278 = vunpack.c.l.b16 %v223
      %v279 = vunpack.c.l.b16 %v224
      %v280 = vunpack.c.l.b16 %v225
      %v281 = vunpack.c.l.b16 %v226
      %v282 = vunpack.c.l.b16 %v227
      %v283 = vunpack.c.l.b16 %v228
      %v284 = vpack.c.b16 %v261, %v260
      %v285 = vpack.c.b16 %v263, %v262
      %v286 = vpack.c.b16 %v265, %v264
      %v287 = vpack.c.b16 %v267, %v266
      %v288 = vpack.c.b16 %v269, %v268
      %v289 = vpack.c.b16 %v271, %v270
      %v290 = vpack.c.b16 %v273, %v272
      %v291 = vpack.c.b16 %v275, %v274
      %v292 = vpack.c.b16 %v277, %v276
      %v293 = vpack.c.b16 %v279, %v278
      %v294 = vpack.c.b16 %v281, %v280
      %v295 = vpack.c.b16 %v283, %v282
      %vm308 = vcmask 523264
      %v310 = vsel %vm308, %v204, 0
      %312 = vmatprep.subr.bf16.mxu0 0
      %313 = vmatpush1.bf16.msra.mxu0 %v291
      %314 = vmatprep.subr.bf16.mxu0 0
      %315 = vmatpush1.bf16.msra.mxu0 %v290
      %316 = vmatprep.subr.bf16.mxu0 0
      %317 = vmatpush1.bf16.msra.mxu0 %v289
      %318 = vmatprep.subr.bf16.mxu0 0
      %319 = vmatpush1.bf16.msra.mxu0 %v288
      %320 = vmatprep.subr.bf16.mxu0 0
      %321 = vmatpush1.bf16.msra.mxu0 %v287
      %322 = vmatprep.subr.bf16.mxu0 0
      %323 = vmatpush1.bf16.msra.mxu0 %v286
      %324 = vmatprep.subr.bf16.mxu0 0
      %325 = vmatpush1.bf16.msra.mxu0 %v285
      %326 = vmatprep.subr.bf16.mxu0 0
      %327 = vmatpush1.bf16.msra.mxu0 %v284
      %328 = vmatprep.subr.bf16.mxu0 0
      %329 = vmatpush2.bf16.msra.mxu0 0
      %330 = vmatprep.subr.bf16.mxu0 0
      %331 = vmatpush2.bf16.msra.mxu0 0
      %332 = vmatprep.subr.bf16.mxu0 0
      %333 = vmatpush2.bf16.msra.mxu0 0
      %334 = vmatprep.subr.bf16.mxu0 0
      %335 = vmatpush2.bf16.msra.mxu0 0
      %336 = vmatprep.subr.bf16.mxu0 0
      %337 = vmatpush2.bf16.msra.mxu0 %v295
      %338 = vmatprep.subr.bf16.mxu0 0
      %339 = vmatpush2.bf16.msra.mxu0 %v294
      %340 = vmatprep.subr.bf16.mxu0 0
      %341 = vmatpush2.bf16.msra.mxu0 %v293
      %342 = vmatprep.subr.bf16.mxu0 0
      %343 = vmatpush2.bf16.msra.mxu0 %v292
      %344 = vmatprep.mubr.bf16.mxu0 %v310
      %345 = vmatmul.mubr.bf16.gmra.mxu0 %v203
      %v346 = vpop.f32.mrf.mxu0
      %v347 = vadd.f32 %v234, %v346
      %v348 = vpop.f32.mrf.mxu0
      %v349 = vpop.f32.mrf.mxu0
      %v350 = vadd.f32 %v234, %v349
      %v351 = vpop.f32.mrf.mxu0
      %352 = vdwg.mxu0
      %v353 = vld [vmem:[%s3] sm:$0xff]
      %v354 = vld [vmem:[%s3 + $0x8] sm:$0xff]
      %v355 = vadd.f32 %v347, %v353
      %v356 = vadd.f32 %v350, %v354
      %357 = vst.msk [vmem:[%s197] sm:$0xff] %vm308, %v355
      %358 = vst.msk [vmem:[%s197 + $0x8] sm:$0xff] %vm308, %v356
      %p359 = scmp.lt.s32.totalorder %s15, 1
      %s360 = scalar_select %p359, %s15, 1
      %s361 = smul.addr %s360, 2
      %s362 = smul.addr %s361, 8
      %s363 = scalar_lea.vmem %s4, %s362
      // Predicated region
      $region37: #{vit_forward.12} parent=35 // pred_check
        %p364 = pneg %p122
      $region38: #{vit_forward.12} parent=35 // pred_check_branch
        %366 = sbr.rel (%p364) target = $region40
      $region39: #{vit_forward.12} parent=35 // pred_region
        _
      $region40: #{vit_forward.12} parent=35 // pred_fallthru
        _
    $region36: #{vit_forward.12} parent=5 // pred_fallthru
      _
    %p367 = scmp.le.s32.totalorder 2, %s10
    // Predicated region
    $region41: #{vit_forward.12} parent=5 // pred_check
      %p368 = pneg %p367
    $region42: #{vit_forward.12} parent=5 // pred_check_branch
      %370 = sbr.rel (%p368) target = $region44
    $region43: #{vit_forward.12} parent=5 // pred_region
      %s371 = ssub.s32 %s10, 2
      // Predicated region
      $region45: #{vit_forward.12} parent=43 // pred_check
        %p372 = pneg %p128
      $region46: #{vit_forward.12} parent=43 // pred_check_branch
        %374 = sbr.rel (%p372) target = $region48
      $region47: #{vit_forward.12} parent=43 // pred_region
        %p375 = scmp.lt.s32.totalorder %s16, 1
        %s376 = scalar_select %p375, %s16, 1
        %s377 = smul.addr %s376, 2
        %s378 = smul.addr %s377, 8
        %s379 = scalar_lea.vmem %s4, %s378
      $region48: #{vit_forward.12} parent=43 // pred_fallthru
        _
    $region44: #{vit_forward.12} parent=5 // pred_fallthru
      _
  $region6: #{vit_forward.12} parent=0 // loop_footer
    %s14 = sadd.s32 1, %s10
  $region7: #{vit_forward.12} parent=0 // loop_footer_branch
    %9 = sbr.rel target = $region3
  $region8: #{vit_forward.12} parent=0 // loop_exit
    _

// kernel: vit_forward.13
$region0: #{vit_forward.13}
  #allocation0 [shape = 'u32[]', space=smem, size = 0x4, offset = 0x4, fixed_abs, tag = 'smem constant byte address 0x4 - core index']
  #allocation1 [shape = 'u32[144,128]{1,0:T(1,128)}', space=vmem, size = 0x12000, scoped, tag = 'internal scratch']
  %s0 = inlined_call_operand.vmem [shape: f32[2,17,64], index: 0, kind: input, shape index: {}]
  %s1 = inlined_call_operand.vmem [shape: f32[1,64], index: 1, kind: input, shape index: {}]
  %s2 = inlined_call_operand.vmem [shape: f32[1,64], index: 2, kind: input, shape index: {}]
  %s3 = inlined_call_operand.vmem [shape: bf16[64,192], index: 3, kind: input, shape index: {}]
  %s4 = inlined_call_operand.vmem [shape: f32[1,192], index: 4, kind: input, shape index: {}]
  %s5 = inlined_call_operand.vmem [shape: bf16[2,17,64], index: 5, kind: output, shape index: {0}]
  %s6 = inlined_call_operand.vmem [shape: bf16[2,17,64], index: 6, kind: output, shape index: {1}]
  %s7 = inlined_call_operand.vmem [shape: bf16[2,17,64], index: 7, kind: output, shape index: {2}]
  %8 = xla_tuple %s5, %s6, %s7
  %s9 = sld [smem:[#allocation0]]
  $region69: #{vit_forward.13} parent=0
    _
  %s11 = ssub.s32 1, %s9
  %s12 = scalar_select 0, %s11, %s9
  loop: start=0, step=1, limit=4
  $region2: #{vit_forward.13} parent=0 // loop_pre_header
    _
  $region3: #{vit_forward.13} parent=0 // loop_header
    %s14 = sphi 0, %s18
    %p15 = scmp.ge.s32.totalorder %s14, 4
    %s24 = sphi 0, %s26
    %s27 = sphi 0, %s24
    %s28 = sphi 0, %s27
    %s44 = sphi 0, %s28
    %s48 = sphi 0, %s48
    %s50 = sphi 0, %s48
    %s51 = sphi 0, %s50
    %s65 = sphi 0, %s51
    %s69 = sphi 0, %s69
    %s71 = sphi 0, %s69
    %s72 = sphi 0, %s71
    %s86 = sphi 0, %s72
    %s90 = sphi 0, %s90
    %s92 = sphi 0, %s90
    %s93 = sphi 0, %s92
    %s107 = sphi 0, %s93
    %s111 = sphi 0, %s111
    %s113 = sphi 0, %s111
    %s114 = sphi 0, %s113
    %s128 = sphi 0, %s114
    %s134 = sphi 0, %s136
    %s137 = sphi 0, %s134
    %s138 = sphi 0, %s137
    %s154 = sphi 0, %s138
    %s160 = sphi 0, %s162
    %s163 = sphi 0, %s160
    %s164 = sphi 0, %s163
    %s180 = sphi 0, %s164
    %s186 = sphi 0, %s188
    %s189 = sphi 0, %s186
    %s190 = sphi 0, %s189
    %s206 = sphi 0, %s190
  $region4: #{vit_forward.13} parent=0 // loop_header_branch
    %17 = sbr.rel (%p15) target = $region8
  $region5: #{vit_forward.13} parent=0 // loop_body
    %s19 = ssub.s32 %s14, 1
    %s20 = ssub.s32 %s14, 2
    %s21 = sadd.s32 %s14, 1
    %s22 = ssub.s32 %s14, %s21
    %p23 = scmp.eq.s32.totalorder %s22, 0
    %s25 = sadd.s32 %s24, 1
    %s26 = scalar_select %p23, %s24, %s25
    %p29 = pneg %p23
    %p30 = scmp.eq.s32.totalorder %s14, 1
    %p31 = por %p29, %p30
    %p32 = scmp.ne.s32.totalorder %s24, %s27
    %p33 = scmp.eq.s32.totalorder %s14, 0
    %p34 = por %p32, %p33
    %p35 = scmp.ne.s32.totalorder %s24, %s27
    %p36 = scmp.eq.s32.totalorder %s19, 1
    %p37 = por %p35, %p36
    %p38 = scmp.ne.s32.totalorder %s27, %s28
    %p39 = scmp.eq.s32.totalorder %s19, 0
    %p40 = por %p38, %p39
    %p41 = scmp.ne.s32.totalorder %s27, %s28
    %p42 = scmp.eq.s32.totalorder %s20, 1
    %p43 = por %p41, %p42
    %p45 = scmp.ne.s32.totalorder %s28, %s44
    %p46 = scmp.eq.s32.totalorder %s20, 0
    %p47 = por %p45, %p46
    %s49 = sadd.s32 %s48, 1
    %p52 = scmp.eq.s32.totalorder %s14, 1
    %p53 = scmp.ne.s32.totalorder %s48, %s50
    %p54 = scmp.eq.s32.totalorder %s14, 0
    %p55 = por %p53, %p54
    %p56 = scmp.ne.s32.totalorder %s48, %s50
    %p57 = scmp.eq.s32.totalorder %s19, 1
    %p58 = por %p56, %p57
    %p59 = scmp.ne.s32.totalorder %s50, %s51
    %p60 = scmp.eq.s32.totalorder %s19, 0
    %p61 = por %p59, %p60
    %p62 = scmp.ne.s32.totalorder %s50, %s51
    %p63 = scmp.eq.s32.totalorder %s20, 1
    %p64 = por %p62, %p63
    %p66 = scmp.ne.s32.totalorder %s51, %s65
    %p67 = scmp.eq.s32.totalorder %s20, 0
    %p68 = por %p66, %p67
    %s70 = sadd.s32 %s69, 1
    %p73 = scmp.eq.s32.totalorder %s14, 1
    %p74 = scmp.ne.s32.totalorder %s69, %s71
    %p75 = scmp.eq.s32.totalorder %s14, 0
    %p76 = por %p74, %p75
    %p77 = scmp.ne.s32.totalorder %s69, %s71
    %p78 = scmp.eq.s32.totalorder %s19, 1
    %p79 = por %p77, %p78
    %p80 = scmp.ne.s32.totalorder %s71, %s72
    %p81 = scmp.eq.s32.totalorder %s19, 0
    %p82 = por %p80, %p81
    %p83 = scmp.ne.s32.totalorder %s71, %s72
    %p84 = scmp.eq.s32.totalorder %s20, 1
    %p85 = por %p83, %p84
    %p87 = scmp.ne.s32.totalorder %s72, %s86
    %p88 = scmp.eq.s32.totalorder %s20, 0
    %p89 = por %p87, %p88
    %s91 = sadd.s32 %s90, 1
    %p94 = scmp.eq.s32.totalorder %s14, 1
    %p95 = scmp.ne.s32.totalorder %s90, %s92
    %p96 = scmp.eq.s32.totalorder %s14, 0
    %p97 = por %p95, %p96
    %p98 = scmp.ne.s32.totalorder %s90, %s92
    %p99 = scmp.eq.s32.totalorder %s19, 1
    %p100 = por %p98, %p99
    %p101 = scmp.ne.s32.totalorder %s92, %s93
    %p102 = scmp.eq.s32.totalorder %s19, 0
    %p103 = por %p101, %p102
    %p104 = scmp.ne.s32.totalorder %s92, %s93
    %p105 = scmp.eq.s32.totalorder %s20, 1
    %p106 = por %p104, %p105
    %p108 = scmp.ne.s32.totalorder %s93, %s107
    %p109 = scmp.eq.s32.totalorder %s20, 0
    %p110 = por %p108, %p109
    %s112 = sadd.s32 %s111, 1
    %p115 = scmp.eq.s32.totalorder %s14, 1
    %p116 = scmp.ne.s32.totalorder %s111, %s113
    %p117 = scmp.eq.s32.totalorder %s14, 0
    %p118 = por %p116, %p117
    %p119 = scmp.ne.s32.totalorder %s111, %s113
    %p120 = scmp.eq.s32.totalorder %s19, 1
    %p121 = por %p119, %p120
    %p122 = scmp.ne.s32.totalorder %s113, %s114
    %p123 = scmp.eq.s32.totalorder %s19, 0
    %p124 = por %p122, %p123
    %p125 = scmp.ne.s32.totalorder %s113, %s114
    %p126 = scmp.eq.s32.totalorder %s20, 1
    %p127 = por %p125, %p126
    %p129 = scmp.ne.s32.totalorder %s114, %s128
    %p130 = scmp.eq.s32.totalorder %s20, 0
    %p131 = por %p129, %p130
    %s132 = ssub.s32 %s14, %s21
    %p133 = scmp.eq.s32.totalorder %s132, 0
    %s135 = sadd.s32 %s134, 1
    %s136 = scalar_select %p133, %s134, %s135
    %p139 = pneg %p133
    %p140 = scmp.eq.s32.totalorder %s14, 1
    %p141 = por %p139, %p140
    %p142 = scmp.ne.s32.totalorder %s134, %s137
    %p143 = scmp.eq.s32.totalorder %s14, 0
    %p144 = por %p142, %p143
    %p145 = scmp.ne.s32.totalorder %s134, %s137
    %p146 = scmp.eq.s32.totalorder %s19, 1
    %p147 = por %p145, %p146
    %p148 = scmp.ne.s32.totalorder %s137, %s138
    %p149 = scmp.eq.s32.totalorder %s19, 0
    %p150 = por %p148, %p149
    %p151 = scmp.ne.s32.totalorder %s137, %s138
    %p152 = scmp.eq.s32.totalorder %s20, 1
    %p153 = por %p151, %p152
    %p155 = scmp.ne.s32.totalorder %s138, %s154
    %p156 = scmp.eq.s32.totalorder %s20, 0
    %p157 = por %p155, %p156
    %s158 = ssub.s32 %s14, %s21
    %p159 = scmp.eq.s32.totalorder %s158, 0
    %s161 = sadd.s32 %s160, 1
    %s162 = scalar_select %p159, %s160, %s161
    %p165 = pneg %p159
    %p166 = scmp.eq.s32.totalorder %s14, 1
    %p167 = por %p165, %p166
    %p168 = scmp.ne.s32.totalorder %s160, %s163
    %p169 = scmp.eq.s32.totalorder %s14, 0
    %p170 = por %p168, %p169
    %p171 = scmp.ne.s32.totalorder %s160, %s163
    %p172 = scmp.eq.s32.totalorder %s19, 1
    %p173 = por %p171, %p172
    %p174 = scmp.ne.s32.totalorder %s163, %s164
    %p175 = scmp.eq.s32.totalorder %s19, 0
    %p176 = por %p174, %p175
    %p177 = scmp.ne.s32.totalorder %s163, %s164
    %p178 = scmp.eq.s32.totalorder %s20, 1
    %p179 = por %p177, %p178
    %p181 = scmp.ne.s32.totalorder %s164, %s180
    %p182 = scmp.eq.s32.totalorder %s20, 0
    %p183 = por %p181, %p182
    %s184 = ssub.s32 %s14, %s21
    %p185 = scmp.eq.s32.totalorder %s184, 0
    %s187 = sadd.s32 %s186, 1
    %s188 = scalar_select %p185, %s186, %s187
    %p191 = pneg %p185
    %p192 = scmp.eq.s32.totalorder %s14, 1
    %p193 = por %p191, %p192
    %p194 = scmp.ne.s32.totalorder %s186, %s189
    %p195 = scmp.eq.s32.totalorder %s14, 0
    %p196 = por %p194, %p195
    %p197 = scmp.ne.s32.totalorder %s186, %s189
    %p198 = scmp.eq.s32.totalorder %s19, 1
    %p199 = por %p197, %p198
    %p200 = scmp.ne.s32.totalorder %s189, %s190
    %p201 = scmp.eq.s32.totalorder %s19, 0
    %p202 = por %p200, %p201
    %p203 = scmp.ne.s32.totalorder %s189, %s190
    %p204 = scmp.eq.s32.totalorder %s20, 1
    %p205 = por %p203, %p204
    %p207 = scmp.ne.s32.totalorder %s190, %s206
    %p208 = scmp.eq.s32.totalorder %s20, 0
    %p209 = por %p207, %p208
    %p210 = scmp.le.s32.totalorder 1, %s14
    %p211 = scmp.lt.s32.totalorder %s14, 3
    %p212 = pnand %p210, %p211
    %p213 = pneg %p212
    // Predicated region
    $region9: #{vit_forward.13} parent=5 // pred_check
      _
    $region10: #{vit_forward.13} parent=5 // pred_check_branch
      %215 = sbr.rel (%p212) target = $region12
    $region11: #{vit_forward.13} parent=5 // pred_region
      %s216 = ssub.s32 %s14, 1
      // Predicated region
      $region13: #{vit_forward.13} parent=11 // pred_check
        %p217 = pneg %p61
      $region14: #{vit_forward.13} parent=11 // pred_check_branch
        %219 = sbr.rel (%p217) target = $region16
      $region15: #{vit_forward.13} parent=11 // pred_region
        _
      $region16: #{vit_forward.13} parent=11 // pred_fallthru
        _
      // Predicated region
      $region17: #{vit_forward.13} parent=11 // pred_check
        %p220 = pneg %p82
      $region18: #{vit_forward.13} parent=11 // pred_check_branch
        %222 = sbr.rel (%p220) target = $region20
      $region19: #{vit_forward.13} parent=11 // pred_region
        _
      $region20: #{vit_forward.13} parent=11 // pred_fallthru
        _
      // Predicated region
      $region21: #{vit_forward.13} parent=11 // pred_check
        %p223 = pneg %p103
      $region22: #{vit_forward.13} parent=11 // pred_check_branch
        %225 = sbr.rel (%p223) target = $region24
      $region23: #{vit_forward.13} parent=11 // pred_region
        _
      $region24: #{vit_forward.13} parent=11 // pred_fallthru
        _
      // Predicated region
      $region25: #{vit_forward.13} parent=11 // pred_check
        %p226 = pneg %p124
      $region26: #{vit_forward.13} parent=11 // pred_check_branch
        %228 = sbr.rel (%p226) target = $region28
      $region27: #{vit_forward.13} parent=11 // pred_region
        _
      $region28: #{vit_forward.13} parent=11 // pred_fallthru
        _
    $region12: #{vit_forward.13} parent=5 // pred_fallthru
      _
    %p229 = scmp.lt.s32.totalorder %s14, 2
    // Predicated region
    $region29: #{vit_forward.13} parent=5 // pred_check
      %p230 = pneg %p229
    $region30: #{vit_forward.13} parent=5 // pred_check_branch
      %232 = sbr.rel (%p230) target = $region32
    $region31: #{vit_forward.13} parent=5 // pred_region
      // Predicated region
      $region33: #{vit_forward.13} parent=31 // pred_check
        %p233 = pneg %p34
      $region34: #{vit_forward.13} parent=31 // pred_check_branch
        %235 = sbr.rel (%p233) target = $region36
      $region35: #{vit_forward.13} parent=31 // pred_region
        %p236 = scmp.lt.s32.totalorder %s14, 1
        %s237 = scalar_select %p236, %s14, 1
        %s238 = smul.addr %s237, 3
        %s239 = smul.addr %s238, 8
        %s240 = scalar_lea.vmem %s0, %s239
      $region36: #{vit_forward.13} parent=31 // pred_fallthru
        _
    $region32: #{vit_forward.13} parent=5 // pred_fallthru
      _
    %p241 = scmp.le.s32.totalorder 1, %s14
    %p242 = scmp.lt.s32.totalorder %s14, 3
    %p243 = pnand %p241, %p242
    %p244 = pneg %p243
    // Predicated region
    $region37: #{vit_forward.13} parent=5 // pred_check
      _
    $region38: #{vit_forward.13} parent=5 // pred_check_branch
      %246 = sbr.rel (%p243) target = $region40
    $region39: #{vit_forward.13} parent=5 // pred_region
      %s247 = ssub.s32 %s14, 1
      %p248 = scmp.lt.s32.totalorder %s19, 1
      %s249 = scalar_select %p248, %s19, 1
      %s250 = smul.addr %s249, 3
      %s251 = smul.addr %s250, 8
      %s252 = scalar_lea.vmem %s0, %s251
      %p253 = pneg %p40
      %p254 = pneg %p37
      %p255 = pneg %p61
      %p256 = pneg %p58
      %p257 = pneg %p82
      %p258 = pneg %p79
      %p259 = pneg %p103
      %p260 = pneg %p100
      %p261 = pneg %p124
      %p262 = pneg %p121
      %p263 = pneg %p150
      %p264 = pneg %p147
      %p265 = scmp.lt.s32.totalorder %s19, 1
      %s266 = scalar_select %p265, %s19, 1
      %s267 = smul.addr %s266, 3
      %s268 = smul.addr %s267, 4
      %s269 = scalar_lea.vmem %s5, %s268
      %p270 = pneg %p176
      %p271 = pneg %p173
      %p272 = scmp.lt.s32.totalorder %s19, 1
      %s273 = scalar_select %p272, %s19, 1
      %s274 = smul.addr %s273, 3
      %s275 = smul.addr %s274, 4
      %s276 = scalar_lea.vmem %s6, %s275
      %p277 = pneg %p202
      %p278 = pneg %p199
      %p279 = scmp.lt.s32.totalorder %s19, 1
      %s280 = scalar_select %p279, %s19, 1
      %s281 = smul.addr %s280, 3
      %s282 = smul.addr %s281, 4
      %s283 = scalar_lea.vmem %s7, %s282
      %p284 = scmp.lt.s32.totalorder %s19, 1
      %s285 = scalar_select %p284, %s19, 1
      %s286 = smul.addr %s285, 3
      %s287 = smul.addr %s286, 8
      %s288 = scalar_lea.vmem %s0, %s287
      %p289 = scmp.lt.s32.totalorder %s19, 1
      %s290 = scalar_select %p289, %s19, 1
      %s291 = smul.addr %s290, 3
      %s292 = smul.addr %s291, 4
      %s293 = scalar_lea.vmem %s5, %s292
      %p294 = scmp.lt.s32.totalorder %s19, 1
      %s295 = scalar_select %p294, %s19, 1
      %s296 = smul.addr %s295, 3
      %s297 = smul.addr %s296, 4
      %s298 = scalar_lea.vmem %s6, %s297
      %p299 = scmp.lt.s32.totalorder %s19, 1
      %s300 = scalar_select %p299, %s19, 1
      %s301 = smul.addr %s300, 3
      %s302 = smul.addr %s301, 4
      %s303 = scalar_lea.vmem %s7, %s302
      %v305 = vld [vmem:[%s288] sm:$0xff]
      %v306 = vld [vmem:[%s288 + $0x8] sm:$0xff]
      %v307 = vld [vmem:[%s288 + $0x10] sm:$0x1]
      %v308 = vld [vmem:[%s1] sm:$0x1]
      %v309 = vld [vmem:[%s2] sm:$0x1]
      %vm310 = vcmask 523264
      %v311 = vsel %vm310, %v305, 0.0
      %312 = vadd.xlane.f32.xlu0 %v311
      %v313 = vpop.xlane.xlu0 %312
      %v314 = vsel %vm310, %v306, 0.0
      %315 = vadd.xlane.f32.xlu0 %v314
      %v316 = vpop.xlane.xlu0 %315
      %vm317 = vcmask 516096
      %v318 = vsel %vm317, %v307, 0.0
      %319 = vadd.xlane.f32.xlu0 %v318
      %v320 = vpop.xlane.xlu0 %319
      %v321 = vrcp.pop 64.0
      %v322 = vmul.f32 %v313, %v321
      %v323 = vmul.f32 %v316, %v321
      %v324 = vmul.f32 %v320, %v321
      %v325 = vsub.f32 %v305, %v322
      %v326 = vsub.f32 %v306, %v323
      %v327 = vsub.f32 %v307, %v324
      %v328 = vmul.f32 %v325, %v325
      %v329 = vmul.f32 %v326, %v326
      %v330 = vmul.f32 %v327, %v327
      %v331 = vsel %vm310, %v328, 0.0
      %332 = vadd.xlane.f32.xlu0 %v331
      %v333 = vpop.xlane.xlu0 %332
      %v334 = vsel %vm310, %v329, 0.0
      %335 = vadd.xlane.f32.xlu0 %v334
      %v336 = vpop.xlane.xlu0 %335
      %v337 = vsel %vm317, %v330, 0.0
      %338 = vadd.xlane.f32.xlu0 %v337
      %v339 = vpop.xlane.xlu0 %338
      %v340 = vmul.f32 %v333, %v321
      %v341 = vmul.f32 %v336, %v321
      %v342 = vmul.f32 %v339, %v321
      %v343 = vadd.f32 %v340, 1e-06
      %v344 = vadd.f32 %v341, 1e-06
      %v345 = vadd.f32 %v342, 1e-06
      %v346 = vrsqrt.pop %v343
      %v347 = vrsqrt.pop %v344
      %v348 = vrsqrt.pop %v345
      %v349 = vmul.f32 %v325, %v346
      %v350 = vmul.f32 %v326, %v347
      %v351 = vmul.f32 %v327, %v348
      %v353 = vlaneseq
      %v354 = vshrl.u32 %v353, 7
      %v355 = vsub.s32 0, %v354
      %v356 = vrot.slane %v308, %v355
      %v358 = vmul.f32 %v349, %v356
      %v359 = vmul.f32 %v350, %v356
      %v360 = vmul.f32 %v351, %v356
      %v362 = vlaneseq
      %v363 = vshrl.u32 %v362, 7
      %v364 = vsub.s32 0, %v363
      %v365 = vrot.slane %v309, %v364
      %v367 = vadd.f32 %v358, %v365
      %v368 = vadd.f32 %v359, %v365
      %v369 = vadd.f32 %v360, %v365
      %v370 = vpack.c.bf16 %v368, %v367
      %v371 = vpack.c.bf16 %v369, %v369
      %v372 = vld [vmem:[%s3] sm:$0xff]
      %v373 = vld [vmem:[%s3 + $0x8] sm:$0xff]
      %v374 = vld [vmem:[%s3 + $0x10] sm:$0xff]
      %v375 = vld [vmem:[%s3 + $0x18] sm:$0xff]
      %v376 = vld [vmem:[%s3 + $0x20] sm:$0xff]
      %v377 = vld [vmem:[%s3 + $0x28] sm:$0xff]
      %v378 = vld [vmem:[%s3 + $0x30] sm:$0xff]
      %v379 = vld [vmem:[%s3 + $0x38] sm:$0xff]
      %v380 = vld [vmem:[%s4] sm:$0x3]
      %v382 = vlaneseq
      %v383 = vshrl.u32 %v382, 7
      %v384 = vsub.s32 0, %v383
      %v385 = vrot.slane %v380, %v384
      %v386 = vlaneseq
      %v387 = vshrl.u32 %v386, 7
      %v388 = vsub.s32 1, %v387
      %v389 = vrot.slane %v380, %v388
      %v400 = vunpack.c.l.b16 %v372
      %v401 = vunpack.c.h.b16 %v372
      %v402 = vunpack.c.l.b16 %v373
      %v403 = vunpack.c.h.b16 %v373
      %v404 = vunpack.c.l.b16 %v374
      %v405 = vunpack.c.h.b16 %v374
      %v406 = vunpack.c.l.b16 %v375
      %v407 = vunpack.c.h.b16 %v375
      %v408 = vunpack.c.l.b16 %v376
      %v409 = vunpack.c.h.b16 %v376
      %v410 = vunpack.c.l.b16 %v377
      %v411 = vunpack.c.h.b16 %v377
      %v412 = vunpack.c.l.b16 %v378
      %v413 = vunpack.c.h.b16 %v378
      %v414 = vunpack.c.l.b16 %v379
      %v415 = vunpack.c.h.b16 %v379
      %v416 = vpack.c.b16 %v402, %v400
      %v417 = vpack.c.b16 %v403, %v401
      %v418 = vpack.c.b16 %v406, %v404
      %v419 = vpack.c.b16 %v407, %v405
      %v420 = vpack.c.b16 %v410, %v408
      %v421 = vpack.c.b16 %v411, %v409
      %v422 = vpack.c.b16 %v414, %v412
      %v423 = vpack.c.b16 %v415, %v413
      %v433 = vsel %vm310, %v370, 0
      %v436 = vsel %vm310, %v371, 0
      %438 = vmatprep.subr.bf16.mxu0 0
      %439 = vmatpush1.bf16.msra.mxu0 0
      %440 = vmatprep.subr.bf16.mxu0 0
      %441 = vmatpush1.bf16.msra.mxu0 0
      %442 = vmatprep.subr.bf16.mxu0 0
      %443 = vmatpush1.bf16.msra.mxu0 0
      %444 = vmatprep.subr.bf16.mxu0 0
      %445 = vmatpush1.bf16.msra.mxu0 0
      %446 = vmatprep.subr.bf16.mxu0 %v423
      %447 = vmatpush1.bf16.msra.mxu0 %v422
      %448 = vmatprep.subr.bf16.mxu0 %v421
      %449 = vmatpush1.bf16.msra.mxu0 %v420
      %450 = vmatprep.subr.bf16.mxu0 %v419
      %451 = vmatpush1.bf16.msra.mxu0 %v418
      %452 = vmatprep.subr.bf16.mxu0 %v417
      %453 = vmatpush1.bf16.msra.mxu0 %v416
      %454 = vmatprep.subr.bf16.mxu0 0
      %455 = vmatpush2.bf16.msra.mxu0 0
      %456 = vmatprep.subr.bf16.mxu0 0
      %457 = vmatpush2.bf16.msra.mxu0 0
      %458 = vmatprep.subr.bf16.mxu0 0
      %459 = vmatpush2.bf16.msra.mxu0 0
      %460 = vmatprep.subr.bf16.mxu0 0
      %461 = vmatpush2.bf16.msra.mxu0 0
      %462 = vmatprep.subr.bf16.mxu0 0
      %463 = vmatpush2.bf16.msra.mxu0 0
      %464 = vmatprep.subr.bf16.mxu0 0
      %465 = vmatpush2.bf16.msra.mxu0 0
      %466 = vmatprep.subr.bf16.mxu0 0
      %467 = vmatpush2.bf16.msra.mxu0 0
      %468 = vmatprep.subr.bf16.mxu0 0
      %469 = vmatpush2.bf16.msra.mxu0 0
      %470 = vmatprep.mubr.bf16.mxu0 0
      %471 = vmatmul.mubr.bf16.gmra.mxu0 %v433
      %v472 = vpop.f32.mrf.mxu0
      %v473 = vadd.f32 %v385, %v472
      %v474 = vpop.f32.mrf.mxu0
      %v475 = vadd.f32 %v389, %v474
      %v476 = vpop.f32.mrf.mxu0
      %v477 = vadd.f32 %v385, %v476
      %v478 = vpop.f32.mrf.mxu0
      %v479 = vadd.f32 %v389, %v478
      %480 = vmatprep.mubr.bf16.mxu0 0
      %481 = vmatmul.mubr.bf16.gmra.mxu0 %v436
      %v482 = vpop.f32.mrf.mxu0
      %v483 = vadd.f32 %v385, %v482
      %v484 = vpop.f32.mrf.mxu0
      %v485 = vadd.f32 %v389, %v484
      %v486 = vpop.f32.mrf.mxu0
      %v487 = vpop.f32.mrf.mxu0
      %488 = vdwg.mxu0
      %v489 = vpack.c.bf16 %v477, %v473
      %v490 = vpack.c.bf16 %v483, %v483
      %v493 = vunpack.c.l.b16 %v489
      %v494 = vunpack.c.h.b16 %v489
      %v495 = vunpack.c.l.b16 %v490
      %v496 = vpack.c.b16 %v493, %v493
      %v497 = vpack.c.b16 %v494, %v494
      %v498 = vpack.c.b16 %v495, %v495
      %vm502 = vcmask 519168
      %503 = vst.msk [vmem:[%s293] sm:$0xf] %vm502, %v496
      %504 = vst.msk [vmem:[%s293 + $0x4] sm:$0xf] %vm502, %v497
      %vm505 = vcmask 516096
      %vm506 = vsmask.f32 256
      %vm507 = vmand %vm505, %vm506
      %v508 = vld [vmem:[%s293 + $0x8] sm:$0x1]
      %v509 = vsel %vm507, %v498, %v508
      %510 = vst [vmem:[%s293 + $0x8] sm:$0x1] %v509
      %511 = vrot.lane.b32.xlu0 %v496, 64
      %v512 = vpop.permute.xlu0 %511
      %513 = vrot.lane.b32.xlu0 %v497, 64
      %v514 = vpop.permute.xlu0 %513
      %515 = vrot.lane.b32.xlu0 %v498, 64
      %v516 = vpop.permute.xlu0 %515
      %520 = vst.msk [vmem:[%s298] sm:$0xf] %vm502, %v512
      %521 = vst.msk [vmem:[%s298 + $0x4] sm:$0xf] %vm502, %v514
      %v522 = vld [vmem:[%s298 + $0x8] sm:$0x1]
      %v523 = vsel %vm507, %v516, %v522
      %524 = vst [vmem:[%s298 + $0x8] sm:$0x1] %v523
      %v525 = vpack.c.bf16 %v479, %v475
      %v526 = vpack.c.bf16 %v485, %v485
      %v529 = vunpack.c.l.b16 %v525
      %v530 = vunpack.c.h.b16 %v525
      %v531 = vunpack.c.l.b16 %v526
      %v532 = vpack.c.b16 %v529, %v529
      %v533 = vpack.c.b16 %v530, %v530
      %v534 = vpack.c.b16 %v531, %v531
      %538 = vst.msk [vmem:[%s303] sm:$0xf] %vm502, %v532
      %539 = vst.msk [vmem:[%s303 + $0x4] sm:$0xf] %vm502, %v533
      %v540 = vld [vmem:[%s303 + $0x8] sm:$0x1]
      %v541 = vsel %vm507, %v534, %v540
      %542 = vst [vmem:[%s303 + $0x8] sm:$0x1] %v541
      %p543 = scmp.lt.s32.totalorder %s19, 1
      %s544 = scalar_select %p543, %s19, 1
      %s545 = smul.addr %s544, 3
      %s546 = smul.addr %s545, 4
      %s547 = scalar_lea.vmem %s5, %s546
      %p548 = scmp.lt.s32.totalorder %s19, 1
      %s549 = scalar_select %p548, %s19, 1
      %s550 = smul.addr %s549, 3
      %s551 = smul.addr %s550, 4
      %s552 = scalar_lea.vmem %s6, %s551
      %p553 = scmp.lt.s32.totalorder %s19, 1
      %s554 = scalar_select %p553, %s19, 1
      %s555 = smul.addr %s554, 3
      %s556 = smul.addr %s555, 4
      %s557 = scalar_lea.vmem %s7, %s556
      // Predicated region
      $region41: #{vit_forward.13} parent=39 // pred_check
        %p558 = pneg %p147
      $region42: #{vit_forward.13} parent=39 // pred_check_branch
        %560 = sbr.rel (%p558) target = $region44
      $region43: #{vit_forward.13} parent=39 // pred_region
        _
      $region44: #{vit_forward.13} parent=39 // pred_fallthru
        _
      // Predicated region
      $region45: #{vit_forward.13} parent=39 // pred_check
        %p561 = pneg %p173
      $region46: #{vit_forward.13} parent=39 // pred_check_branch
        %563 = sbr.rel (%p561) target = $region48
      $region47: #{vit_forward.13} parent=39 // pred_region
        _
      $region48: #{vit_forward.13} parent=39 // pred_fallthru
        _
      // Predicated region
      $region49: #{vit_forward.13} parent=39 // pred_check
        %p564 = pneg %p199
      $region50: #{vit_forward.13} parent=39 // pred_check_branch
        %566 = sbr.rel (%p564) target = $region52
      $region51: #{vit_forward.13} parent=39 // pred_region
        _
      $region52: #{vit_forward.13} parent=39 // pred_fallthru
        _
    $region40: #{vit_forward.13} parent=5 // pred_fallthru
      _
    %p567 = scmp.le.s32.totalorder 2, %s14
    // Predicated region
    $region53: #{vit_forward.13} parent=5 // pred_check
      %p568 = pneg %p567
    $region54: #{vit_forward.13} parent=5 // pred_check_branch
      %570 = sbr.rel (%p568) target = $region56
    $region55: #{vit_forward.13} parent=5 // pred_region
      %s571 = ssub.s32 %s14, 2
      // Predicated region
      $region57: #{vit_forward.13} parent=55 // pred_check
        %p572 = pneg %p153
      $region58: #{vit_forward.13} parent=55 // pred_check_branch
        %574 = sbr.rel (%p572) target = $region60
      $region59: #{vit_forward.13} parent=55 // pred_region
        %p575 = scmp.lt.s32.totalorder %s20, 1
        %s576 = scalar_select %p575, %s20, 1
        %s577 = smul.addr %s576, 3
        %s578 = smul.addr %s577, 4
        %s579 = scalar_lea.vmem %s5, %s578
      $region60: #{vit_forward.13} parent=55 // pred_fallthru
        _
      // Predicated region
      $region61: #{vit_forward.13} parent=55 // pred_check
        %p580 = pneg %p179
      $region62: #{vit_forward.13} parent=55 // pred_check_branch
        %582 = sbr.rel (%p580) target = $region64
      $region63: #{vit_forward.13} parent=55 // pred_region
        %p583 = scmp.lt.s32.totalorder %s20, 1
        %s584 = scalar_select %p583, %s20, 1
        %s585 = smul.addr %s584, 3
        %s586 = smul.addr %s585, 4
        %s587 = scalar_lea.vmem %s6, %s586
      $region64: #{vit_forward.13} parent=55 // pred_fallthru
        _
      // Predicated region
      $region65: #{vit_forward.13} parent=55 // pred_check
        %p588 = pneg %p205
      $region66: #{vit_forward.13} parent=55 // pred_check_branch
        %590 = sbr.rel (%p588) target = $region68
      $region67: #{vit_forward.13} parent=55 // pred_region
        %p591 = scmp.lt.s32.totalorder %s20, 1
        %s592 = scalar_select %p591, %s20, 1
        %s593 = smul.addr %s592, 3
        %s594 = smul.addr %s593, 4
        %s595 = scalar_lea.vmem %s7, %s594
      $region68: #{vit_forward.13} parent=55 // pred_fallthru
        _
    $region56: #{vit_forward.13} parent=5 // pred_fallthru
      _
  $region6: #{vit_forward.13} parent=0 // loop_footer
    %s18 = sadd.s32 1, %s14
  $region7: #{vit_forward.13} parent=0 // loop_footer_branch
    %13 = sbr.rel target = $region3
  $region8: #{vit_forward.13} parent=0 // loop_exit
    _

// kernel: vit_forward.14
$region0: #{vit_forward.14}
  #allocation0 [shape = 'u32[]', space=smem, size = 0x4, offset = 0x4, fixed_abs, tag = 'smem constant byte address 0x4 - core index']
  #allocation1 [shape = 'u32[144,128]{1,0:T(1,128)}', space=vmem, size = 0x12000, scoped, tag = 'internal scratch']
  %s0 = inlined_call_operand.vmem [shape: bf16[2,17,64], index: 0, kind: input, shape index: {}]
  %s1 = inlined_call_operand.vmem [shape: bf16[2,17,64], index: 1, kind: input, shape index: {}]
  %s2 = inlined_call_operand.vmem [shape: bf16[2,17,64], index: 2, kind: input, shape index: {}]
  %s3 = inlined_call_operand.vmem [shape: bf16[2,17,64], index: 3, kind: output, shape index: {}]
  %s4 = sld [smem:[#allocation0]]
  $region45: #{vit_forward.14} parent=0
    _
  %s6 = ssub.s32 1, %s4
  %s7 = scalar_select 0, %s6, %s4
  loop: start=0, step=1, limit=4
  $region2: #{vit_forward.14} parent=0 // loop_pre_header
    _
  $region3: #{vit_forward.14} parent=0 // loop_header
    %s9 = sphi 0, %s13
    %p10 = scmp.ge.s32.totalorder %s9, 4
    %s19 = sphi 0, %s21
    %s22 = sphi 0, %s19
    %s23 = sphi 0, %s22
    %s39 = sphi 0, %s23
    %s45 = sphi 0, %s47
    %s48 = sphi 0, %s45
    %s49 = sphi 0, %s48
    %s65 = sphi 0, %s49
    %s71 = sphi 0, %s73
    %s74 = sphi 0, %s71
    %s75 = sphi 0, %s74
    %s91 = sphi 0, %s75
    %s97 = sphi 0, %s99
    %s100 = sphi 0, %s97
    %s101 = sphi 0, %s100
    %s117 = sphi 0, %s101
  $region4: #{vit_forward.14} parent=0 // loop_header_branch
    %12 = sbr.rel (%p10) target = $region8
  $region5: #{vit_forward.14} parent=0 // loop_body
    %s14 = ssub.s32 %s9, 1
    %s15 = ssub.s32 %s9, 2
    %s16 = sadd.s32 %s9, 1
    %s17 = ssub.s32 %s9, %s16
    %p18 = scmp.eq.s32.totalorder %s17, 0
    %s20 = sadd.s32 %s19, 1
    %s21 = scalar_select %p18, %s19, %s20
    %p24 = pneg %p18
    %p25 = scmp.eq.s32.totalorder %s9, 1
    %p26 = por %p24, %p25
    %p27 = scmp.ne.s32.totalorder %s19, %s22
    %p28 = scmp.eq.s32.totalorder %s9, 0
    %p29 = por %p27, %p28
    %p30 = scmp.ne.s32.totalorder %s19, %s22
    %p31 = scmp.eq.s32.totalorder %s14, 1
    %p32 = por %p30, %p31
    %p33 = scmp.ne.s32.totalorder %s22, %s23
    %p34 = scmp.eq.s32.totalorder %s14, 0
    %p35 = por %p33, %p34
    %p36 = scmp.ne.s32.totalorder %s22, %s23
    %p37 = scmp.eq.s32.totalorder %s15, 1
    %p38 = por %p36, %p37
    %p40 = scmp.ne.s32.totalorder %s23, %s39
    %p41 = scmp.eq.s32.totalorder %s15, 0
    %p42 = por %p40, %p41
    %s43 = ssub.s32 %s9, %s16
    %p44 = scmp.eq.s32.totalorder %s43, 0
    %s46 = sadd.s32 %s45, 1
    %s47 = scalar_select %p44, %s45, %s46
    %p50 = pneg %p44
    %p51 = scmp.eq.s32.totalorder %s9, 1
    %p52 = por %p50, %p51
    %p53 = scmp.ne.s32.totalorder %s45, %s48
    %p54 = scmp.eq.s32.totalorder %s9, 0
    %p55 = por %p53, %p54
    %p56 = scmp.ne.s32.totalorder %s45, %s48
    %p57 = scmp.eq.s32.totalorder %s14, 1
    %p58 = por %p56, %p57
    %p59 = scmp.ne.s32.totalorder %s48, %s49
    %p60 = scmp.eq.s32.totalorder %s14, 0
    %p61 = por %p59, %p60
    %p62 = scmp.ne.s32.totalorder %s48, %s49
    %p63 = scmp.eq.s32.totalorder %s15, 1
    %p64 = por %p62, %p63
    %p66 = scmp.ne.s32.totalorder %s49, %s65
    %p67 = scmp.eq.s32.totalorder %s15, 0
    %p68 = por %p66, %p67
    %s69 = ssub.s32 %s9, %s16
    %p70 = scmp.eq.s32.totalorder %s69, 0
    %s72 = sadd.s32 %s71, 1
    %s73 = scalar_select %p70, %s71, %s72
    %p76 = pneg %p70
    %p77 = scmp.eq.s32.totalorder %s9, 1
    %p78 = por %p76, %p77
    %p79 = scmp.ne.s32.totalorder %s71, %s74
    %p80 = scmp.eq.s32.totalorder %s9, 0
    %p81 = por %p79, %p80
    %p82 = scmp.ne.s32.totalorder %s71, %s74
    %p83 = scmp.eq.s32.totalorder %s14, 1
    %p84 = por %p82, %p83
    %p85 = scmp.ne.s32.totalorder %s74, %s75
    %p86 = scmp.eq.s32.totalorder %s14, 0
    %p87 = por %p85, %p86
    %p88 = scmp.ne.s32.totalorder %s74, %s75
    %p89 = scmp.eq.s32.totalorder %s15, 1
    %p90 = por %p88, %p89
    %p92 = scmp.ne.s32.totalorder %s75, %s91
    %p93 = scmp.eq.s32.totalorder %s15, 0
    %p94 = por %p92, %p93
    %s95 = ssub.s32 %s9, %s16
    %p96 = scmp.eq.s32.totalorder %s95, 0
    %s98 = sadd.s32 %s97, 1
    %s99 = scalar_select %p96, %s97, %s98
    %p102 = pneg %p96
    %p103 = scmp.eq.s32.totalorder %s9, 1
    %p104 = por %p102, %p103
    %p105 = scmp.ne.s32.totalorder %s97, %s100
    %p106 = scmp.eq.s32.totalorder %s9, 0
    %p107 = por %p105, %p106
    %p108 = scmp.ne.s32.totalorder %s97, %s100
    %p109 = scmp.eq.s32.totalorder %s14, 1
    %p110 = por %p108, %p109
    %p111 = scmp.ne.s32.totalorder %s100, %s101
    %p112 = scmp.eq.s32.totalorder %s14, 0
    %p113 = por %p111, %p112
    %p114 = scmp.ne.s32.totalorder %s100, %s101
    %p115 = scmp.eq.s32.totalorder %s15, 1
    %p116 = por %p114, %p115
    %p118 = scmp.ne.s32.totalorder %s101, %s117
    %p119 = scmp.eq.s32.totalorder %s15, 0
    %p120 = por %p118, %p119
    %p121 = scmp.le.s32.totalorder 1, %s9
    %p122 = scmp.lt.s32.totalorder %s9, 3
    %p123 = pnand %p121, %p122
    %p124 = pneg %p123
    // Predicated region
    $region9: #{vit_forward.14} parent=5 // pred_check
      _
    $region10: #{vit_forward.14} parent=5 // pred_check_branch
      %126 = sbr.rel (%p123) target = $region12
    $region11: #{vit_forward.14} parent=5 // pred_region
      %s127 = ssub.s32 %s9, 1
    $region12: #{vit_forward.14} parent=5 // pred_fallthru
      _
    %p128 = scmp.lt.s32.totalorder %s9, 2
    // Predicated region
    $region13: #{vit_forward.14} parent=5 // pred_check
      %p129 = pneg %p128
    $region14: #{vit_forward.14} parent=5 // pred_check_branch
      %131 = sbr.rel (%p129) target = $region16
    $region15: #{vit_forward.14} parent=5 // pred_region
      // Predicated region
      $region17: #{vit_forward.14} parent=15 // pred_check
        %p132 = pneg %p29
      $region18: #{vit_forward.14} parent=15 // pred_check_branch
        %134 = sbr.rel (%p132) target = $region20
      $region19: #{vit_forward.14} parent=15 // pred_region
        %p135 = scmp.lt.s32.totalorder %s9, 1
        %s136 = scalar_select %p135, %s9, 1
        %s137 = smul.addr %s136, 3
        %s138 = smul.addr %s137, 4
        %s139 = scalar_lea.vmem %s0, %s138
      $region20: #{vit_forward.14} parent=15 // pred_fallthru
        _
      // Predicated region
      $region21: #{vit_forward.14} parent=15 // pred_check
        %p140 = pneg %p55
      $region22: #{vit_forward.14} parent=15 // pred_check_branch
        %142 = sbr.rel (%p140) target = $region24
      $region23: #{vit_forward.14} parent=15 // pred_region
        %p143 = scmp.lt.s32.totalorder %s9, 1
        %s144 = scalar_select %p143, %s9, 1
        %s145 = smul.addr %s144, 3
        %s146 = smul.addr %s145, 4
        %s147 = scalar_lea.vmem %s1, %s146
      $region24: #{vit_forward.14} parent=15 // pred_fallthru
        _
      // Predicated region
      $region25: #{vit_forward.14} parent=15 // pred_check
        %p148 = pneg %p81
      $region26: #{vit_forward.14} parent=15 // pred_check_branch
        %150 = sbr.rel (%p148) target = $region28
      $region27: #{vit_forward.14} parent=15 // pred_region
        %p151 = scmp.lt.s32.totalorder %s9, 1
        %s152 = scalar_select %p151, %s9, 1
        %s153 = smul.addr %s152, 3
        %s154 = smul.addr %s153, 4
        %s155 = scalar_lea.vmem %s2, %s154
      $region28: #{vit_forward.14} parent=15 // pred_fallthru
        _
    $region16: #{vit_forward.14} parent=5 // pred_fallthru
      _
    %p156 = scmp.le.s32.totalorder 1, %s9
    %p157 = scmp.lt.s32.totalorder %s9, 3
    %p158 = pnand %p156, %p157
    %p159 = pneg %p158
    // Predicated region
    $region29: #{vit_forward.14} parent=5 // pred_check
      _
    $region30: #{vit_forward.14} parent=5 // pred_check_branch
      %161 = sbr.rel (%p158) target = $region32
    $region31: #{vit_forward.14} parent=5 // pred_region
      %s162 = ssub.s32 %s9, 1
      %p163 = scmp.lt.s32.totalorder %s14, 1
      %s164 = scalar_select %p163, %s14, 1
      %s165 = smul.addr %s164, 3
      %s166 = smul.addr %s165, 4
      %s167 = scalar_lea.vmem %s0, %s166
      %p168 = pneg %p35
      %p169 = pneg %p32
      %p170 = scmp.lt.s32.totalorder %s14, 1
      %s171 = scalar_select %p170, %s14, 1
      %s172 = smul.addr %s171, 3
      %s173 = smul.addr %s172, 4
      %s174 = scalar_lea.vmem %s1, %s173
      %p175 = pneg %p61
      %p176 = pneg %p58
      %p177 = scmp.lt.s32.totalorder %s14, 1
      %s178 = scalar_select %p177, %s14, 1
      %s179 = smul.addr %s178, 3
      %s180 = smul.addr %s179, 4
      %s181 = scalar_lea.vmem %s2, %s180
      %p182 = pneg %p87
      %p183 = pneg %p84
      %p184 = pneg %p113
      %p185 = pneg %p110
      %p186 = scmp.lt.s32.totalorder %s14, 1
      %s187 = scalar_select %p186, %s14, 1
      %s188 = smul.addr %s187, 3
      %s189 = smul.addr %s188, 4
      %s190 = scalar_lea.vmem %s3, %s189
      %p191 = scmp.lt.s32.totalorder %s14, 1
      %s192 = scalar_select %p191, %s14, 1
      %s193 = smul.addr %s192, 3
      %s194 = smul.addr %s193, 4
      %s195 = scalar_lea.vmem %s0, %s194
      %p196 = scmp.lt.s32.totalorder %s14, 1
      %s197 = scalar_select %p196, %s14, 1
      %s198 = smul.addr %s197, 3
      %s199 = smul.addr %s198, 4
      %s200 = scalar_lea.vmem %s1, %s199
      %p201 = scmp.lt.s32.totalorder %s14, 1
      %s202 = scalar_select %p201, %s14, 1
      %s203 = smul.addr %s202, 3
      %s204 = smul.addr %s203, 4
      %s205 = scalar_lea.vmem %s2, %s204
      %p206 = scmp.lt.s32.totalorder %s14, 1
      %s207 = scalar_select %p206, %s14, 1
      %s208 = smul.addr %s207, 3
      %s209 = smul.addr %s208, 4
      %s210 = scalar_lea.vmem %s3, %s209
      %v212 = vld [vmem:[%s195] sm:$0xf]
      %v213 = vld [vmem:[%s195 + $0x4] sm:$0xf]
      %v214 = vld [vmem:[%s195 + $0x8] sm:$0x1]
      %v215 = vunpack.c.l.bf16 %v212
      %v216 = vunpack.c.l.bf16 %v213
      %v217 = vunpack.c.l.bf16 %v214
      %v218 = vmul.f32 %v215, 0.25
      %v219 = vmul.f32 %v216, 0.25
      %v220 = vmul.f32 %v217, 0.25
      %v221 = vpack.c.bf16 %v219, %v218
      %v222 = vpack.c.bf16 %v220, %v220
      %v223 = vld [vmem:[%s200] sm:$0xf]
      %v224 = vld [vmem:[%s200 + $0x4] sm:$0xf]
      %v225 = vld [vmem:[%s200 + $0x8] sm:$0x1]
      %v226 = vld [vmem:[%s205] sm:$0xf]
      %v227 = vld [vmem:[%s205 + $0x4] sm:$0xf]
      %v228 = vld [vmem:[%s205 + $0x8] sm:$0x1]
      %v232 = vunpack.c.l.b16 %v223
      %v233 = vunpack.c.l.b16 %v224
      %v234 = vunpack.c.l.b16 %v225
      %v235 = vpack.c.b16 %v233, %v232
      %v236 = vpack.c.b16 %v234, %v234
      %vm237 = vcmask 130048
      %v239 = vsel %vm237, %v221, 0
      %v242 = vsel %vm237, %v222, 0
      %v245 = vsel %vm237, %v235, 0
      %v248 = vsel %vm237, %v236, 0
      %250 = vmatprep.subr.bf16.mxu0 0
      %251 = vmatpush1.bf16.xpose.msra.mxu0 0
      %252 = vmatprep.subr.bf16.mxu0 0
      %253 = vmatpush1.bf16.xpose.msra.mxu0 0
      %254 = vmatprep.subr.bf16.mxu0 0
      %255 = vmatpush1.bf16.xpose.msra.mxu0 0
      %256 = vmatprep.subr.bf16.mxu0 0
      %257 = vmatpush1.bf16.xpose.msra.mxu0 0
      %258 = vmatprep.subr.bf16.mxu0 0
      %259 = vmatpush1.bf16.xpose.msra.mxu0 0
      %260 = vmatprep.subr.bf16.mxu0 0
      %261 = vmatpush1.bf16.xpose.msra.mxu0 0
      %262 = vmatprep.subr.bf16.mxu0 0
      %263 = vmatpush1.bf16.xpose.msra.mxu0 %v248
      %264 = vmatprep.subr.bf16.mxu0 0
      %265 = vmatpush1.bf16.xpose.msra.mxu0 %v245
      %266 = vmatprep.subr.bf16.mxu0 0
      %267 = vmatpush2.bf16.xpose.msra.mxu0 0
      %268 = vmatprep.subr.bf16.mxu0 0
      %269 = vmatpush2.bf16.xpose.msra.mxu0 0
      %270 = vmatprep.subr.bf16.mxu0 0
      %271 = vmatpush2.bf16.xpose.msra.mxu0 0
      %272 = vmatprep.subr.bf16.mxu0 0
      %273 = vmatpush2.bf16.xpose.msra.mxu0 0
      %274 = vmatprep.subr.bf16.mxu0 0
      %275 = vmatpush2.bf16.xpose.msra.mxu0 0
      %276 = vmatprep.subr.bf16.mxu0 0
      %277 = vmatpush2.bf16.xpose.msra.mxu0 0
      %278 = vmatprep.subr.bf16.mxu0 0
      %279 = vmatpush2.bf16.xpose.msra.mxu0 0
      %280 = vmatprep.subr.bf16.mxu0 0
      %281 = vmatpush2.bf16.xpose.msra.mxu0 0
      %282 = vmatprep.mubr.bf16.mxu0 0
      %283 = vmatmul.mubr.bf16.gmra.mxu0 %v239
      %v284 = vpop.f32.mrf.mxu0
      %v285 = vadd.f32 0.0, %v284
      %v286 = vpop.f32.mrf.mxu0
      %v287 = vpop.f32.mrf.mxu0
      %v288 = vadd.f32 0.0, %v287
      %v289 = vpop.f32.mrf.mxu0
      %290 = vmatprep.mubr.bf16.mxu0 0
      %291 = vmatmul.mubr.bf16.gmra.mxu0 %v242
      %v292 = vpop.f32.mrf.mxu0
      %v293 = vadd.f32 0.0, %v292
      %v294 = vpop.f32.mrf.mxu0
      %v295 = vpop.f32.mrf.mxu0
      %v296 = vpop.f32.mrf.mxu0
      %297 = vdwg.mxu0
      %vm298 = vcmask 138240
      %v299 = vsel %vm298, %v285, -inf
      %300 = vmax.xlane.f32.xlu0 %v299
      %v301 = vpop.xlane.xlu0 %300
      %v302 = vsel %vm298, %v288, -inf
      %303 = vmax.xlane.f32.xlu0 %v302
      %v304 = vpop.xlane.xlu0 %303
      %vm305 = vcmask 131072
      %v306 = vsel %vm305, %v293, -inf
      %307 = vmax.xlane.f32.xlu0 %v306
      %v308 = vpop.xlane.xlu0 %307
      %v309 = vsub.f32 %v285, %v301
      %v310 = vsub.f32 %v288, %v304
      %v311 = vsub.f32 %v293, %v308
      %v312 = vmul.f32 %v309, 1.442695
      %v313 = vpow.pop %v312
      %v314 = vmul.f32 %v310, 1.442695
      %v315 = vpow.pop %v314
      %v316 = vmul.f32 %v311, 1.442695
      %v317 = vpow.pop %v316
      %v318 = vsel %vm298, %v313, 0.0
      %319 = vadd.xlane.f32.xlu0 %v318
      %v320 = vpop.xlane.xlu0 %319
      %v321 = vsel %vm298, %v315, 0.0
      %322 = vadd.xlane.f32.xlu0 %v321
      %v323 = vpop.xlane.xlu0 %322
      %v324 = vsel %vm305, %v317, 0.0
      %325 = vadd.xlane.f32.xlu0 %v324
      %v326 = vpop.xlane.xlu0 %325
      %v327 = vrcp.pop %v320
      %v328 = vrcp.pop %v323
      %v329 = vrcp.pop %v326
      %v330 = vmul.f32 %v313, %v327
      %v331 = vmul.f32 %v315, %v328
      %v332 = vmul.f32 %v317, %v329
      %v333 = vpack.c.bf16 %v331, %v330
      %v334 = vpack.c.bf16 %v332, %v332
      %v338 = vunpack.c.l.b16 %v226
      %v339 = vunpack.c.l.b16 %v227
      %v340 = vunpack.c.l.b16 %v228
      %v341 = vpack.c.b16 %v339, %v338
      %v342 = vpack.c.b16 %v340, %v340
      %v345 = vsel %vm298, %v333, 0
      %v348 = vsel %vm298, %v334, 0
      %vm350 = vcmask 1040384
      %v351 = vsel 0, 4294967295, 65535
      %v352 = vsel %vm350, %v351, 0
      %v354 = vand.u32 %v342, %v352
      %356 = vmatprep.subr.bf16.mxu0 0
      %357 = vmatpush1.bf16.msra.mxu0 0
      %358 = vmatprep.subr.bf16.mxu0 0
      %359 = vmatpush1.bf16.msra.mxu0 0
      %360 = vmatprep.subr.bf16.mxu0 0
      %361 = vmatpush1.bf16.msra.mxu0 0
      %362 = vmatprep.subr.bf16.mxu0 0
      %363 = vmatpush1.bf16.msra.mxu0 0
      %364 = vmatprep.subr.bf16.mxu0 0
      %365 = vmatpush1.bf16.msra.mxu0 0
      %366 = vmatprep.subr.bf16.mxu0 0
      %367 = vmatpush1.bf16.msra.mxu0 0
      %368 = vmatprep.subr.bf16.mxu0 0
      %369 = vmatpush1.bf16.msra.mxu0 %v354
      %370 = vmatprep.subr.bf16.mxu0 0
      %371 = vmatpush1.bf16.msra.mxu0 %v341
      %372 = vmatprep.subr.bf16.mxu0 0
      %373 = vmatpush2.bf16.msra.mxu0 0
      %374 = vmatprep.subr.bf16.mxu0 0
      %375 = vmatpush2.bf16.msra.mxu0 0
      %376 = vmatprep.subr.bf16.mxu0 0
      %377 = vmatpush2.bf16.msra.mxu0 0
      %378 = vmatprep.subr.bf16.mxu0 0
      %379 = vmatpush2.bf16.msra.mxu0 0
      %380 = vmatprep.subr.bf16.mxu0 0
      %381 = vmatpush2.bf16.msra.mxu0 0
      %382 = vmatprep.subr.bf16.mxu0 0
      %383 = vmatpush2.bf16.msra.mxu0 0
      %384 = vmatprep.subr.bf16.mxu0 0
      %385 = vmatpush2.bf16.msra.mxu0 0
      %386 = vmatprep.subr.bf16.mxu0 0
      %387 = vmatpush2.bf16.msra.mxu0 0
      %388 = vmatprep.mubr.bf16.mxu0 0
      %389 = vmatmul.mubr.bf16.gmra.mxu0 %v345
      %v390 = vpop.f32.mrf.mxu0
      %v391 = vadd.f32 0.0, %v390
      %v392 = vpop.f32.mrf.mxu0
      %v393 = vpop.f32.mrf.mxu0
      %v394 = vadd.f32 0.0, %v393
      %v395 = vpop.f32.mrf.mxu0
      %396 = vmatprep.mubr.bf16.mxu0 0
      %397 = vmatmul.mubr.bf16.gmra.mxu0 %v348
      %v398 = vpop.f32.mrf.mxu0
      %v399 = vadd.f32 0.0, %v398
      %v400 = vpop.f32.mrf.mxu0
      %v401 = vpop.f32.mrf.mxu0
      %v402 = vpop.f32.mrf.mxu0
      %403 = vdwg.mxu0
      %v404 = vpack.c.bf16 %v394, %v391
      %v405 = vpack.c.bf16 %v399, %v399
      %v408 = vunpack.c.l.b16 %v404
      %v409 = vunpack.c.h.b16 %v404
      %v410 = vunpack.c.l.b16 %v405
      %v411 = vpack.c.b16 %v408, %v408
      %v412 = vpack.c.b16 %v409, %v409
      %v413 = vpack.c.b16 %v410, %v410
      %vm417 = vcmask 125952
      %418 = vst.msk [vmem:[%s210] sm:$0xf] %vm417, %v411
      %419 = vst.msk [vmem:[%s210 + $0x4] sm:$0xf] %vm417, %v412
      %vm420 = vcmask 122880
      %vm421 = vsmask.f32 256
      %vm422 = vmand %vm420, %vm421
      %v423 = vld [vmem:[%s210 + $0x8] sm:$0x1]
      %v424 = vsel %vm422, %v413, %v423
      %425 = vst [vmem:[%s210 + $0x8] sm:$0x1] %v424
      %428 = vrot.lane.b32.xlu0 %v221, 112
      %v429 = vpop.permute.xlu0 %428
      %430 = vrot.lane.b32.xlu0 %v222, 112
      %v431 = vpop.permute.xlu0 %430
      %432 = vrot.lane.b32.xlu0 %v235, 112
      %v433 = vpop.permute.xlu0 %432
      %434 = vrot.lane.b32.xlu0 %v236, 112
      %v435 = vpop.permute.xlu0 %434
      %v437 = vsel %vm237, %v429, 0
      %v440 = vsel %vm237, %v431, 0
      %v443 = vsel %vm237, %v433, 0
      %v446 = vsel %vm237, %v435, 0
      %448 = vmatprep.subr.bf16.mxu0 0
      %449 = vmatpush1.bf16.xpose.msra.mxu0 0
      %450 = vmatprep.subr.bf16.mxu0 0
      %451 = vmatpush1.bf16.xpose.msra.mxu0 0
      %452 = vmatprep.subr.bf16.mxu0 0
      %453 = vmatpush1.bf16.xpose.msra.mxu0 0
      %454 = vmatprep.subr.bf16.mxu0 0
      %455 = vmatpush1.bf16.xpose.msra.mxu0 0
      %456 = vmatprep.subr.bf16.mxu0 0
      %457 = vmatpush1.bf16.xpose.msra.mxu0 0
      %458 = vmatprep.subr.bf16.mxu0 0
      %459 = vmatpush1.bf16.xpose.msra.mxu0 0
      %460 = vmatprep.subr.bf16.mxu0 0
      %461 = vmatpush1.bf16.xpose.msra.mxu0 %v446
      %462 = vmatprep.subr.bf16.mxu0 0
      %463 = vmatpush1.bf16.xpose.msra.mxu0 %v443
      %464 = vmatprep.subr.bf16.mxu0 0
      %465 = vmatpush2.bf16.xpose.msra.mxu0 0
      %466 = vmatprep.subr.bf16.mxu0 0
      %467 = vmatpush2.bf16.xpose.msra.mxu0 0
      %468 = vmatprep.subr.bf16.mxu0 0
      %469 = vmatpush2.bf16.xpose.msra.mxu0 0
      %470 = vmatprep.subr.bf16.mxu0 0
      %471 = vmatpush2.bf16.xpose.msra.mxu0 0
      %472 = vmatprep.subr.bf16.mxu0 0
      %473 = vmatpush2.bf16.xpose.msra.mxu0 0
      %474 = vmatprep.subr.bf16.mxu0 0
      %475 = vmatpush2.bf16.xpose.msra.mxu0 0
      %476 = vmatprep.subr.bf16.mxu0 0
      %477 = vmatpush2.bf16.xpose.msra.mxu0 0
      %478 = vmatprep.subr.bf16.mxu0 0
      %479 = vmatpush2.bf16.xpose.msra.mxu0 0
      %480 = vmatprep.mubr.bf16.mxu0 0
      %481 = vmatmul.mubr.bf16.gmra.mxu0 %v437
      %v482 = vpop.f32.mrf.mxu0
      %v483 = vadd.f32 0.0, %v482
      %v484 = vpop.f32.mrf.mxu0
      %v485 = vpop.f32.mrf.mxu0
      %v486 = vadd.f32 0.0, %v485
      %v487 = vpop.f32.mrf.mxu0
      %488 = vmatprep.mubr.bf16.mxu0 0
      %489 = vmatmul.mubr.bf16.gmra.mxu0 %v440
      %v490 = vpop.f32.mrf.mxu0
      %v491 = vadd.f32 0.0, %v490
      %v492 = vpop.f32.mrf.mxu0
      %v493 = vpop.f32.mrf.mxu0
      %v494 = vpop.f32.mrf.mxu0
      %495 = vdwg.mxu0
      %v496 = vsel %vm298, %v483, -inf
      %497 = vmax.xlane.f32.xlu0 %v496
      %v498 = vpop.xlane.xlu0 %497
      %v499 = vsel %vm298, %v486, -inf
      %500 = vmax.xlane.f32.xlu0 %v499
      %v501 = vpop.xlane.xlu0 %500
      %v502 = vsel %vm305, %v491, -inf
      %503 = vmax.xlane.f32.xlu0 %v502
      %v504 = vpop.xlane.xlu0 %503
      %v505 = vsub.f32 %v483, %v498
      %v506 = vsub.f32 %v486, %v501
      %v507 = vsub.f32 %v491, %v504
      %v508 = vmul.f32 %v505, 1.442695
      %v509 = vpow.pop %v508
      %v510 = vmul.f32 %v506, 1.442695
      %v511 = vpow.pop %v510
      %v512 = vmul.f32 %v507, 1.442695
      %v513 = vpow.pop %v512
      %v514 = vsel %vm298, %v509, 0.0
      %515 = vadd.xlane.f32.xlu0 %v514
      %v516 = vpop.xlane.xlu0 %515
      %v517 = vsel %vm298, %v511, 0.0
      %518 = vadd.xlane.f32.xlu0 %v517
      %v519 = vpop.xlane.xlu0 %518
      %v520 = vsel %vm305, %v513, 0.0
      %521 = vadd.xlane.f32.xlu0 %v520
      %v522 = vpop.xlane.xlu0 %521
      %v523 = vrcp.pop %v516
      %v524 = vrcp.pop %v519
      %v525 = vrcp.pop %v522
      %v526 = vmul.f32 %v509, %v523
      %v527 = vmul.f32 %v511, %v524
      %v528 = vmul.f32 %v513, %v525
      %v529 = vpack.c.bf16 %v527, %v526
      %v530 = vpack.c.bf16 %v528, %v528
      %531 = vrot.lane.b32.xlu0 %v341, 112
      %v532 = vpop.permute.xlu0 %531
      %533 = vrot.lane.b32.xlu0 %v342, 112
      %v534 = vpop.permute.xlu0 %533
      %v537 = vsel %vm298, %v529, 0
      %v540 = vsel %vm298, %v530, 0
      %v543 = vand.u32 %v534, %v352
      %545 = vmatprep.subr.bf16.mxu0 0
      %546 = vmatpush1.bf16.msra.mxu0 0
      %547 = vmatprep.subr.bf16.mxu0 0
      %548 = vmatpush1.bf16.msra.mxu0 0
      %549 = vmatprep.subr.bf16.mxu0 0
      %550 = vmatpush1.bf16.msra.mxu0 0
      %551 = vmatprep.subr.bf16.mxu0 0
      %552 = vmatpush1.bf16.msra.mxu0 0
      %553 = vmatprep.subr.bf16.mxu0 0
      %554 = vmatpush1.bf16.msra.mxu0 0
      %555 = vmatprep.subr.bf16.mxu0 0
      %556 = vmatpush1.bf16.msra.mxu0 0
      %557 = vmatprep.subr.bf16.mxu0 0
      %558 = vmatpush1.bf16.msra.mxu0 %v543
      %559 = vmatprep.subr.bf16.mxu0 0
      %560 = vmatpush1.bf16.msra.mxu0 %v532
      %561 = vmatprep.subr.bf16.mxu0 0
      %562 = vmatpush2.bf16.msra.mxu0 0
      %563 = vmatprep.subr.bf16.mxu0 0
      %564 = vmatpush2.bf16.msra.mxu0 0
      %565 = vmatprep.subr.bf16.mxu0 0
      %566 = vmatpush2.bf16.msra.mxu0 0
      %567 = vmatprep.subr.bf16.mxu0 0
      %568 = vmatpush2.bf16.msra.mxu0 0
      %569 = vmatprep.subr.bf16.mxu0 0
      %570 = vmatpush2.bf16.msra.mxu0 0
      %571 = vmatprep.subr.bf16.mxu0 0
      %572 = vmatpush2.bf16.msra.mxu0 0
      %573 = vmatprep.subr.bf16.mxu0 0
      %574 = vmatpush2.bf16.msra.mxu0 0
      %575 = vmatprep.subr.bf16.mxu0 0
      %576 = vmatpush2.bf16.msra.mxu0 0
      %577 = vmatprep.mubr.bf16.mxu0 0
      %578 = vmatmul.mubr.bf16.gmra.mxu0 %v537
      %v579 = vpop.f32.mrf.mxu0
      %v580 = vadd.f32 0.0, %v579
      %v581 = vpop.f32.mrf.mxu0
      %v582 = vpop.f32.mrf.mxu0
      %v583 = vadd.f32 0.0, %v582
      %v584 = vpop.f32.mrf.mxu0
      %585 = vmatprep.mubr.bf16.mxu0 0
      %586 = vmatmul.mubr.bf16.gmra.mxu0 %v540
      %v587 = vpop.f32.mrf.mxu0
      %v588 = vadd.f32 0.0, %v587
      %v589 = vpop.f32.mrf.mxu0
      %v590 = vpop.f32.mrf.mxu0
      %v591 = vpop.f32.mrf.mxu0
      %592 = vdwg.mxu0
      %v593 = vpack.c.bf16 %v583, %v580
      %v594 = vpack.c.bf16 %v588, %v588
      %v597 = vunpack.c.l.b16 %v593
      %v598 = vunpack.c.h.b16 %v593
      %v599 = vunpack.c.l.b16 %v594
      %v600 = vpack.c.b16 %v597, %v597
      %v601 = vpack.c.b16 %v598, %v598
      %v602 = vpack.c.b16 %v599, %v599
      %603 = vrot.lane.b32.xlu0 %v600, 16
      %v604 = vpop.permute.xlu0 %603
      %605 = vrot.lane.b32.xlu0 %v601, 16
      %v606 = vpop.permute.xlu0 %605
      %607 = vrot.lane.b32.xlu0 %v602, 16
      %v608 = vpop.permute.xlu0 %607
      %vm612 = vcmask 257152
      %613 = vst.msk [vmem:[%s210] sm:$0xf] %vm612, %v604
      %614 = vst.msk [vmem:[%s210 + $0x4] sm:$0xf] %vm612, %v606
      %vm615 = vcmask 254080
      %vm616 = vmand %vm615, %vm421
      %v617 = vld [vmem:[%s210 + $0x8] sm:$0x1]
      %v618 = vsel %vm616, %v608, %v617
      %619 = vst [vmem:[%s210 + $0x8] sm:$0x1] %v618
      %620 = vrot.lane.b32.xlu0 %v221, 96
      %v621 = vpop.permute.xlu0 %620
      %622 = vrot.lane.b32.xlu0 %v222, 96
      %v623 = vpop.permute.xlu0 %622
      %624 = vrot.lane.b32.xlu0 %v235, 96
      %v625 = vpop.permute.xlu0 %624
      %626 = vrot.lane.b32.xlu0 %v236, 96
      %v627 = vpop.permute.xlu0 %626
      %v629 = vsel %vm237, %v621, 0
      %v632 = vsel %vm237, %v623, 0
      %v635 = vsel %vm237, %v625, 0
      %v638 = vsel %vm237, %v627, 0
      %640 = vmatprep.subr.bf16.mxu0 0
      %641 = vmatpush1.bf16.xpose.msra.mxu0 0
      %642 = vmatprep.subr.bf16.mxu0 0
      %643 = vmatpush1.bf16.xpose.msra.mxu0 0
      %644 = vmatprep.subr.bf16.mxu0 0
      %645 = vmatpush1.bf16.xpose.msra.mxu0 0
      %646 = vmatprep.subr.bf16.mxu0 0
      %647 = vmatpush1.bf16.xpose.msra.mxu0 0
      %648 = vmatprep.subr.bf16.mxu0 0
      %649 = vmatpush1.bf16.xpose.msra.mxu0 0
      %650 = vmatprep.subr.bf16.mxu0 0
      %651 = vmatpush1.bf16.xpose.msra.mxu0 0
      %652 = vmatprep.subr.bf16.mxu0 0
      %653 = vmatpush1.bf16.xpose.msra.mxu0 %v638
      %654 = vmatprep.subr.bf16.mxu0 0
      %655 = vmatpush1.bf16.xpose.msra.mxu0 %v635
      %656 = vmatprep.subr.bf16.mxu0 0
      %657 = vmatpush2.bf16.xpose.msra.mxu0 0
      %658 = vmatprep.subr.bf16.mxu0 0
      %659 = vmatpush2.bf16.xpose.msra.mxu0 0
      %660 = vmatprep.subr.bf16.mxu0 0
      %661 = vmatpush2.bf16.xpose.msra.mxu0 0
      %662 = vmatprep.subr.bf16.mxu0 0
      %663 = vmatpush2.bf16.xpose.msra.mxu0 0
      %664 = vmatprep.subr.bf16.mxu0 0
      %665 = vmatpush2.bf16.xpose.msra.mxu0 0
      %666 = vmatprep.subr.bf16.mxu0 0
      %667 = vmatpush2.bf16.xpose.msra.mxu0 0
      %668 = vmatprep.subr.bf16.mxu0 0
      %669 = vmatpush2.bf16.xpose.msra.mxu0 0
      %670 = vmatprep.subr.bf16.mxu0 0
      %671 = vmatpush2.bf16.xpose.msra.mxu0 0
      %672 = vmatprep.mubr.bf16.mxu0 0
      %673 = vmatmul.mubr.bf16.gmra.mxu0 %v629
      %v674 = vpop.f32.mrf.mxu0
      %v675 = vadd.f32 0.0, %v674
      %v676 = vpop.f32.mrf.mxu0
      %v677 = vpop.f32.mrf.mxu0
      %v678 = vadd.f32 0.0, %v677
      %v679 = vpop.f32.mrf.mxu0
      %680 = vmatprep.mubr.bf16.mxu0 0
      %681 = vmatmul.mubr.bf16.gmra.mxu0 %v632
      %v682 = vpop.f32.mrf.mxu0
      %v683 = vadd.f32 0.0, %v682
      %v684 = vpop.f32.mrf.mxu0
      %v685 = vpop.f32.mrf.mxu0
      %v686 = vpop.f32.mrf.mxu0
      %687 = vdwg.mxu0
      %v688 = vsel %vm298, %v675, -inf
      %689 = vmax.xlane.f32.xlu0 %v688
      %v690 = vpop.xlane.xlu0 %689
      %v691 = vsel %vm298, %v678, -inf
      %692 = vmax.xlane.f32.xlu0 %v691
      %v693 = vpop.xlane.xlu0 %692
      %v694 = vsel %vm305, %v683, -inf
      %695 = vmax.xlane.f32.xlu0 %v694
      %v696 = vpop.xlane.xlu0 %695
      %v697 = vsub.f32 %v675, %v690
      %v698 = vsub.f32 %v678, %v693
      %v699 = vsub.f32 %v683, %v696
      %v700 = vmul.f32 %v697, 1.442695
      %v701 = vpow.pop %v700
      %v702 = vmul.f32 %v698, 1.442695
      %v703 = vpow.pop %v702
      %v704 = vmul.f32 %v699, 1.442695
      %v705 = vpow.pop %v704
      %v706 = vsel %vm298, %v701, 0.0
      %707 = vadd.xlane.f32.xlu0 %v706
      %v708 = vpop.xlane.xlu0 %707
      %v709 = vsel %vm298, %v703, 0.0
      %710 = vadd.xlane.f32.xlu0 %v709
      %v711 = vpop.xlane.xlu0 %710
      %v712 = vsel %vm305, %v705, 0.0
      %713 = vadd.xlane.f32.xlu0 %v712
      %v714 = vpop.xlane.xlu0 %713
      %v715 = vrcp.pop %v708
      %v716 = vrcp.pop %v711
      %v717 = vrcp.pop %v714
      %v718 = vmul.f32 %v701, %v715
      %v719 = vmul.f32 %v703, %v716
      %v720 = vmul.f32 %v705, %v717
      %v721 = vpack.c.bf16 %v719, %v718
      %v722 = vpack.c.bf16 %v720, %v720
      %723 = vrot.lane.b32.xlu0 %v341, 96
      %v724 = vpop.permute.xlu0 %723
      %725 = vrot.lane.b32.xlu0 %v342, 96
      %v726 = vpop.permute.xlu0 %725
      %v729 = vsel %vm298, %v721, 0
      %v732 = vsel %vm298, %v722, 0
      %v735 = vand.u32 %v726, %v352
      %737 = vmatprep.subr.bf16.mxu0 0
      %738 = vmatpush1.bf16.msra.mxu0 0
      %739 = vmatprep.subr.bf16.mxu0 0
      %740 = vmatpush1.bf16.msra.mxu0 0
      %741 = vmatprep.subr.bf16.mxu0 0
      %742 = vmatpush1.bf16.msra.mxu0 0
      %743 = vmatprep.subr.bf16.mxu0 0
      %744 = vmatpush1.bf16.msra.mxu0 0
      %745 = vmatprep.subr.bf16.mxu0 0
      %746 = vmatpush1.bf16.msra.mxu0 0
      %747 = vmatprep.subr.bf16.mxu0 0
      %748 = vmatpush1.bf16.msra.mxu0 0
      %749 = vmatprep.subr.bf16.mxu0 0
      %750 = vmatpush1.bf16.msra.mxu0 %v735
      %751 = vmatprep.subr.bf16.mxu0 0
      %752 = vmatpush1.bf16.msra.mxu0 %v724
      %753 = vmatprep.subr.bf16.mxu0 0
      %754 = vmatpush2.bf16.msra.mxu0 0
      %755 = vmatprep.subr.bf16.mxu0 0
      %756 = vmatpush2.bf16.msra.mxu0 0
      %757 = vmatprep.subr.bf16.mxu0 0
      %758 = vmatpush2.bf16.msra.mxu0 0
      %759 = vmatprep.subr.bf16.mxu0 0
      %760 = vmatpush2.bf16.msra.mxu0 0
      %761 = vmatprep.subr.bf16.mxu0 0
      %762 = vmatpush2.bf16.msra.mxu0 0
      %763 = vmatprep.subr.bf16.mxu0 0
      %764 = vmatpush2.bf16.msra.mxu0 0
      %765 = vmatprep.subr.bf16.mxu0 0
      %766 = vmatpush2.bf16.msra.mxu0 0
      %767 = vmatprep.subr.bf16.mxu0 0
      %768 = vmatpush2.bf16.msra.mxu0 0
      %769 = vmatprep.mubr.bf16.mxu0 0
      %770 = vmatmul.mubr.bf16.gmra.mxu0 %v729
      %v771 = vpop.f32.mrf.mxu0
      %v772 = vadd.f32 0.0, %v771
      %v773 = vpop.f32.mrf.mxu0
      %v774 = vpop.f32.mrf.mxu0
      %v775 = vadd.f32 0.0, %v774
      %v776 = vpop.f32.mrf.mxu0
      %777 = vmatprep.mubr.bf16.mxu0 0
      %778 = vmatmul.mubr.bf16.gmra.mxu0 %v732
      %v779 = vpop.f32.mrf.mxu0
      %v780 = vadd.f32 0.0, %v779
      %v781 = vpop.f32.mrf.mxu0
      %v782 = vpop.f32.mrf.mxu0
      %v783 = vpop.f32.mrf.mxu0
      %784 = vdwg.mxu0
      %v785 = vpack.c.bf16 %v775, %v772
      %v786 = vpack.c.bf16 %v780, %v780
      %v789 = vunpack.c.l.b16 %v785
      %v790 = vunpack.c.h.b16 %v785
      %v791 = vunpack.c.l.b16 %v786
      %v792 = vpack.c.b16 %v789, %v789
      %v793 = vpack.c.b16 %v790, %v790
      %v794 = vpack.c.b16 %v791, %v791
      %795 = vrot.lane.b32.xlu0 %v792, 32
      %v796 = vpop.permute.xlu0 %795
      %797 = vrot.lane.b32.xlu0 %v793, 32
      %v798 = vpop.permute.xlu0 %797
      %799 = vrot.lane.b32.xlu0 %v794, 32
      %v800 = vpop.permute.xlu0 %799
      %vm804 = vcmask 388352
      %805 = vst.msk [vmem:[%s210] sm:$0xf] %vm804, %v796
      %806 = vst.msk [vmem:[%s210 + $0x4] sm:$0xf] %vm804, %v798
      %vm807 = vcmask 385280
      %vm808 = vmand %vm807, %vm421
      %v809 = vld [vmem:[%s210 + $0x8] sm:$0x1]
      %v810 = vsel %vm808, %v800, %v809
      %811 = vst [vmem:[%s210 + $0x8] sm:$0x1] %v810
      %812 = vrot.lane.b32.xlu0 %v221, 80
      %v813 = vpop.permute.xlu0 %812
      %814 = vrot.lane.b32.xlu0 %v222, 80
      %v815 = vpop.permute.xlu0 %814
      %816 = vrot.lane.b32.xlu0 %v235, 80
      %v817 = vpop.permute.xlu0 %816
      %818 = vrot.lane.b32.xlu0 %v236, 80
      %v819 = vpop.permute.xlu0 %818
      %v821 = vsel %vm237, %v813, 0
      %v824 = vsel %vm237, %v815, 0
      %v827 = vsel %vm237, %v817, 0
      %v830 = vsel %vm237, %v819, 0
      %832 = vmatprep.subr.bf16.mxu0 0
      %833 = vmatpush1.bf16.xpose.msra.mxu0 0
      %834 = vmatprep.subr.bf16.mxu0 0
      %835 = vmatpush1.bf16.xpose.msra.mxu0 0
      %836 = vmatprep.subr.bf16.mxu0 0
      %837 = vmatpush1.bf16.xpose.msra.mxu0 0
      %838 = vmatprep.subr.bf16.mxu0 0
      %839 = vmatpush1.bf16.xpose.msra.mxu0 0
      %840 = vmatprep.subr.bf16.mxu0 0
      %841 = vmatpush1.bf16.xpose.msra.mxu0 0
      %842 = vmatprep.subr.bf16.mxu0 0
      %843 = vmatpush1.bf16.xpose.msra.mxu0 0
      %844 = vmatprep.subr.bf16.mxu0 0
      %845 = vmatpush1.bf16.xpose.msra.mxu0 %v830
      %846 = vmatprep.subr.bf16.mxu0 0
      %847 = vmatpush1.bf16.xpose.msra.mxu0 %v827
      %848 = vmatprep.subr.bf16.mxu0 0
      %849 = vmatpush2.bf16.xpose.msra.mxu0 0
      %850 = vmatprep.subr.bf16.mxu0 0
      %851 = vmatpush2.bf16.xpose.msra.mxu0 0
      %852 = vmatprep.subr.bf16.mxu0 0
      %853 = vmatpush2.bf16.xpose.msra.mxu0 0
      %854 = vmatprep.subr.bf16.mxu0 0
      %855 = vmatpush2.bf16.xpose.msra.mxu0 0
      %856 = vmatprep.subr.bf16.mxu0 0
      %857 = vmatpush2.bf16.xpose.msra.mxu0 0
      %858 = vmatprep.subr.bf16.mxu0 0
      %859 = vmatpush2.bf16.xpose.msra.mxu0 0
      %860 = vmatprep.subr.bf16.mxu0 0
      %861 = vmatpush2.bf16.xpose.msra.mxu0 0
      %862 = vmatprep.subr.bf16.mxu0 0
      %863 = vmatpush2.bf16.xpose.msra.mxu0 0
      %864 = vmatprep.mubr.bf16.mxu0 0
      %865 = vmatmul.mubr.bf16.gmra.mxu0 %v821
      %v866 = vpop.f32.mrf.mxu0
      %v867 = vadd.f32 0.0, %v866
      %v868 = vpop.f32.mrf.mxu0
      %v869 = vpop.f32.mrf.mxu0
      %v870 = vadd.f32 0.0, %v869
      %v871 = vpop.f32.mrf.mxu0
      %872 = vmatprep.mubr.bf16.mxu0 0
      %873 = vmatmul.mubr.bf16.gmra.mxu0 %v824
      %v874 = vpop.f32.mrf.mxu0
      %v875 = vadd.f32 0.0, %v874
      %v876 = vpop.f32.mrf.mxu0
      %v877 = vpop.f32.mrf.mxu0
      %v878 = vpop.f32.mrf.mxu0
      %879 = vdwg.mxu0
      %v880 = vsel %vm298, %v867, -inf
      %881 = vmax.xlane.f32.xlu0 %v880
      %v882 = vpop.xlane.xlu0 %881
      %v883 = vsel %vm298, %v870, -inf
      %884 = vmax.xlane.f32.xlu0 %v883
      %v885 = vpop.xlane.xlu0 %884
      %v886 = vsel %vm305, %v875, -inf
      %887 = vmax.xlane.f32.xlu0 %v886
      %v888 = vpop.xlane.xlu0 %887
      %v889 = vsub.f32 %v867, %v882
      %v890 = vsub.f32 %v870, %v885
      %v891 = vsub.f32 %v875, %v888
      %v892 = vmul.f32 %v889, 1.442695
      %v893 = vpow.pop %v892
      %v894 = vmul.f32 %v890, 1.442695
      %v895 = vpow.pop %v894
      %v896 = vmul.f32 %v891, 1.442695
      %v897 = vpow.pop %v896
      %v898 = vsel %vm298, %v893, 0.0
      %899 = vadd.xlane.f32.xlu0 %v898
      %v900 = vpop.xlane.xlu0 %899
      %v901 = vsel %vm298, %v895, 0.0
      %902 = vadd.xlane.f32.xlu0 %v901
      %v903 = vpop.xlane.xlu0 %902
      %v904 = vsel %vm305, %v897, 0.0
      %905 = vadd.xlane.f32.xlu0 %v904
      %v906 = vpop.xlane.xlu0 %905
      %v907 = vrcp.pop %v900
      %v908 = vrcp.pop %v903
      %v909 = vrcp.pop %v906
      %v910 = vmul.f32 %v893, %v907
      %v911 = vmul.f32 %v895, %v908
      %v912 = vmul.f32 %v897, %v909
      %v913 = vpack.c.bf16 %v911, %v910
      %v914 = vpack.c.bf16 %v912, %v912
      %915 = vrot.lane.b32.xlu0 %v341, 80
      %v916 = vpop.permute.xlu0 %915
      %917 = vrot.lane.b32.xlu0 %v342, 80
      %v918 = vpop.permute.xlu0 %917
      %v921 = vsel %vm298, %v913, 0
      %v924 = vsel %vm298, %v914, 0
      %v927 = vand.u32 %v918, %v352
      %929 = vmatprep.subr.bf16.mxu0 0
      %930 = vmatpush1.bf16.msra.mxu0 0
      %931 = vmatprep.subr.bf16.mxu0 0
      %932 = vmatpush1.bf16.msra.mxu0 0
      %933 = vmatprep.subr.bf16.mxu0 0
      %934 = vmatpush1.bf16.msra.mxu0 0
      %935 = vmatprep.subr.bf16.mxu0 0
      %936 = vmatpush1.bf16.msra.mxu0 0
      %937 = vmatprep.subr.bf16.mxu0 0
      %938 = vmatpush1.bf16.msra.mxu0 0
      %939 = vmatprep.subr.bf16.mxu0 0
      %940 = vmatpush1.bf16.msra.mxu0 0
      %941 = vmatprep.subr.bf16.mxu0 0
      %942 = vmatpush1.bf16.msra.mxu0 %v927
      %943 = vmatprep.subr.bf16.mxu0 0
      %944 = vmatpush1.bf16.msra.mxu0 %v916
      %945 = vmatprep.subr.bf16.mxu0 0
      %946 = vmatpush2.bf16.msra.mxu0 0
      %947 = vmatprep.subr.bf16.mxu0 0
      %948 = vmatpush2.bf16.msra.mxu0 0
      %949 = vmatprep.subr.bf16.mxu0 0
      %950 = vmatpush2.bf16.msra.mxu0 0
      %951 = vmatprep.subr.bf16.mxu0 0
      %952 = vmatpush2.bf16.msra.mxu0 0
      %953 = vmatprep.subr.bf16.mxu0 0
      %954 = vmatpush2.bf16.msra.mxu0 0
      %955 = vmatprep.subr.bf16.mxu0 0
      %956 = vmatpush2.bf16.msra.mxu0 0
      %957 = vmatprep.subr.bf16.mxu0 0
      %958 = vmatpush2.bf16.msra.mxu0 0
      %959 = vmatprep.subr.bf16.mxu0 0
      %960 = vmatpush2.bf16.msra.mxu0 0
      %961 = vmatprep.mubr.bf16.mxu0 0
      %962 = vmatmul.mubr.bf16.gmra.mxu0 %v921
      %v963 = vpop.f32.mrf.mxu0
      %v964 = vadd.f32 0.0, %v963
      %v965 = vpop.f32.mrf.mxu0
      %v966 = vpop.f32.mrf.mxu0
      %v967 = vadd.f32 0.0, %v966
      %v968 = vpop.f32.mrf.mxu0
      %969 = vmatprep.mubr.bf16.mxu0 0
      %970 = vmatmul.mubr.bf16.gmra.mxu0 %v924
      %v971 = vpop.f32.mrf.mxu0
      %v972 = vadd.f32 0.0, %v971
      %v973 = vpop.f32.mrf.mxu0
      %v974 = vpop.f32.mrf.mxu0
      %v975 = vpop.f32.mrf.mxu0
      %976 = vdwg.mxu0
      %v977 = vpack.c.bf16 %v967, %v964
      %v978 = vpack.c.bf16 %v972, %v972
      %v981 = vunpack.c.l.b16 %v977
      %v982 = vunpack.c.h.b16 %v977
      %v983 = vunpack.c.l.b16 %v978
      %v984 = vpack.c.b16 %v981, %v981
      %v985 = vpack.c.b16 %v982, %v982
      %v986 = vpack.c.b16 %v983, %v983
      %987 = vrot.lane.b32.xlu0 %v984, 48
      %v988 = vpop.permute.xlu0 %987
      %989 = vrot.lane.b32.xlu0 %v985, 48
      %v990 = vpop.permute.xlu0 %989
      %991 = vrot.lane.b32.xlu0 %v986, 48
      %v992 = vpop.permute.xlu0 %991
      %vm996 = vcmask 519552
      %997 = vst.msk [vmem:[%s210] sm:$0xf] %vm996, %v988
      %998 = vst.msk [vmem:[%s210 + $0x4] sm:$0xf] %vm996, %v990
      %vm999 = vcmask 516480
      %vm1000 = vmand %vm999, %vm421
      %v1001 = vld [vmem:[%s210 + $0x8] sm:$0x1]
      %v1002 = vsel %vm1000, %v992, %v1001
      %1003 = vst [vmem:[%s210 + $0x8] sm:$0x1] %v1002
      %p1004 = scmp.lt.s32.totalorder %s14, 1
      %s1005 = scalar_select %p1004, %s14, 1
      %s1006 = smul.addr %s1005, 3
      %s1007 = smul.addr %s1006, 4
      %s1008 = scalar_lea.vmem %s3, %s1007
      // Predicated region
      $region33: #{vit_forward.14} parent=31 // pred_check
        %p1009 = pneg %p110
      $region34: #{vit_forward.14} parent=31 // pred_check_branch
        %1011 = sbr.rel (%p1009) target = $region36
      $region35: #{vit_forward.14} parent=31 // pred_region
        _
      $region36: #{vit_forward.14} parent=31 // pred_fallthru
        _
    $region32: #{vit_forward.14} parent=5 // pred_fallthru
      _
    %p1012 = scmp.le.s32.totalorder 2, %s9
    // Predicated region
    $region37: #{vit_forward.14} parent=5 // pred_check
      %p1013 = pneg %p1012
    $region38: #{vit_forward.14} parent=5 // pred_check_branch
      %1015 = sbr.rel (%p1013) target = $region40
    $region39: #{vit_forward.14} parent=5 // pred_region
      %s1016 = ssub.s32 %s9, 2
      // Predicated region
      $region41: #{vit_forward.14} parent=39 // pred_check
        %p1017 = pneg %p116
      $region42: #{vit_forward.14} parent=39 // pred_check_branch
        %1019 = sbr.rel (%p1017) target = $region44
      $region43: #{vit_forward.14} parent=39 // pred_region
        %p1020 = scmp.lt.s32.totalorder %s15, 1
        %s1021 = scalar_select %p1020, %s15, 1
        %s1022 = smul.addr %s1021, 3
        %s1023 = smul.addr %s1022, 4
        %s1024 = scalar_lea.vmem %s3, %s1023
      $region44: #{vit_forward.14} parent=39 // pred_fallthru
        _
    $region40: #{vit_forward.14} parent=5 // pred_fallthru
      _
  $region6: #{vit_forward.14} parent=0 // loop_footer
    %s13 = sadd.s32 1, %s9
  $region7: #{vit_forward.14} parent=0 // loop_footer_branch
    %8 = sbr.rel target = $region3
  $region8: #{vit_forward.14} parent=0 // loop_exit
    _

// kernel: vit_forward.16
$region0: #{vit_forward.16}
  #allocation0 [shape = 'u32[]', space=smem, size = 0x4, offset = 0x4, fixed_abs, tag = 'smem constant byte address 0x4 - core index']
  #allocation1 [shape = 'u32[144,128]{1,0:T(1,128)}', space=vmem, size = 0x12000, scoped, tag = 'internal scratch']
  %s0 = inlined_call_operand.vmem [shape: f32[2,17,64], index: 0, kind: input, shape index: {}]
  %s1 = inlined_call_operand.vmem [shape: f32[1,64], index: 1, kind: input, shape index: {}]
  %s2 = inlined_call_operand.vmem [shape: f32[1,64], index: 2, kind: input, shape index: {}]
  %s3 = inlined_call_operand.vmem [shape: bf16[64,128], index: 3, kind: input, shape index: {}]
  %s4 = inlined_call_operand.vmem [shape: f32[1,128], index: 4, kind: input, shape index: {}]
  %s5 = inlined_call_operand.vmem [shape: bf16[2,17,128], index: 5, kind: output, shape index: {}]
  %s6 = sld [smem:[#allocation0]]
  $region53: #{vit_forward.16} parent=0
    _
  %s8 = ssub.s32 1, %s6
  %s9 = scalar_select 0, %s8, %s6
  loop: start=0, step=1, limit=4
  $region2: #{vit_forward.16} parent=0 // loop_pre_header
    _
  $region3: #{vit_forward.16} parent=0 // loop_header
    %s11 = sphi 0, %s15
    %p12 = scmp.ge.s32.totalorder %s11, 4
    %s21 = sphi 0, %s23
    %s24 = sphi 0, %s21
    %s25 = sphi 0, %s24
    %s41 = sphi 0, %s25
    %s45 = sphi 0, %s45
    %s47 = sphi 0, %s45
    %s48 = sphi 0, %s47
    %s62 = sphi 0, %s48
    %s66 = sphi 0, %s66
    %s68 = sphi 0, %s66
    %s69 = sphi 0, %s68
    %s83 = sphi 0, %s69
    %s87 = sphi 0, %s87
    %s89 = sphi 0, %s87
    %s90 = sphi 0, %s89
    %s104 = sphi 0, %s90
    %s108 = sphi 0, %s108
    %s110 = sphi 0, %s108
    %s111 = sphi 0, %s110
    %s125 = sphi 0, %s111
    %s131 = sphi 0, %s133
    %s134 = sphi 0, %s131
    %s135 = sphi 0, %s134
    %s151 = sphi 0, %s135
  $region4: #{vit_forward.16} parent=0 // loop_header_branch
    %14 = sbr.rel (%p12) target = $region8
  $region5: #{vit_forward.16} parent=0 // loop_body
    %s16 = ssub.s32 %s11, 1
    %s17 = ssub.s32 %s11, 2
    %s18 = sadd.s32 %s11, 1
    %s19 = ssub.s32 %s11, %s18
    %p20 = scmp.eq.s32.totalorder %s19, 0
    %s22 = sadd.s32 %s21, 1
    %s23 = scalar_select %p20, %s21, %s22
    %p26 = pneg %p20
    %p27 = scmp.eq.s32.totalorder %s11, 1
    %p28 = por %p26, %p27
    %p29 = scmp.ne.s32.totalorder %s21, %s24
    %p30 = scmp.eq.s32.totalorder %s11, 0
    %p31 = por %p29, %p30
    %p32 = scmp.ne.s32.totalorder %s21, %s24
    %p33 = scmp.eq.s32.totalorder %s16, 1
    %p34 = por %p32, %p33
    %p35 = scmp.ne.s32.totalorder %s24, %s25
    %p36 = scmp.eq.s32.totalorder %s16, 0
    %p37 = por %p35, %p36
    %p38 = scmp.ne.s32.totalorder %s24, %s25
    %p39 = scmp.eq.s32.totalorder %s17, 1
    %p40 = por %p38, %p39
    %p42 = scmp.ne.s32.totalorder %s25, %s41
    %p43 = scmp.eq.s32.totalorder %s17, 0
    %p44 = por %p42, %p43
    %s46 = sadd.s32 %s45, 1
    %p49 = scmp.eq.s32.totalorder %s11, 1
    %p50 = scmp.ne.s32.totalorder %s45, %s47
    %p51 = scmp.eq.s32.totalorder %s11, 0
    %p52 = por %p50, %p51
    %p53 = scmp.ne.s32.totalorder %s45, %s47
    %p54 = scmp.eq.s32.totalorder %s16, 1
    %p55 = por %p53, %p54
    %p56 = scmp.ne.s32.totalorder %s47, %s48
    %p57 = scmp.eq.s32.totalorder %s16, 0
    %p58 = por %p56, %p57
    %p59 = scmp.ne.s32.totalorder %s47, %s48
    %p60 = scmp.eq.s32.totalorder %s17, 1
    %p61 = por %p59, %p60
    %p63 = scmp.ne.s32.totalorder %s48, %s62
    %p64 = scmp.eq.s32.totalorder %s17, 0
    %p65 = por %p63, %p64
    %s67 = sadd.s32 %s66, 1
    %p70 = scmp.eq.s32.totalorder %s11, 1
    %p71 = scmp.ne.s32.totalorder %s66, %s68
    %p72 = scmp.eq.s32.totalorder %s11, 0
    %p73 = por %p71, %p72
    %p74 = scmp.ne.s32.totalorder %s66, %s68
    %p75 = scmp.eq.s32.totalorder %s16, 1
    %p76 = por %p74, %p75
    %p77 = scmp.ne.s32.totalorder %s68, %s69
    %p78 = scmp.eq.s32.totalorder %s16, 0
    %p79 = por %p77, %p78
    %p80 = scmp.ne.s32.totalorder %s68, %s69
    %p81 = scmp.eq.s32.totalorder %s17, 1
    %p82 = por %p80, %p81
    %p84 = scmp.ne.s32.totalorder %s69, %s83
    %p85 = scmp.eq.s32.totalorder %s17, 0
    %p86 = por %p84, %p85
    %s88 = sadd.s32 %s87, 1
    %p91 = scmp.eq.s32.totalorder %s11, 1
    %p92 = scmp.ne.s32.totalorder %s87, %s89
    %p93 = scmp.eq.s32.totalorder %s11, 0
    %p94 = por %p92, %p93
    %p95 = scmp.ne.s32.totalorder %s87, %s89
    %p96 = scmp.eq.s32.totalorder %s16, 1
    %p97 = por %p95, %p96
    %p98 = scmp.ne.s32.totalorder %s89, %s90
    %p99 = scmp.eq.s32.totalorder %s16, 0
    %p100 = por %p98, %p99
    %p101 = scmp.ne.s32.totalorder %s89, %s90
    %p102 = scmp.eq.s32.totalorder %s17, 1
    %p103 = por %p101, %p102
    %p105 = scmp.ne.s32.totalorder %s90, %s104
    %p106 = scmp.eq.s32.totalorder %s17, 0
    %p107 = por %p105, %p106
    %s109 = sadd.s32 %s108, 1
    %p112 = scmp.eq.s32.totalorder %s11, 1
    %p113 = scmp.ne.s32.totalorder %s108, %s110
    %p114 = scmp.eq.s32.totalorder %s11, 0
    %p115 = por %p113, %p114
    %p116 = scmp.ne.s32.totalorder %s108, %s110
    %p117 = scmp.eq.s32.totalorder %s16, 1
    %p118 = por %p116, %p117
    %p119 = scmp.ne.s32.totalorder %s110, %s111
    %p120 = scmp.eq.s32.totalorder %s16, 0
    %p121 = por %p119, %p120
    %p122 = scmp.ne.s32.totalorder %s110, %s111
    %p123 = scmp.eq.s32.totalorder %s17, 1
    %p124 = por %p122, %p123
    %p126 = scmp.ne.s32.totalorder %s111, %s125
    %p127 = scmp.eq.s32.totalorder %s17, 0
    %p128 = por %p126, %p127
    %s129 = ssub.s32 %s11, %s18
    %p130 = scmp.eq.s32.totalorder %s129, 0
    %s132 = sadd.s32 %s131, 1
    %s133 = scalar_select %p130, %s131, %s132
    %p136 = pneg %p130
    %p137 = scmp.eq.s32.totalorder %s11, 1
    %p138 = por %p136, %p137
    %p139 = scmp.ne.s32.totalorder %s131, %s134
    %p140 = scmp.eq.s32.totalorder %s11, 0
    %p141 = por %p139, %p140
    %p142 = scmp.ne.s32.totalorder %s131, %s134
    %p143 = scmp.eq.s32.totalorder %s16, 1
    %p144 = por %p142, %p143
    %p145 = scmp.ne.s32.totalorder %s134, %s135
    %p146 = scmp.eq.s32.totalorder %s16, 0
    %p147 = por %p145, %p146
    %p148 = scmp.ne.s32.totalorder %s134, %s135
    %p149 = scmp.eq.s32.totalorder %s17, 1
    %p150 = por %p148, %p149
    %p152 = scmp.ne.s32.totalorder %s135, %s151
    %p153 = scmp.eq.s32.totalorder %s17, 0
    %p154 = por %p152, %p153
    %p155 = scmp.le.s32.totalorder 1, %s11
    %p156 = scmp.lt.s32.totalorder %s11, 3
    %p157 = pnand %p155, %p156
    %p158 = pneg %p157
    // Predicated region
    $region9: #{vit_forward.16} parent=5 // pred_check
      _
    $region10: #{vit_forward.16} parent=5 // pred_check_branch
      %160 = sbr.rel (%p157) target = $region12
    $region11: #{vit_forward.16} parent=5 // pred_region
      %s161 = ssub.s32 %s11, 1
      // Predicated region
      $region13: #{vit_forward.16} parent=11 // pred_check
        %p162 = pneg %p58
      $region14: #{vit_forward.16} parent=11 // pred_check_branch
        %164 = sbr.rel (%p162) target = $region16
      $region15: #{vit_forward.16} parent=11 // pred_region
        _
      $region16: #{vit_forward.16} parent=11 // pred_fallthru
        _
      // Predicated region
      $region17: #{vit_forward.16} parent=11 // pred_check
        %p165 = pneg %p79
      $region18: #{vit_forward.16} parent=11 // pred_check_branch
        %167 = sbr.rel (%p165) target = $region20
      $region19: #{vit_forward.16} parent=11 // pred_region
        _
      $region20: #{vit_forward.16} parent=11 // pred_fallthru
        _
      // Predicated region
      $region21: #{vit_forward.16} parent=11 // pred_check
        %p168 = pneg %p100
      $region22: #{vit_forward.16} parent=11 // pred_check_branch
        %170 = sbr.rel (%p168) target = $region24
      $region23: #{vit_forward.16} parent=11 // pred_region
        _
      $region24: #{vit_forward.16} parent=11 // pred_fallthru
        _
      // Predicated region
      $region25: #{vit_forward.16} parent=11 // pred_check
        %p171 = pneg %p121
      $region26: #{vit_forward.16} parent=11 // pred_check_branch
        %173 = sbr.rel (%p171) target = $region28
      $region27: #{vit_forward.16} parent=11 // pred_region
        _
      $region28: #{vit_forward.16} parent=11 // pred_fallthru
        _
    $region12: #{vit_forward.16} parent=5 // pred_fallthru
      _
    %p174 = scmp.lt.s32.totalorder %s11, 2
    // Predicated region
    $region29: #{vit_forward.16} parent=5 // pred_check
      %p175 = pneg %p174
    $region30: #{vit_forward.16} parent=5 // pred_check_branch
      %177 = sbr.rel (%p175) target = $region32
    $region31: #{vit_forward.16} parent=5 // pred_region
      // Predicated region
      $region33: #{vit_forward.16} parent=31 // pred_check
        %p178 = pneg %p31
      $region34: #{vit_forward.16} parent=31 // pred_check_branch
        %180 = sbr.rel (%p178) target = $region36
      $region35: #{vit_forward.16} parent=31 // pred_region
        %p181 = scmp.lt.s32.totalorder %s11, 1
        %s182 = scalar_select %p181, %s11, 1
        %s183 = smul.addr %s182, 3
        %s184 = smul.addr %s183, 8
        %s185 = scalar_lea.vmem %s0, %s184
      $region36: #{vit_forward.16} parent=31 // pred_fallthru
        _
    $region32: #{vit_forward.16} parent=5 // pred_fallthru
      _
    %p186 = scmp.le.s32.totalorder 1, %s11
    %p187 = scmp.lt.s32.totalorder %s11, 3
    %p188 = pnand %p186, %p187
    %p189 = pneg %p188
    // Predicated region
    $region37: #{vit_forward.16} parent=5 // pred_check
      _
    $region38: #{vit_forward.16} parent=5 // pred_check_branch
      %191 = sbr.rel (%p188) target = $region40
    $region39: #{vit_forward.16} parent=5 // pred_region
      %s192 = ssub.s32 %s11, 1
      %p193 = scmp.lt.s32.totalorder %s16, 1
      %s194 = scalar_select %p193, %s16, 1
      %s195 = smul.addr %s194, 3
      %s196 = smul.addr %s195, 8
      %s197 = scalar_lea.vmem %s0, %s196
      %p198 = pneg %p37
      %p199 = pneg %p34
      %p200 = pneg %p58
      %p201 = pneg %p55
      %p202 = pneg %p79
      %p203 = pneg %p76
      %p204 = pneg %p100
      %p205 = pneg %p97
      %p206 = pneg %p121
      %p207 = pneg %p118
      %p208 = pneg %p147
      %p209 = pneg %p144
      %p210 = scmp.lt.s32.totalorder %s16, 1
      %s211 = scalar_select %p210, %s16, 1
      %s212 = smul.addr %s211, 3
      %s213 = smul.addr %s212, 4
      %s214 = scalar_lea.vmem %s5, %s213
      %p215 = scmp.lt.s32.totalorder %s16, 1
      %s216 = scalar_select %p215, %s16, 1
      %s217 = smul.addr %s216, 3
      %s218 = smul.addr %s217, 8
      %s219 = scalar_lea.vmem %s0, %s218
      %p220 = scmp.lt.s32.totalorder %s16, 1
      %s221 = scalar_select %p220, %s16, 1
      %s222 = smul.addr %s221, 3
      %s223 = smul.addr %s222, 4
      %s224 = scalar_lea.vmem %s5, %s223
      %v226 = vld [vmem:[%s219] sm:$0xff]
      %v227 = vld [vmem:[%s219 + $0x8] sm:$0xff]
      %v228 = vld [vmem:[%s219 + $0x10] sm:$0x1]
      %v229 = vld [vmem:[%s1] sm:$0x1]
      %v230 = vld [vmem:[%s2] sm:$0x1]
      %vm231 = vcmask 523264
      %v232 = vsel %vm231, %v226, 0.0
      %233 = vadd.xlane.f32.xlu0 %v232
      %v234 = vpop.xlane.xlu0 %233
      %v235 = vsel %vm231, %v227, 0.0
      %236 = vadd.xlane.f32.xlu0 %v235
      %v237 = vpop.xlane.xlu0 %236
      %vm238 = vcmask 516096
      %v239 = vsel %vm238, %v228, 0.0
      %240 = vadd.xlane.f32.xlu0 %v239
      %v241 = vpop.xlane.xlu0 %240
      %v242 = vrcp.pop 64.0
      %v243 = vmul.f32 %v234, %v242
      %v244 = vmul.f32 %v237, %v242
      %v245 = vmul.f32 %v241, %v242
      %v246 = vsub.f32 %v226, %v243
      %v247 = vsub.f32 %v227, %v244
      %v248 = vsub.f32 %v228, %v245
      %v249 = vmul.f32 %v246, %v246
      %v250 = vmul.f32 %v247, %v247
      %v251 = vmul.f32 %v248, %v248
      %v252 = vsel %vm231, %v249, 0.0
      %253 = vadd.xlane.f32.xlu0 %v252
      %v254 = vpop.xlane.xlu0 %253
      %v255 = vsel %vm231, %v250, 0.0
      %256 = vadd.xlane.f32.xlu0 %v255
      %v257 = vpop.xlane.xlu0 %256
      %v258 = vsel %vm238, %v251, 0.0
      %259 = vadd.xlane.f32.xlu0 %v258
      %v260 = vpop.xlane.xlu0 %259
      %v261 = vmul.f32 %v254, %v242
      %v262 = vmul.f32 %v257, %v242
      %v263 = vmul.f32 %v260, %v242
      %v264 = vadd.f32 %v261, 1e-06
      %v265 = vadd.f32 %v262, 1e-06
      %v266 = vadd.f32 %v263, 1e-06
      %v267 = vrsqrt.pop %v264
      %v268 = vrsqrt.pop %v265
      %v269 = vrsqrt.pop %v266
      %v270 = vmul.f32 %v246, %v267
      %v271 = vmul.f32 %v247, %v268
      %v272 = vmul.f32 %v248, %v269
      %v274 = vlaneseq
      %v275 = vshrl.u32 %v274, 7
      %v276 = vsub.s32 0, %v275
      %v277 = vrot.slane %v229, %v276
      %v279 = vmul.f32 %v270, %v277
      %v280 = vmul.f32 %v271, %v277
      %v281 = vmul.f32 %v272, %v277
      %v283 = vlaneseq
      %v284 = vshrl.u32 %v283, 7
      %v285 = vsub.s32 0, %v284
      %v286 = vrot.slane %v230, %v285
      %v288 = vadd.f32 %v279, %v286
      %v289 = vadd.f32 %v280, %v286
      %v290 = vadd.f32 %v281, %v286
      %v291 = vpack.c.bf16 %v289, %v288
      %v292 = vpack.c.bf16 %v290, %v290
      %v293 = vld [vmem:[%s3] sm:$0xf]
      %v294 = vld [vmem:[%s3 + $0x4] sm:$0xf]
      %v295 = vld [vmem:[%s3 + $0x8] sm:$0xf]
      %v296 = vld [vmem:[%s3 + $0xc] sm:$0xf]
      %v297 = vld [vmem:[%s3 + $0x10] sm:$0xf]
      %v298 = vld [vmem:[%s3 + $0x14] sm:$0xf]
      %v299 = vld [vmem:[%s3 + $0x18] sm:$0xf]
      %v300 = vld [vmem:[%s3 + $0x1c] sm:$0xf]
      %v301 = vld [vmem:[%s4] sm:$0x1]
      %v303 = vlaneseq
      %v304 = vshrl.u32 %v303, 7
      %v305 = vsub.s32 0, %v304
      %v306 = vrot.slane %v301, %v305
      %v316 = vunpack.c.l.b16 %v293
      %v317 = vunpack.c.l.b16 %v294
      %v318 = vunpack.c.l.b16 %v295
      %v319 = vunpack.c.l.b16 %v296
      %v320 = vunpack.c.l.b16 %v297
      %v321 = vunpack.c.l.b16 %v298
      %v322 = vunpack.c.l.b16 %v299
      %v323 = vunpack.c.l.b16 %v300
      %v324 = vpack.c.b16 %v317, %v316
      %v325 = vpack.c.b16 %v319, %v318
      %v326 = vpack.c.b16 %v321, %v320
      %v327 = vpack.c.b16 %v323, %v322
      %v333 = vsel %vm231, %v291, 0
      %v336 = vsel %vm231, %v292, 0
      %338 = vmatprep.subr.bf16.mxu0 0
      %339 = vmatpush1.bf16.msra.mxu0 0
      %340 = vmatprep.subr.bf16.mxu0 0
      %341 = vmatpush1.bf16.msra.mxu0 0
      %342 = vmatprep.subr.bf16.mxu0 0
      %343 = vmatpush1.bf16.msra.mxu0 0
      %344 = vmatprep.subr.bf16.mxu0 0
      %345 = vmatpush1.bf16.msra.mxu0 0
      %346 = vmatprep.subr.bf16.mxu0 0
      %347 = vmatpush1.bf16.msra.mxu0 %v327
      %348 = vmatprep.subr.bf16.mxu0 0
      %349 = vmatpush1.bf16.msra.mxu0 %v326
      %350 = vmatprep.subr.bf16.mxu0 0
      %351 = vmatpush1.bf16.msra.mxu0 %v325
      %352 = vmatprep.subr.bf16.mxu0 0
      %353 = vmatpush1.bf16.msra.mxu0 %v324
      %354 = vmatprep.subr.bf16.mxu0 0
      %355 = vmatpush2.bf16.msra.mxu0 0
      %356 = vmatprep.subr.bf16.mxu0 0
      %357 = vmatpush2.bf16.msra.mxu0 0
      %358 = vmatprep.subr.bf16.mxu0 0
      %359 = vmatpush2.bf16.msra.mxu0 0
      %360 = vmatprep.subr.bf16.mxu0 0
      %361 = vmatpush2.bf16.msra.mxu0 0
      %362 = vmatprep.subr.bf16.mxu0 0
      %363 = vmatpush2.bf16.msra.mxu0 0
      %364 = vmatprep.subr.bf16.mxu0 0
      %365 = vmatpush2.bf16.msra.mxu0 0
      %366 = vmatprep.subr.bf16.mxu0 0
      %367 = vmatpush2.bf16.msra.mxu0 0
      %368 = vmatprep.subr.bf16.mxu0 0
      %369 = vmatpush2.bf16.msra.mxu0 0
      %370 = vmatprep.mubr.bf16.mxu0 0
      %371 = vmatmul.mubr.bf16.gmra.mxu0 %v333
      %v372 = vpop.f32.mrf.mxu0
      %v373 = vadd.f32 %v306, %v372
      %v374 = vpop.f32.mrf.mxu0
      %v375 = vpop.f32.mrf.mxu0
      %v376 = vadd.f32 %v306, %v375
      %v377 = vpop.f32.mrf.mxu0
      %378 = vmatprep.mubr.bf16.mxu0 0
      %379 = vmatmul.mubr.bf16.gmra.mxu0 %v336
      %v380 = vpop.f32.mrf.mxu0
      %v381 = vadd.f32 %v306, %v380
      %v382 = vpop.f32.mrf.mxu0
      %v383 = vpop.f32.mrf.mxu0
      %v384 = vpop.f32.mrf.mxu0
      %385 = vdwg.mxu0
      %v386 = vmul.f32 %v373, 0.5
      %v387 = vmul.f32 %v376, 0.5
      %v388 = vmul.f32 %v381, 0.5
      %v389 = vmul.f32 %v373, 0.70710677
      %v390 = vmul.f32 %v376, 0.70710677
      %v391 = vmul.f32 %v381, 0.70710677
      %v392 = vand.u32 2147483647, %v389
      %v393 = vand.u32 2147483647, %v390
      %v394 = vand.u32 2147483647, %v391
      %v395 = vmul.f32 %v392, 0.3275911
      %v396 = vmul.f32 %v393, 0.3275911
      %v397 = vmul.f32 %v394, 0.3275911
      %v398 = vadd.f32 %v395, 1.0
      %v399 = vadd.f32 %v396, 1.0
      %v400 = vadd.f32 %v397, 1.0
      %v401 = vrcp.pop %v398
      %v402 = vmul.f32 1.0, %v401
      %v403 = vrcp.pop %v399
      %v404 = vmul.f32 1.0, %v403
      %v405 = vrcp.pop %v400
      %v406 = vmul.f32 1.0, %v405
      %v407 = vmul.f32 %v402, 1.0614054
      %v408 = vmul.f32 %v404, 1.0614054
      %v409 = vmul.f32 %v406, 1.0614054
      %v410 = vsub.f32 %v407, 1.4531521
      %v411 = vsub.f32 %v408, 1.4531521
      %v412 = vsub.f32 %v409, 1.4531521
      %v413 = vmul.f32 %v410, %v402
      %v414 = vmul.f32 %v411, %v404
      %v415 = vmul.f32 %v412, %v406
      %v416 = vadd.f32 %v413, 1.4214138
      %v417 = vadd.f32 %v414, 1.4214138
      %v418 = vadd.f32 %v415, 1.4214138
      %v419 = vmul.f32 %v416, %v402
      %v420 = vmul.f32 %v417, %v404
      %v421 = vmul.f32 %v418, %v406
      %v422 = vsub.f32 %v419, 0.28449672
      %v423 = vsub.f32 %v420, 0.28449672
      %v424 = vsub.f32 %v421, 0.28449672
      %v425 = vmul.f32 %v422, %v402
      %v426 = vmul.f32 %v423, %v404
      %v427 = vmul.f32 %v424, %v406
      %v428 = vadd.f32 %v425, 0.2548296
      %v429 = vadd.f32 %v426, 0.2548296
      %v430 = vadd.f32 %v427, 0.2548296
      %v431 = vmul.f32 %v428, %v402
      %v432 = vmul.f32 %v429, %v404
      %v433 = vmul.f32 %v430, %v406
      %v434 = vsub.f32 0.0, %v392
      %v435 = vsub.f32 0.0, %v393
      %v436 = vsub.f32 0.0, %v394
      %v437 = vmul.f32 %v434, %v392
      %v438 = vmul.f32 %v435, %v393
      %v439 = vmul.f32 %v436, %v394
      %v440 = vmul.f32 %v437, 1.442695
      %v441 = vpow.pop %v440
      %v442 = vmul.f32 %v438, 1.442695
      %v443 = vpow.pop %v442
      %v444 = vmul.f32 %v439, 1.442695
      %v445 = vpow.pop %v444
      %v446 = vmul.f32 %v431, %v441
      %v447 = vmul.f32 %v432, %v443
      %v448 = vmul.f32 %v433, %v445
      %v449 = vsub.f32 1.0, %v446
      %v450 = vsub.f32 1.0, %v447
      %v451 = vsub.f32 1.0, %v448
      %vm452 = vcmp.lt.f32.partialorder %v389, 0.0
      %vm453 = vcmp.lt.f32.partialorder %v390, 0.0
      %vm454 = vcmp.lt.f32.partialorder %v391, 0.0
      %v455 = vsub.f32 0.0, %v449
      %v456 = vsub.f32 0.0, %v450
      %v457 = vsub.f32 0.0, %v451
      %v458 = vsel %vm452, %v455, %v449
      %v459 = vsel %vm453, %v456, %v450
      %v460 = vsel %vm454, %v457, %v451
      %v461 = vadd.f32 %v458, 1.0
      %v462 = vadd.f32 %v459, 1.0
      %v463 = vadd.f32 %v460, 1.0
      %v464 = vmul.f32 %v386, %v461
      %v465 = vmul.f32 %v387, %v462
      %v466 = vmul.f32 %v388, %v463
      %v467 = vpack.c.bf16 %v465, %v464
      %v468 = vpack.c.bf16 %v466, %v466
      %v471 = vunpack.c.l.b16 %v467
      %v472 = vunpack.c.h.b16 %v467
      %v473 = vunpack.c.l.b16 %v468
      %v474 = vpack.c.b16 %v471, %v471
      %v475 = vpack.c.b16 %v472, %v472
      %v476 = vpack.c.b16 %v473, %v473
      %480 = vst [vmem:[%s224] sm:$0xf] %v474
      %481 = vst [vmem:[%s224 + $0x4] sm:$0xf] %v475
      %vm482 = vcmask 1040384
      %vm483 = vsmask.f32 256
      %vm484 = vmand %vm482, %vm483
      %v485 = vld [vmem:[%s224 + $0x8] sm:$0x1]
      %v486 = vsel %vm484, %v476, %v485
      %487 = vst [vmem:[%s224 + $0x8] sm:$0x1] %v486
      %p488 = scmp.lt.s32.totalorder %s16, 1
      %s489 = scalar_select %p488, %s16, 1
      %s490 = smul.addr %s489, 3
      %s491 = smul.addr %s490, 4
      %s492 = scalar_lea.vmem %s5, %s491
      // Predicated region
      $region41: #{vit_forward.16} parent=39 // pred_check
        %p493 = pneg %p144
      $region42: #{vit_forward.16} parent=39 // pred_check_branch
        %495 = sbr.rel (%p493) target = $region44
      $region43: #{vit_forward.16} parent=39 // pred_region
        _
      $region44: #{vit_forward.16} parent=39 // pred_fallthru
        _
    $region40: #{vit_forward.16} parent=5 // pred_fallthru
      _
    %p496 = scmp.le.s32.totalorder 2, %s11
    // Predicated region
    $region45: #{vit_forward.16} parent=5 // pred_check
      %p497 = pneg %p496
    $region46: #{vit_forward.16} parent=5 // pred_check_branch
      %499 = sbr.rel (%p497) target = $region48
    $region47: #{vit_forward.16} parent=5 // pred_region
      %s500 = ssub.s32 %s11, 2
      // Predicated region
      $region49: #{vit_forward.16} parent=47 // pred_check
        %p501 = pneg %p150
      $region50: #{vit_forward.16} parent=47 // pred_check_branch
        %503 = sbr.rel (%p501) target = $region52
      $region51: #{vit_forward.16} parent=47 // pred_region
        %p504 = scmp.lt.s32.totalorder %s17, 1
        %s505 = scalar_select %p504, %s17, 1
        %s506 = smul.addr %s505, 3
        %s507 = smul.addr %s506, 4
        %s508 = scalar_lea.vmem %s5, %s507
      $region52: #{vit_forward.16} parent=47 // pred_fallthru
        _
    $region48: #{vit_forward.16} parent=5 // pred_fallthru
      _
  $region6: #{vit_forward.16} parent=0 // loop_footer
    %s15 = sadd.s32 1, %s11
  $region7: #{vit_forward.16} parent=0 // loop_footer_branch
    %10 = sbr.rel target = $region3
  $region8: #{vit_forward.16} parent=0 // loop_exit
    _

// kernel: vit_forward.17
$region0: #{vit_forward.17}
  #allocation0 [shape = 'u32[]', space=smem, size = 0x4, offset = 0x4, fixed_abs, tag = 'smem constant byte address 0x4 - core index']
  #allocation1 [shape = 'u32[144,128]{1,0:T(1,128)}', space=vmem, size = 0x12000, scoped, tag = 'internal scratch']
  %s0 = inlined_call_operand.vmem [shape: bf16[2,17,128], index: 0, kind: input, shape index: {}]
  %s1 = inlined_call_operand.vmem [shape: bf16[128,64], index: 1, kind: input, shape index: {}]
  %s2 = inlined_call_operand.vmem [shape: f32[1,64], index: 2, kind: input, shape index: {}]
  %s3 = inlined_call_operand.vmem [shape: f32[2,17,64], index: 3, kind: input, shape index: {}]
  %s4 = inlined_call_operand.vmem [shape: f32[2,17,64], index: 4, kind: output, shape index: {}]
  %s5 = sld [smem:[#allocation0]]
  $region49: #{vit_forward.17} parent=0
    _
  %s7 = ssub.s32 1, %s5
  %s8 = scalar_select 0, %s7, %s5
  loop: start=0, step=1, limit=4
  $region2: #{vit_forward.17} parent=0 // loop_pre_header
    _
  $region3: #{vit_forward.17} parent=0 // loop_header
    %s10 = sphi 0, %s14
    %p11 = scmp.ge.s32.totalorder %s10, 4
    %s20 = sphi 0, %s22
    %s23 = sphi 0, %s20
    %s24 = sphi 0, %s23
    %s40 = sphi 0, %s24
    %s44 = sphi 0, %s44
    %s46 = sphi 0, %s44
    %s47 = sphi 0, %s46
    %s61 = sphi 0, %s47
    %s65 = sphi 0, %s65
    %s67 = sphi 0, %s65
    %s68 = sphi 0, %s67
    %s82 = sphi 0, %s68
    %s88 = sphi 0, %s90
    %s91 = sphi 0, %s88
    %s92 = sphi 0, %s91
    %s108 = sphi 0, %s92
    %s114 = sphi 0, %s116
    %s117 = sphi 0, %s114
    %s118 = sphi 0, %s117
    %s134 = sphi 0, %s118
  $region4: #{vit_forward.17} parent=0 // loop_header_branch
    %13 = sbr.rel (%p11) target = $region8
  $region5: #{vit_forward.17} parent=0 // loop_body
    %s15 = ssub.s32 %s10, 1
    %s16 = ssub.s32 %s10, 2
    %s17 = sadd.s32 %s10, 1
    %s18 = ssub.s32 %s10, %s17
    %p19 = scmp.eq.s32.totalorder %s18, 0
    %s21 = sadd.s32 %s20, 1
    %s22 = scalar_select %p19, %s20, %s21
    %p25 = pneg %p19
    %p26 = scmp.eq.s32.totalorder %s10, 1
    %p27 = por %p25, %p26
    %p28 = scmp.ne.s32.totalorder %s20, %s23
    %p29 = scmp.eq.s32.totalorder %s10, 0
    %p30 = por %p28, %p29
    %p31 = scmp.ne.s32.totalorder %s20, %s23
    %p32 = scmp.eq.s32.totalorder %s15, 1
    %p33 = por %p31, %p32
    %p34 = scmp.ne.s32.totalorder %s23, %s24
    %p35 = scmp.eq.s32.totalorder %s15, 0
    %p36 = por %p34, %p35
    %p37 = scmp.ne.s32.totalorder %s23, %s24
    %p38 = scmp.eq.s32.totalorder %s16, 1
    %p39 = por %p37, %p38
    %p41 = scmp.ne.s32.totalorder %s24, %s40
    %p42 = scmp.eq.s32.totalorder %s16, 0
    %p43 = por %p41, %p42
    %s45 = sadd.s32 %s44, 1
    %p48 = scmp.eq.s32.totalorder %s10, 1
    %p49 = scmp.ne.s32.totalorder %s44, %s46
    %p50 = scmp.eq.s32.totalorder %s10, 0
    %p51 = por %p49, %p50
    %p52 = scmp.ne.s32.totalorder %s44, %s46
    %p53 = scmp.eq.s32.totalorder %s15, 1
    %p54 = por %p52, %p53
    %p55 = scmp.ne.s32.totalorder %s46, %s47
    %p56 = scmp.eq.s32.totalorder %s15, 0
    %p57 = por %p55, %p56
    %p58 = scmp.ne.s32.totalorder %s46, %s47
    %p59 = scmp.eq.s32.totalorder %s16, 1
    %p60 = por %p58, %p59
    %p62 = scmp.ne.s32.totalorder %s47, %s61
    %p63 = scmp.eq.s32.totalorder %s16, 0
    %p64 = por %p62, %p63
    %s66 = sadd.s32 %s65, 1
    %p69 = scmp.eq.s32.totalorder %s10, 1
    %p70 = scmp.ne.s32.totalorder %s65, %s67
    %p71 = scmp.eq.s32.totalorder %s10, 0
    %p72 = por %p70, %p71
    %p73 = scmp.ne.s32.totalorder %s65, %s67
    %p74 = scmp.eq.s32.totalorder %s15, 1
    %p75 = por %p73, %p74
    %p76 = scmp.ne.s32.totalorder %s67, %s68
    %p77 = scmp.eq.s32.totalorder %s15, 0
    %p78 = por %p76, %p77
    %p79 = scmp.ne.s32.totalorder %s67, %s68
    %p80 = scmp.eq.s32.totalorder %s16, 1
    %p81 = por %p79, %p80
    %p83 = scmp.ne.s32.totalorder %s68, %s82
    %p84 = scmp.eq.s32.totalorder %s16, 0
    %p85 = por %p83, %p84
    %s86 = ssub.s32 %s10, %s17
    %p87 = scmp.eq.s32.totalorder %s86, 0
    %s89 = sadd.s32 %s88, 1
    %s90 = scalar_select %p87, %s88, %s89
    %p93 = pneg %p87
    %p94 = scmp.eq.s32.totalorder %s10, 1
    %p95 = por %p93, %p94
    %p96 = scmp.ne.s32.totalorder %s88, %s91
    %p97 = scmp.eq.s32.totalorder %s10, 0
    %p98 = por %p96, %p97
    %p99 = scmp.ne.s32.totalorder %s88, %s91
    %p100 = scmp.eq.s32.totalorder %s15, 1
    %p101 = por %p99, %p100
    %p102 = scmp.ne.s32.totalorder %s91, %s92
    %p103 = scmp.eq.s32.totalorder %s15, 0
    %p104 = por %p102, %p103
    %p105 = scmp.ne.s32.totalorder %s91, %s92
    %p106 = scmp.eq.s32.totalorder %s16, 1
    %p107 = por %p105, %p106
    %p109 = scmp.ne.s32.totalorder %s92, %s108
    %p110 = scmp.eq.s32.totalorder %s16, 0
    %p111 = por %p109, %p110
    %s112 = ssub.s32 %s10, %s17
    %p113 = scmp.eq.s32.totalorder %s112, 0
    %s115 = sadd.s32 %s114, 1
    %s116 = scalar_select %p113, %s114, %s115
    %p119 = pneg %p113
    %p120 = scmp.eq.s32.totalorder %s10, 1
    %p121 = por %p119, %p120
    %p122 = scmp.ne.s32.totalorder %s114, %s117
    %p123 = scmp.eq.s32.totalorder %s10, 0
    %p124 = por %p122, %p123
    %p125 = scmp.ne.s32.totalorder %s114, %s117
    %p126 = scmp.eq.s32.totalorder %s15, 1
    %p127 = por %p125, %p126
    %p128 = scmp.ne.s32.totalorder %s117, %s118
    %p129 = scmp.eq.s32.totalorder %s15, 0
    %p130 = por %p128, %p129
    %p131 = scmp.ne.s32.totalorder %s117, %s118
    %p132 = scmp.eq.s32.totalorder %s16, 1
    %p133 = por %p131, %p132
    %p135 = scmp.ne.s32.totalorder %s118, %s134
    %p136 = scmp.eq.s32.totalorder %s16, 0
    %p137 = por %p135, %p136
    %p138 = scmp.le.s32.totalorder 1, %s10
    %p139 = scmp.lt.s32.totalorder %s10, 3
    %p140 = pnand %p138, %p139
    %p141 = pneg %p140
    // Predicated region
    $region9: #{vit_forward.17} parent=5 // pred_check
      _
    $region10: #{vit_forward.17} parent=5 // pred_check_branch
      %143 = sbr.rel (%p140) target = $region12
    $region11: #{vit_forward.17} parent=5 // pred_region
      %s144 = ssub.s32 %s10, 1
      // Predicated region
      $region13: #{vit_forward.17} parent=11 // pred_check
        %p145 = pneg %p57
      $region14: #{vit_forward.17} parent=11 // pred_check_branch
        %147 = sbr.rel (%p145) target = $region16
      $region15: #{vit_forward.17} parent=11 // pred_region
        _
      $region16: #{vit_forward.17} parent=11 // pred_fallthru
        _
      // Predicated region
      $region17: #{vit_forward.17} parent=11 // pred_check
        %p148 = pneg %p78
      $region18: #{vit_forward.17} parent=11 // pred_check_branch
        %150 = sbr.rel (%p148) target = $region20
      $region19: #{vit_forward.17} parent=11 // pred_region
        _
      $region20: #{vit_forward.17} parent=11 // pred_fallthru
        _
    $region12: #{vit_forward.17} parent=5 // pred_fallthru
      _
    %p151 = scmp.lt.s32.totalorder %s10, 2
    // Predicated region
    $region21: #{vit_forward.17} parent=5 // pred_check
      %p152 = pneg %p151
    $region22: #{vit_forward.17} parent=5 // pred_check_branch
      %154 = sbr.rel (%p152) target = $region24
    $region23: #{vit_forward.17} parent=5 // pred_region
      // Predicated region
      $region25: #{vit_forward.17} parent=23 // pred_check
        %p155 = pneg %p30
      $region26: #{vit_forward.17} parent=23 // pred_check_branch
        %157 = sbr.rel (%p155) target = $region28
      $region27: #{vit_forward.17} parent=23 // pred_region
        %p158 = scmp.lt.s32.totalorder %s10, 1
        %s159 = scalar_select %p158, %s10, 1
        %s160 = smul.addr %s159, 3
        %s161 = smul.addr %s160, 4
        %s162 = scalar_lea.vmem %s0, %s161
      $region28: #{vit_forward.17} parent=23 // pred_fallthru
        _
      // Predicated region
      $region29: #{vit_forward.17} parent=23 // pred_check
        %p163 = pneg %p98
      $region30: #{vit_forward.17} parent=23 // pred_check_branch
        %165 = sbr.rel (%p163) target = $region32
      $region31: #{vit_forward.17} parent=23 // pred_region
        %p166 = scmp.lt.s32.totalorder %s10, 1
        %s167 = scalar_select %p166, %s10, 1
        %s168 = smul.addr %s167, 3
        %s169 = smul.addr %s168, 8
        %s170 = scalar_lea.vmem %s3, %s169
      $region32: #{vit_forward.17} parent=23 // pred_fallthru
        _
    $region24: #{vit_forward.17} parent=5 // pred_fallthru
      _
    %p171 = scmp.le.s32.totalorder 1, %s10
    %p172 = scmp.lt.s32.totalorder %s10, 3
    %p173 = pnand %p171, %p172
    %p174 = pneg %p173
    // Predicated region
    $region33: #{vit_forward.17} parent=5 // pred_check
      _
    $region34: #{vit_forward.17} parent=5 // pred_check_branch
      %176 = sbr.rel (%p173) target = $region36
    $region35: #{vit_forward.17} parent=5 // pred_region
      %s177 = ssub.s32 %s10, 1
      %p178 = scmp.lt.s32.totalorder %s15, 1
      %s179 = scalar_select %p178, %s15, 1
      %s180 = smul.addr %s179, 3
      %s181 = smul.addr %s180, 4
      %s182 = scalar_lea.vmem %s0, %s181
      %p183 = pneg %p36
      %p184 = pneg %p33
      %p185 = pneg %p57
      %p186 = pneg %p54
      %p187 = pneg %p78
      %p188 = pneg %p75
      %p189 = scmp.lt.s32.totalorder %s15, 1
      %s190 = scalar_select %p189, %s15, 1
      %s191 = smul.addr %s190, 3
      %s192 = smul.addr %s191, 8
      %s193 = scalar_lea.vmem %s3, %s192
      %p194 = pneg %p104
      %p195 = pneg %p101
      %p196 = pneg %p130
      %p197 = pneg %p127
      %p198 = scmp.lt.s32.totalorder %s15, 1
      %s199 = scalar_select %p198, %s15, 1
      %s200 = smul.addr %s199, 3
      %s201 = smul.addr %s200, 8
      %s202 = scalar_lea.vmem %s4, %s201
      %p203 = scmp.lt.s32.totalorder %s15, 1
      %s204 = scalar_select %p203, %s15, 1
      %s205 = smul.addr %s204, 3
      %s206 = smul.addr %s205, 4
      %s207 = scalar_lea.vmem %s0, %s206
      %p208 = scmp.lt.s32.totalorder %s15, 1
      %s209 = scalar_select %p208, %s15, 1
      %s210 = smul.addr %s209, 3
      %s211 = smul.addr %s210, 8
      %s212 = scalar_lea.vmem %s3, %s211
      %p213 = scmp.lt.s32.totalorder %s15, 1
      %s214 = scalar_select %p213, %s15, 1
      %s215 = smul.addr %s214, 3
      %s216 = smul.addr %s215, 8
      %s217 = scalar_lea.vmem %s4, %s216
      %v219 = vld [vmem:[%s207] sm:$0xf]
      %v220 = vld [vmem:[%s207 + $0x4] sm:$0xf]
      %v221 = vld [vmem:[%s207 + $0x8] sm:$0x1]
      %v222 = vld [vmem:[%s1] sm:$0xf]
      %v223 = vld [vmem:[%s1 + $0x4] sm:$0xf]
      %v224 = vld [vmem:[%s1 + $0x8] sm:$0xf]
      %v225 = vld [vmem:[%s1 + $0xc] sm:$0xf]
      %v226 = vld [vmem:[%s1 + $0x10] sm:$0xf]
      %v227 = vld [vmem:[%s1 + $0x14] sm:$0xf]
      %v228 = vld [vmem:[%s1 + $0x18] sm:$0xf]
      %v229 = vld [vmem:[%s1 + $0x1c] sm:$0xf]
      %v230 = vld [vmem:[%s1 + $0x20] sm:$0xf]
      %v231 = vld [vmem:[%s1 + $0x24] sm:$0xf]
      %v232 = vld [vmem:[%s1 + $0x28] sm:$0xf]
      %v233 = vld [vmem:[%s1 + $0x2c] sm:$0xf]
      %v234 = vld [vmem:[%s1 + $0x30] sm:$0xf]
      %v235 = vld [vmem:[%s1 + $0x34] sm:$0xf]
      %v236 = vld [vmem:[%s1 + $0x38] sm:$0xf]
      %v237 = vld [vmem:[%s1 + $0x3c] sm:$0xf]
      %v238 = vld [vmem:[%s2] sm:$0x1]
      %v240 = vlaneseq
      %v241 = vshrl.u32 %v240, 7
      %v242 = vsub.s32 0, %v241
      %v243 = vrot.slane %v238, %v242
      %v248 = vunpack.c.l.b16 %v219
      %v249 = vunpack.c.l.b16 %v220
      %v250 = vunpack.c.l.b16 %v221
      %v251 = vpack.c.b16 %v249, %v248
      %v252 = vpack.c.b16 %v250, %v250
      %v271 = vunpack.c.l.b16 %v222
      %v272 = vunpack.c.l.b16 %v223
      %v273 = vunpack.c.l.b16 %v224
      %v274 = vunpack.c.l.b16 %v225
      %v275 = vunpack.c.l.b16 %v226
      %v276 = vunpack.c.l.b16 %v227
      %v277 = vunpack.c.l.b16 %v228
      %v278 = vunpack.c.l.b16 %v229
      %v279 = vunpack.c.l.b16 %v230
      %v280 = vunpack.c.l.b16 %v231
      %v281 = vunpack.c.l.b16 %v232
      %v282 = vunpack.c.l.b16 %v233
      %v283 = vunpack.c.l.b16 %v234
      %v284 = vunpack.c.l.b16 %v235
      %v285 = vunpack.c.l.b16 %v236
      %v286 = vunpack.c.l.b16 %v237
      %v287 = vpack.c.b16 %v272, %v271
      %v288 = vpack.c.b16 %v274, %v273
      %v289 = vpack.c.b16 %v276, %v275
      %v290 = vpack.c.b16 %v278, %v277
      %v291 = vpack.c.b16 %v280, %v279
      %v292 = vpack.c.b16 %v282, %v281
      %v293 = vpack.c.b16 %v284, %v283
      %v294 = vpack.c.b16 %v286, %v285
      %303 = vmatprep.subr.bf16.mxu0 0
      %304 = vmatpush1.bf16.msra.mxu0 %v294
      %305 = vmatprep.subr.bf16.mxu0 0
      %306 = vmatpush1.bf16.msra.mxu0 %v293
      %307 = vmatprep.subr.bf16.mxu0 0
      %308 = vmatpush1.bf16.msra.mxu0 %v292
      %309 = vmatprep.subr.bf16.mxu0 0
      %310 = vmatpush1.bf16.msra.mxu0 %v291
      %311 = vmatprep.subr.bf16.mxu0 0
      %312 = vmatpush1.bf16.msra.mxu0 %v290
      %313 = vmatprep.subr.bf16.mxu0 0
      %314 = vmatpush1.bf16.msra.mxu0 %v289
      %315 = vmatprep.subr.bf16.mxu0 0
      %316 = vmatpush1.bf16.msra.mxu0 %v288
      %317 = vmatprep.subr.bf16.mxu0 0
      %318 = vmatpush1.bf16.msra.mxu0 %v287
      %319 = vmatprep.subr.bf16.mxu0 0
      %320 = vmatpush2.bf16.msra.mxu0 0
      %321 = vmatprep.subr.bf16.mxu0 0
      %322 = vmatpush2.bf16.msra.mxu0 0
      %323 = vmatprep.subr.bf16.mxu0 0
      %324 = vmatpush2.bf16.msra.mxu0 0
      %325 = vmatprep.subr.bf16.mxu0 0
      %326 = vmatpush2.bf16.msra.mxu0 0
      %327 = vmatprep.subr.bf16.mxu0 0
      %328 = vmatpush2.bf16.msra.mxu0 0
      %329 = vmatprep.subr.bf16.mxu0 0
      %330 = vmatpush2.bf16.msra.mxu0 0
      %331 = vmatprep.subr.bf16.mxu0 0
      %332 = vmatpush2.bf16.msra.mxu0 0
      %333 = vmatprep.subr.bf16.mxu0 0
      %334 = vmatpush2.bf16.msra.mxu0 0
      %335 = vmatprep.mubr.bf16.mxu0 0
      %336 = vmatmul.mubr.bf16.gmra.mxu0 %v251
      %v337 = vpop.f32.mrf.mxu0
      %v338 = vadd.f32 %v243, %v337
      %v339 = vpop.f32.mrf.mxu0
      %v340 = vpop.f32.mrf.mxu0
      %v341 = vadd.f32 %v243, %v340
      %v342 = vpop.f32.mrf.mxu0
      %343 = vmatprep.mubr.bf16.mxu0 0
      %344 = vmatmul.mubr.bf16.gmra.mxu0 %v252
      %v345 = vpop.f32.mrf.mxu0
      %v346 = vadd.f32 %v243, %v345
      %v347 = vpop.f32.mrf.mxu0
      %v348 = vpop.f32.mrf.mxu0
      %v349 = vpop.f32.mrf.mxu0
      %350 = vdwg.mxu0
      %v351 = vld [vmem:[%s212] sm:$0xff]
      %v352 = vld [vmem:[%s212 + $0x8] sm:$0xff]
      %v353 = vld [vmem:[%s212 + $0x10] sm:$0x1]
      %v354 = vadd.f32 %v338, %v351
      %v355 = vadd.f32 %v341, %v352
      %v356 = vadd.f32 %v346, %v353
      %vm357 = vcmask 523264
      %358 = vst.msk [vmem:[%s217] sm:$0xff] %vm357, %v354
      %359 = vst.msk [vmem:[%s217 + $0x8] sm:$0xff] %vm357, %v355
      %vm360 = vcmask 516096
      %361 = vst.msk [vmem:[%s217 + $0x10] sm:$0x1] %vm360, %v356
      %p362 = scmp.lt.s32.totalorder %s15, 1
      %s363 = scalar_select %p362, %s15, 1
      %s364 = smul.addr %s363, 3
      %s365 = smul.addr %s364, 8
      %s366 = scalar_lea.vmem %s4, %s365
      // Predicated region
      $region37: #{vit_forward.17} parent=35 // pred_check
        %p367 = pneg %p127
      $region38: #{vit_forward.17} parent=35 // pred_check_branch
        %369 = sbr.rel (%p367) target = $region40
      $region39: #{vit_forward.17} parent=35 // pred_region
        _
      $region40: #{vit_forward.17} parent=35 // pred_fallthru
        _
    $region36: #{vit_forward.17} parent=5 // pred_fallthru
      _
    %p370 = scmp.le.s32.totalorder 2, %s10
    // Predicated region
    $region41: #{vit_forward.17} parent=5 // pred_check
      %p371 = pneg %p370
    $region42: #{vit_forward.17} parent=5 // pred_check_branch
      %373 = sbr.rel (%p371) target = $region44
    $region43: #{vit_forward.17} parent=5 // pred_region
      %s374 = ssub.s32 %s10, 2
      // Predicated region
      $region45: #{vit_forward.17} parent=43 // pred_check
        %p375 = pneg %p133
      $region46: #{vit_forward.17} parent=43 // pred_check_branch
        %377 = sbr.rel (%p375) target = $region48
      $region47: #{vit_forward.17} parent=43 // pred_region
        %p378 = scmp.lt.s32.totalorder %s16, 1
        %s379 = scalar_select %p378, %s16, 1
        %s380 = smul.addr %s379, 3
        %s381 = smul.addr %s380, 8
        %s382 = scalar_lea.vmem %s4, %s381
      $region48: #{vit_forward.17} parent=43 // pred_fallthru
        _
    $region44: #{vit_forward.17} parent=5 // pred_fallthru
      _
  $region6: #{vit_forward.17} parent=0 // loop_footer
    %s14 = sadd.s32 1, %s10
  $region7: #{vit_forward.17} parent=0 // loop_footer_branch
    %9 = sbr.rel target = $region3
  $region8: #{vit_forward.17} parent=0 // loop_exit
    _

// kernel: vit_forward.23
$region0: #{vit_forward.23}
  #allocation0 [shape = 'u32[]', space=smem, size = 0x4, offset = 0x4, fixed_abs, tag = 'smem constant byte address 0x4 - core index']
  #allocation1 [shape = 'u32[144,128]{1,0:T(1,128)}', space=vmem, size = 0x12000, scoped, tag = 'internal scratch']
  %s0 = inlined_call_operand.vmem [shape: f32[2,1,64], index: 0, kind: input, shape index: {}]
  %s1 = inlined_call_operand.vmem [shape: f32[1,64], index: 1, kind: input, shape index: {}]
  %s2 = inlined_call_operand.vmem [shape: f32[1,64], index: 2, kind: input, shape index: {}]
  %s3 = inlined_call_operand.vmem [shape: bf16[64,128], index: 3, kind: input, shape index: {}]
  %s4 = inlined_call_operand.vmem [shape: f32[1,128], index: 4, kind: input, shape index: {}]
  %s5 = inlined_call_operand.hbm [shape: f32[2,1,128], index: 5, kind: output, shape index: {}]
  %s6 = sld [smem:[#allocation0]]
  $region53: #{vit_forward.23} parent=0
    _
  %s8 = ssub.s32 1, %s6
  %s9 = scalar_select 0, %s8, %s6
  $region1: #{vit_forward.23} parent=0
    #allocation2 [shape = 'u8[1024]{0}', space=vmem, size = 0x400, scoped, tag = 'output window, operand 0']
    #allocation3 [shape = 's32[2]{0}', space=sflag, size = 0x8, scoped, tag = 'scoped memory for vit_forward.23']
    %10 = vsyncpa [#allocation3], 0
    %s11 = scalar_lea.sflag [#allocation3], 1
    %12 = vsyncpa %s11, 0
    loop: start=0, step=1, limit=4
    $region2: #{vit_forward.23} parent=1 // loop_pre_header
      _
    $region3: #{vit_forward.23} parent=1 // loop_header
      %s14 = sphi 0, %s18
      %p15 = scmp.ge.s32.totalorder %s14, 4
      %s24 = sphi 0, %s26
      %s27 = sphi 0, %s24
      %s28 = sphi 0, %s27
      %s44 = sphi 0, %s28
      %s48 = sphi 0, %s48
      %s50 = sphi 0, %s48
      %s51 = sphi 0, %s50
      %s65 = sphi 0, %s51
      %s69 = sphi 0, %s69
      %s71 = sphi 0, %s69
      %s72 = sphi 0, %s71
      %s86 = sphi 0, %s72
      %s90 = sphi 0, %s90
      %s92 = sphi 0, %s90
      %s93 = sphi 0, %s92
      %s107 = sphi 0, %s93
      %s111 = sphi 0, %s111
      %s113 = sphi 0, %s111
      %s114 = sphi 0, %s113
      %s128 = sphi 0, %s114
      %s134 = sphi 0, %s136
      %s137 = sphi 0, %s134
      %s138 = sphi 0, %s137
      %s154 = sphi 0, %s138
    $region4: #{vit_forward.23} parent=1 // loop_header_branch
      %17 = sbr.rel (%p15) target = $region8
    $region5: #{vit_forward.23} parent=1 // loop_body
      %s19 = ssub.s32 %s14, 1
      %s20 = ssub.s32 %s14, 2
      %s21 = sadd.s32 %s14, 1
      %s22 = ssub.s32 %s14, %s21
      %p23 = scmp.eq.s32.totalorder %s22, 0
      %s25 = sadd.s32 %s24, 1
      %s26 = scalar_select %p23, %s24, %s25
      %p29 = pneg %p23
      %p30 = scmp.eq.s32.totalorder %s14, 1
      %p31 = por %p29, %p30
      %p32 = scmp.ne.s32.totalorder %s24, %s27
      %p33 = scmp.eq.s32.totalorder %s14, 0
      %p34 = por %p32, %p33
      %p35 = scmp.ne.s32.totalorder %s24, %s27
      %p36 = scmp.eq.s32.totalorder %s19, 1
      %p37 = por %p35, %p36
      %p38 = scmp.ne.s32.totalorder %s27, %s28
      %p39 = scmp.eq.s32.totalorder %s19, 0
      %p40 = por %p38, %p39
      %p41 = scmp.ne.s32.totalorder %s27, %s28
      %p42 = scmp.eq.s32.totalorder %s20, 1
      %p43 = por %p41, %p42
      %p45 = scmp.ne.s32.totalorder %s28, %s44
      %p46 = scmp.eq.s32.totalorder %s20, 0
      %p47 = por %p45, %p46
      %s49 = sadd.s32 %s48, 1
      %p52 = scmp.eq.s32.totalorder %s14, 1
      %p53 = scmp.ne.s32.totalorder %s48, %s50
      %p54 = scmp.eq.s32.totalorder %s14, 0
      %p55 = por %p53, %p54
      %p56 = scmp.ne.s32.totalorder %s48, %s50
      %p57 = scmp.eq.s32.totalorder %s19, 1
      %p58 = por %p56, %p57
      %p59 = scmp.ne.s32.totalorder %s50, %s51
      %p60 = scmp.eq.s32.totalorder %s19, 0
      %p61 = por %p59, %p60
      %p62 = scmp.ne.s32.totalorder %s50, %s51
      %p63 = scmp.eq.s32.totalorder %s20, 1
      %p64 = por %p62, %p63
      %p66 = scmp.ne.s32.totalorder %s51, %s65
      %p67 = scmp.eq.s32.totalorder %s20, 0
      %p68 = por %p66, %p67
      %s70 = sadd.s32 %s69, 1
      %p73 = scmp.eq.s32.totalorder %s14, 1
      %p74 = scmp.ne.s32.totalorder %s69, %s71
      %p75 = scmp.eq.s32.totalorder %s14, 0
      %p76 = por %p74, %p75
      %p77 = scmp.ne.s32.totalorder %s69, %s71
      %p78 = scmp.eq.s32.totalorder %s19, 1
      %p79 = por %p77, %p78
      %p80 = scmp.ne.s32.totalorder %s71, %s72
      %p81 = scmp.eq.s32.totalorder %s19, 0
      %p82 = por %p80, %p81
      %p83 = scmp.ne.s32.totalorder %s71, %s72
      %p84 = scmp.eq.s32.totalorder %s20, 1
      %p85 = por %p83, %p84
      %p87 = scmp.ne.s32.totalorder %s72, %s86
      %p88 = scmp.eq.s32.totalorder %s20, 0
      %p89 = por %p87, %p88
      %s91 = sadd.s32 %s90, 1
      %p94 = scmp.eq.s32.totalorder %s14, 1
      %p95 = scmp.ne.s32.totalorder %s90, %s92
      %p96 = scmp.eq.s32.totalorder %s14, 0
      %p97 = por %p95, %p96
      %p98 = scmp.ne.s32.totalorder %s90, %s92
      %p99 = scmp.eq.s32.totalorder %s19, 1
      %p100 = por %p98, %p99
      %p101 = scmp.ne.s32.totalorder %s92, %s93
      %p102 = scmp.eq.s32.totalorder %s19, 0
      %p103 = por %p101, %p102
      %p104 = scmp.ne.s32.totalorder %s92, %s93
      %p105 = scmp.eq.s32.totalorder %s20, 1
      %p106 = por %p104, %p105
      %p108 = scmp.ne.s32.totalorder %s93, %s107
      %p109 = scmp.eq.s32.totalorder %s20, 0
      %p110 = por %p108, %p109
      %s112 = sadd.s32 %s111, 1
      %p115 = scmp.eq.s32.totalorder %s14, 1
      %p116 = scmp.ne.s32.totalorder %s111, %s113
      %p117 = scmp.eq.s32.totalorder %s14, 0
      %p118 = por %p116, %p117
      %p119 = scmp.ne.s32.totalorder %s111, %s113
      %p120 = scmp.eq.s32.totalorder %s19, 1
      %p121 = por %p119, %p120
      %p122 = scmp.ne.s32.totalorder %s113, %s114
      %p123 = scmp.eq.s32.totalorder %s19, 0
      %p124 = por %p122, %p123
      %p125 = scmp.ne.s32.totalorder %s113, %s114
      %p126 = scmp.eq.s32.totalorder %s20, 1
      %p127 = por %p125, %p126
      %p129 = scmp.ne.s32.totalorder %s114, %s128
      %p130 = scmp.eq.s32.totalorder %s20, 0
      %p131 = por %p129, %p130
      %s132 = ssub.s32 %s14, %s21
      %p133 = scmp.eq.s32.totalorder %s132, 0
      %s135 = sadd.s32 %s134, 1
      %s136 = scalar_select %p133, %s134, %s135
      %p139 = pneg %p133
      %p140 = scmp.eq.s32.totalorder %s14, 1
      %p141 = por %p139, %p140
      %p142 = scmp.ne.s32.totalorder %s134, %s137
      %p143 = scmp.eq.s32.totalorder %s14, 0
      %p144 = por %p142, %p143
      %p145 = scmp.ne.s32.totalorder %s134, %s137
      %p146 = scmp.eq.s32.totalorder %s19, 1
      %p147 = por %p145, %p146
      %p148 = scmp.ne.s32.totalorder %s137, %s138
      %p149 = scmp.eq.s32.totalorder %s19, 0
      %p150 = por %p148, %p149
      %p151 = scmp.ne.s32.totalorder %s137, %s138
      %p152 = scmp.eq.s32.totalorder %s20, 1
      %p153 = por %p151, %p152
      %p155 = scmp.ne.s32.totalorder %s138, %s154
      %p156 = scmp.eq.s32.totalorder %s20, 0
      %p157 = por %p155, %p156
      %p158 = scmp.le.s32.totalorder 1, %s14
      %p159 = scmp.lt.s32.totalorder %s14, 3
      %p160 = pnand %p158, %p159
      %p161 = pneg %p160
      // Predicated region
      $region9: #{vit_forward.23} parent=5 // pred_check
        _
      $region10: #{vit_forward.23} parent=5 // pred_check_branch
        %163 = sbr.rel (%p160) target = $region12
      $region11: #{vit_forward.23} parent=5 // pred_region
        %s164 = ssub.s32 %s14, 1
        // Predicated region
        $region13: #{vit_forward.23} parent=11 // pred_check
          %p165 = pneg %p61
        $region14: #{vit_forward.23} parent=11 // pred_check_branch
          %167 = sbr.rel (%p165) target = $region16
        $region15: #{vit_forward.23} parent=11 // pred_region
          _
        $region16: #{vit_forward.23} parent=11 // pred_fallthru
          _
        // Predicated region
        $region17: #{vit_forward.23} parent=11 // pred_check
          %p168 = pneg %p82
        $region18: #{vit_forward.23} parent=11 // pred_check_branch
          %170 = sbr.rel (%p168) target = $region20
        $region19: #{vit_forward.23} parent=11 // pred_region
          _
        $region20: #{vit_forward.23} parent=11 // pred_fallthru
          _
        // Predicated region
        $region21: #{vit_forward.23} parent=11 // pred_check
          %p171 = pneg %p103
        $region22: #{vit_forward.23} parent=11 // pred_check_branch
          %173 = sbr.rel (%p171) target = $region24
        $region23: #{vit_forward.23} parent=11 // pred_region
          _
        $region24: #{vit_forward.23} parent=11 // pred_fallthru
          _
        // Predicated region
        $region25: #{vit_forward.23} parent=11 // pred_check
          %p174 = pneg %p124
        $region26: #{vit_forward.23} parent=11 // pred_check_branch
          %176 = sbr.rel (%p174) target = $region28
        $region27: #{vit_forward.23} parent=11 // pred_region
          _
        $region28: #{vit_forward.23} parent=11 // pred_fallthru
          _
      $region12: #{vit_forward.23} parent=5 // pred_fallthru
        _
      %p177 = scmp.lt.s32.totalorder %s14, 2
      // Predicated region
      $region29: #{vit_forward.23} parent=5 // pred_check
        %p178 = pneg %p177
      $region30: #{vit_forward.23} parent=5 // pred_check_branch
        %180 = sbr.rel (%p178) target = $region32
      $region31: #{vit_forward.23} parent=5 // pred_region
        // Predicated region
        $region33: #{vit_forward.23} parent=31 // pred_check
          %p181 = pneg %p34
        $region34: #{vit_forward.23} parent=31 // pred_check_branch
          %183 = sbr.rel (%p181) target = $region36
        $region35: #{vit_forward.23} parent=31 // pred_region
          %p184 = scmp.lt.s32.totalorder %s14, 1
          %s185 = scalar_select %p184, %s14, 1
          %s186 = scalar_lea.vmem %s0, %s185
        $region36: #{vit_forward.23} parent=31 // pred_fallthru
          _
      $region32: #{vit_forward.23} parent=5 // pred_fallthru
        _
      %p187 = scmp.le.s32.totalorder 1, %s14
      %p188 = scmp.lt.s32.totalorder %s14, 3
      %p189 = pnand %p187, %p188
      %p190 = pneg %p189
      // Predicated region
      $region37: #{vit_forward.23} parent=5 // pred_check
        _
      $region38: #{vit_forward.23} parent=5 // pred_check_branch
        %192 = sbr.rel (%p189) target = $region40
      $region39: #{vit_forward.23} parent=5 // pred_region
        %s193 = ssub.s32 %s14, 1
        %p194 = scmp.lt.s32.totalorder %s19, 1
        %s195 = scalar_select %p194, %s19, 1
        %s196 = scalar_lea.vmem %s0, %s195
        %p197 = pneg %p40
        %p198 = pneg %p37
        %p199 = pneg %p61
        %p200 = pneg %p58
        %p201 = pneg %p82
        %p202 = pneg %p79
        %p203 = pneg %p103
        %p204 = pneg %p100
        %p205 = pneg %p124
        %p206 = pneg %p121
        %p207 = pneg %p150
        %p208 = pneg %p147
        %s209 = sand.u32 %s137, 1
        %s210 = scalar_lea.sflag [#allocation3], %s209
        %s211 = sand.u32 %s137, 1
        %s212 = scalar_lea.vmem [#allocation2], %s211
        %p213 = scmp.lt.s32.totalorder %s19, 1
        %s214 = scalar_select %p213, %s19, 1
        %s215 = scalar_lea.vmem %s0, %s214
        %v217 = vld [vmem:[%s215] sm:$0x1]
        %v218 = vld [vmem:[%s1] sm:$0x1]
        %v219 = vld [vmem:[%s2] sm:$0x1]
        %vm220 = vcmask 516096
        %v221 = vsel %vm220, %v217, 0.0
        %222 = vadd.xlane.f32.xlu0 %v221
        %v223 = vpop.xlane.xlu0 %222
        %v224 = vrcp.pop 64.0
        %v225 = vmul.f32 %v223, %v224
        %v226 = vsub.f32 %v217, %v225
        %v227 = vmul.f32 %v226, %v226
        %v228 = vsel %vm220, %v227, 0.0
        %229 = vadd.xlane.f32.xlu0 %v228
        %v230 = vpop.xlane.xlu0 %229
        %v231 = vmul.f32 %v230, %v224
        %v232 = vadd.f32 %v231, 1e-06
        %v233 = vrsqrt.pop %v232
        %v234 = vmul.f32 %v226, %v233
        %v235 = vmul.f32 %v234, %v218
        %v236 = vadd.f32 %v235, %v219
        %v237 = vpack.c.bf16 %v236, %v236
        %v238 = vld [vmem:[%s3] sm:$0xf]
        %v239 = vld [vmem:[%s3 + $0x4] sm:$0xf]
        %v240 = vld [vmem:[%s3 + $0x8] sm:$0xf]
        %v241 = vld [vmem:[%s3 + $0xc] sm:$0xf]
        %v242 = vld [vmem:[%s3 + $0x10] sm:$0xf]
        %v243 = vld [vmem:[%s3 + $0x14] sm:$0xf]
        %v244 = vld [vmem:[%s3 + $0x18] sm:$0xf]
        %v245 = vld [vmem:[%s3 + $0x1c] sm:$0xf]
        %v246 = vld [vmem:[%s4] sm:$0x1]
        %v255 = vunpack.c.l.b16 %v238
        %v256 = vunpack.c.l.b16 %v239
        %v257 = vunpack.c.l.b16 %v240
        %v258 = vunpack.c.l.b16 %v241
        %v259 = vunpack.c.l.b16 %v242
        %v260 = vunpack.c.l.b16 %v243
        %v261 = vunpack.c.l.b16 %v244
        %v262 = vunpack.c.l.b16 %v245
        %v263 = vpack.c.b16 %v256, %v255
        %v264 = vpack.c.b16 %v258, %v257
        %v265 = vpack.c.b16 %v260, %v259
        %v266 = vpack.c.b16 %v262, %v261
        %vm271 = vcmask 523264
        %v273 = vsel %vm271, %v237, 0
        %275 = vmatprep.subr.bf16.mxu0 0
        %276 = vmatpush1.bf16.msra.mxu0 0
        %277 = vmatprep.subr.bf16.mxu0 0
        %278 = vmatpush1.bf16.msra.mxu0 0
        %279 = vmatprep.subr.bf16.mxu0 0
        %280 = vmatpush1.bf16.msra.mxu0 0
        %281 = vmatprep.subr.bf16.mxu0 0
        %282 = vmatpush1.bf16.msra.mxu0 0
        %283 = vmatprep.subr.bf16.mxu0 0
        %284 = vmatpush1.bf16.msra.mxu0 %v266
        %285 = vmatprep.subr.bf16.mxu0 0
        %286 = vmatpush1.bf16.msra.mxu0 %v265
        %287 = vmatprep.subr.bf16.mxu0 0
        %288 = vmatpush1.bf16.msra.mxu0 %v264
        %289 = vmatprep.subr.bf16.mxu0 0
        %290 = vmatpush1.bf16.msra.mxu0 %v263
        %291 = vmatprep.subr.bf16.mxu0 0
        %292 = vmatpush2.bf16.msra.mxu0 0
        %293 = vmatprep.subr.bf16.mxu0 0
        %294 = vmatpush2.bf16.msra.mxu0 0
        %295 = vmatprep.subr.bf16.mxu0 0
        %296 = vmatpush2.bf16.msra.mxu0 0
        %297 = vmatprep.subr.bf16.mxu0 0
        %298 = vmatpush2.bf16.msra.mxu0 0
        %299 = vmatprep.subr.bf16.mxu0 0
        %300 = vmatpush2.bf16.msra.mxu0 0
        %301 = vmatprep.subr.bf16.mxu0 0
        %302 = vmatpush2.bf16.msra.mxu0 0
        %303 = vmatprep.subr.bf16.mxu0 0
        %304 = vmatpush2.bf16.msra.mxu0 0
        %305 = vmatprep.subr.bf16.mxu0 0
        %306 = vmatpush2.bf16.msra.mxu0 0
        %307 = vmatprep.mubr.bf16.mxu0 0
        %308 = vmatmul.mubr.bf16.gmra.mxu0 %v273
        %v309 = vpop.f32.mrf.mxu0
        %v310 = vadd.f32 %v246, %v309
        %v311 = vpop.f32.mrf.mxu0
        %v312 = vpop.f32.mrf.mxu0
        %v313 = vpop.f32.mrf.mxu0
        %314 = vdwg.mxu0
        %315 = vst [vmem:[%s212] sm:$0x1] %v310
        %s316 = sand.u32 %s137, 1
        %s317 = scalar_lea.sflag [#allocation3], %s316
        %s318 = sand.u32 %s137, 1
        %s319 = scalar_lea.vmem [#allocation2], %s318
        // Predicated region
        $region41: #{vit_forward.23} parent=39 // pred_check
          %p320 = pneg %p147
        $region42: #{vit_forward.23} parent=39 // pred_check_branch
          %322 = sbr.rel (%p320) target = $region44
        $region43: #{vit_forward.23} parent=39 // pred_region
          %s324 = ssub.s32 16, 16
          %325 = vsyncadd %s317, %s324
          %s326 = smul.addr %s19, 16
          %s327 = scalar_lea.hbm %s5, %s326
          %s329 = sshll.u32 %s319, 4
          %s330 = int_to_ptr.vmem [resolvable:$true] %s329
          %332 = dma.vmem_to_hbm [thread:$0]  %s330, 16, %s327, %s317
        $region44: #{vit_forward.23} parent=39 // pred_fallthru
          _
      $region40: #{vit_forward.23} parent=5 // pred_fallthru
        _
      %p333 = scmp.le.s32.totalorder 2, %s14
      // Predicated region
      $region45: #{vit_forward.23} parent=5 // pred_check
        %p334 = pneg %p333
      $region46: #{vit_forward.23} parent=5 // pred_check_branch
        %336 = sbr.rel (%p334) target = $region48
      $region47: #{vit_forward.23} parent=5 // pred_region
        %s337 = ssub.s32 %s14, 2
        // Predicated region
        $region49: #{vit_forward.23} parent=47 // pred_check
          %p338 = pneg %p153
        $region50: #{vit_forward.23} parent=47 // pred_check_branch
          %340 = sbr.rel (%p338) target = $region52
        $region51: #{vit_forward.23} parent=47 // pred_region
          %s341 = sand.u32 %s138, 1
          %s342 = scalar_lea.sflag [#allocation3], %s341
          %s343 = sand.u32 %s138, 1
          %s344 = scalar_lea.vmem [#allocation2], %s343
          %345 = dma.done %s342, 16
        $region52: #{vit_forward.23} parent=47 // pred_fallthru
          _
      $region48: #{vit_forward.23} parent=5 // pred_fallthru
        _
    $region6: #{vit_forward.23} parent=1 // loop_footer
      %s18 = sadd.s32 1, %s14
    $region7: #{vit_forward.23} parent=1 // loop_footer_branch
      %13 = sbr.rel target = $region3
    $region8: #{vit_forward.23} parent=1 // loop_exit
      _
    %346 = vsyncpa [#allocation3], 1
    %s347 = scalar_lea.sflag [#allocation3], 1
    %348 = vsyncpa %s347, 1

</llo_original>
